<compile_context>
chip_gen: v5e
topology: v5e:2x2
jax: 0.10.0
libtpu: 0.0.40
codegen_flags: <defaults>
</compile_context>

<pallas_src>
import functools

import numpy as np

import jax
import jax.numpy as jnp
from jax.experimental import pallas as pl
from jax.experimental.pallas import tpu as pltpu

BN_EPS = 1e-5

# Per-image row stride in the stacked layout (28 image rows + 4 zero rows so
# every batch block is a multiple of 8 sublanes); halves after the 2x2 pool.
_IMG_STRIDE = 32
_POOL_STRIDE = _IMG_STRIDE // 2


# ----------------------------------------------------------------------------
# Fused whole-network Pallas kernel.
# Activation layout: rows = stacked image rows, lanes = width * channels.
# ----------------------------------------------------------------------------
def _fused_net_kernel(x_ref,
                      band1_ref, b1_ref, band2_ref, b2_ref,
                      band3e_ref, band3o_ref, ep3_ref,
                      bandx_ref, bx_ref,
                      band4_ref, b4_ref, band5_ref, b5_ref,
                      band6_ref, b6_ref,
                      out_ref,
                      hp_ref, x5_ref):
    f32, bf16 = jnp.float32, jnp.bfloat16
    bt = x_ref.shape[0] // _IMG_STRIDE            # images in this grid block

    # Row counts of each layer's (stacked) output for this block.
    l1 = _IMG_STRIDE * bt - 6                     # conv1: 26 valid rows / image
    l2 = _IMG_STRIDE * bt - 8                     # conv2: 24
    l3 = _IMG_STRIDE * bt - 10                    # conv3: 22
    lp = _POOL_STRIDE * bt - 5                    # pool : 11
    l4 = _POOL_STRIDE * bt - 7                    # conv4: 9
    l5 = _POOL_STRIDE * bt - 9                    # conv5: 7

    def band_conv(xb, band_ref, lout):
        """VALID KHxKW conv as KH banded matmuls (bf16 in, f32 accumulate)."""
        kh = band_ref.shape[0]
        acc = jnp.dot(xb[0:lout, :], band_ref[0], preferred_element_type=f32)
        for i in range(1, kh):
            acc = acc + jnp.dot(xb[i:i + lout, :], band_ref[i],
                                preferred_element_type=f32)
        return acc

    # conv1 / conv2: bias + relu (bn1 / bn2 are folded into the next band).
    x0 = x_ref[...].astype(bf16)                                      # (32*bt, 28)
    x1 = jnp.maximum(band_conv(x0, band1_ref, l1) + b1_ref[...], 0.0).astype(bf16)
    x2 = jnp.maximum(band_conv(x1, band2_ref, l2) + b2_ref[...], 0.0).astype(bf16)

    # conv3 as even-/odd-output-column bands -> bias + relu + bn3; the
    # horizontal pair max of the 2x2 pool is then one VPU maximum.
    e3 = ep3_ref[...]                                                 # (3, 88)
    x3e = jnp.maximum(band_conv(x2, band3e_ref, l3) + e3[0:1], 0.0) * e3[1:2] + e3[2:3]
    x3o = jnp.maximum(band_conv(x2, band3o_ref, l3) + e3[0:1], 0.0) * e3[1:2] + e3[2:3]
    hp_ref[...] = jnp.maximum(x3e, x3o)                               # (l3, 88) f32

    # Vertical pair max of the pool: stride-2 sublane loads from the scratch.
    pooled = jnp.maximum(hp_ref[pl.ds(0, lp, stride=2), :],
                         hp_ref[pl.ds(1, lp, stride=2), :])           # (lp, 88)

    # onecross 1x1 conv (bias only, no relu / bn).
    q = (jnp.dot(pooled.astype(bf16), bandx_ref[...],
                 preferred_element_type=f32) + bx_ref[...]).astype(bf16)  # (lp, 176)

    # conv4 / conv5: bias + relu (bn4 / bn5 folded forward).
    x4 = jnp.maximum(band_conv(q, band4_ref, l4) + b4_ref[...], 0.0).astype(bf16)
    x5_ref[...] = jnp.maximum(band_conv(x4, band5_ref, l5) + b5_ref[...], 0.0)

    # conv6 (7x7 -> 1x1, 10 classes): 7 taps, each one (bt, 112)@(112, 10)
    # matmul; the per-image rows are gathered with a stride-16 sublane load.
    logits = jnp.zeros((bt, 10), f32)
    for i in range(band6_ref.shape[0]):
        xi = x5_ref[pl.ds(i, bt, stride=_POOL_STRIDE), :].astype(bf16)
        logits = logits + jnp.dot(xi, band6_ref[i], preferred_element_type=f32)
    logits = logits + b6_ref[...]

    # log_softmax.
    m = jnp.max(logits, axis=-1, keepdims=True)
    z = logits - m
    logp = z - jnp.log(jnp.sum(jnp.exp(z), axis=-1, keepdims=True))
    out_ref[0] = logp


# ----------------------------------------------------------------------------
# Host-side constant builders (conv weights -> block-Toeplitz "band" matrices).
# ----------------------------------------------------------------------------
def _band_from_conv(w_oihw, win, out_cols):
    """(Cout,Cin,KH,KW) weight -> band (KH, Win*Cin, len(out_cols)*Cout) so that
    out2d = sum_i x2d[i:i+Ho, :] @ band[i] is the VALID conv in (H, W*C) layout,
    producing only the listed output column positions (in input-width coords)."""
    w = np.asarray(w_oihw, np.float32)
    cout, cin, kh, kw = w.shape
    band = np.zeros((kh, win * cin, len(out_cols) * cout), np.float32)
    for i in range(kh):
        for j in range(kw):
            blk = w[:, :, i, j].T                                     # (Cin, Cout)
            for n, c in enumerate(out_cols):
                band[i, (c + j) * cin:(c + j + 1) * cin,
                     n * cout:(n + 1) * cout] = blk
    return band


def _scale_w(w_next, s_prev):
    """Fold a per-channel BN scale of the previous layer into the next weights."""
    return np.asarray(w_next, np.float32) * np.asarray(s_prev, np.float32)[None, :, None, None]


def _fold_bias(w_next, t_prev):
    """Bias increment from folding the previous layer's BN shift forward."""
    return np.einsum("oikl,i->o", np.asarray(w_next, np.float32),
                     np.asarray(t_prev, np.float32))


def build_kernel_inputs(raw):
    bf16, f32 = jnp.bfloat16, jnp.float32
    r = {k: np.asarray(v, np.float32) for k, v in raw.items()}

    # Layer 1: raw weights / bias; bn1 folded into band2.
    band1 = _band_from_conv(r["w1"], 28, range(26))                   # (3, 28, 208)
    bias1 = np.tile(r["b1"], 26)[None, :]

    # Layer 2: weights scaled by s1, bias += W2.t1; bn2 folded into band3.
    band2 = _band_from_conv(_scale_w(r["w2"], r["s1"]), 26, range(24))  # (3, 208, 192)
    bias2 = np.tile(r["b2"] + _fold_bias(r["w2"], r["t1"]), 24)[None, :]

    # Layer 3: weights scaled by s2, bias += W3.t2; bn3 kept explicit (pool
    # follows).  Split into even / odd output columns for the horizontal pool.
    w3f = _scale_w(r["w3"], r["s2"])
    band3e = _band_from_conv(w3f, 24, range(0, 22, 2))                # (3, 192, 88)
    band3o = _band_from_conv(w3f, 24, range(1, 22, 2))                # (3, 192, 88)
    b3 = r["b3"] + _fold_bias(r["w3"], r["t2"])
    ep3 = np.stack([np.tile(b3, 11), np.tile(r["s3"], 11), np.tile(r["t3"], 11)])

    # onecross 1x1 conv (input already has bn3 applied explicitly).
    bandx = _band_from_conv(r["wx"], 11, range(11))[0]                # (88, 176)
    biasx = np.tile(r["bx"], 11)[None, :]

    # Layer 4: raw weights / bias; bn4 folded into band5.
    band4 = _band_from_conv(r["w4"], 11, range(9))                    # (3, 176, 144)
    bias4 = np.tile(r["b4"], 9)[None, :]

    # Layer 5: weights scaled by s4, bias += W5.t4; bn5 folded into band6.
    band5 = _band_from_conv(_scale_w(r["w5"], r["s4"]), 9, range(7))  # (3, 144, 112)
    bias5 = np.tile(r["b5"] + _fold_bias(r["w5"], r["t4"]), 7)[None, :]

    # conv6: weights scaled by s5, bias += W6.t5.
    band6 = _band_from_conv(_scale_w(r["w6"], r["s5"]), 7, range(1))  # (7, 112, 10)
    bias6 = (r["b6"] + _fold_bias(r["w6"], r["t5"]))[None, :]

    return (
        jnp.asarray(band1, bf16), jnp.asarray(bias1, f32),
        jnp.asarray(band2, bf16), jnp.asarray(bias2, f32),
        jnp.asarray(band3e, bf16), jnp.asarray(band3o, bf16), jnp.asarray(ep3, f32),
        jnp.asarray(bandx, bf16), jnp.asarray(biasx, f32),
        jnp.asarray(band4, bf16), jnp.asarray(bias4, f32),
        jnp.asarray(band5, bf16), jnp.asarray(bias5, f32),
        jnp.asarray(band6, bf16), jnp.asarray(bias6, f32),
    )


# ----------------------------------------------------------------------------
# Deterministic parameter initialization (matches the nn.Module shapes).
# ----------------------------------------------------------------------------
def _init_conv(key, cout, cin, kh, kw):
    kw_, kb_ = jax.random.split(key)
    fan_in = cin * kh * kw
    w = jax.random.normal(kw_, (cout, cin, kh, kw), jnp.float32) / jnp.sqrt(fan_in)
    b = 0.01 * jax.random.normal(kb_, (cout,), jnp.float32)
    return w, b


def _init_bn(key, c):
    k1, k2, k3, k4 = jax.random.split(key, 4)
    gamma = 1.0 + 0.1 * jax.random.normal(k1, (c,), jnp.float32)
    beta = 0.1 * jax.random.normal(k2, (c,), jnp.float32)
    mean = 0.05 * jax.random.normal(k3, (c,), jnp.float32)
    var = 1.0 + 0.1 * jnp.abs(jax.random.normal(k4, (c,), jnp.float32))
    scale = gamma / jnp.sqrt(var + BN_EPS)              # inference-mode fold
    shift = beta - mean * scale
    return scale, shift


def init_raw_params(key):
    keys = jax.random.split(key, 12)
    p = {}
    p["w1"], p["b1"] = _init_conv(keys[0], 8, 1, 3, 3)
    p["s1"], p["t1"] = _init_bn(keys[1], 8)
    p["w2"], p["b2"] = _init_conv(keys[2], 8, 8, 3, 3)
    p["s2"], p["t2"] = _init_bn(keys[3], 8)
    p["w3"], p["b3"] = _init_conv(keys[4], 8, 8, 3, 3)
    p["s3"], p["t3"] = _init_bn(keys[5], 8)
    p["wx"], p["bx"] = _init_conv(keys[6], 16, 8, 1, 1)           # onecross
    p["w4"], p["b4"] = _init_conv(keys[7], 16, 16, 3, 3)
    p["s4"], p["t4"] = _init_bn(keys[8], 16)
    p["w5"], p["b5"] = _init_conv(keys[9], 16, 16, 3, 3)
    p["s5"], p["t5"] = _init_bn(keys[10], 16)
    p["w6"], p["b6"] = _init_conv(keys[11], 10, 16, 7, 7)
    return p


# ----------------------------------------------------------------------------
# Forward pass: one pallas_call for the whole network.
# ----------------------------------------------------------------------------
def _pick_num_blocks(batch):
    kind = ""
    try:
        kind = jax.devices()[0].device_kind.lower()
    except Exception:
        pass
    # v7x has 2 TensorCores per chip: split the batch across them.
    if batch >= 2 and batch % 2 == 0 and "v7" in kind:
        return 2
    return 1


@functools.partial(jax.jit, static_argnums=(2,))
def _forward_jit(x_nchw, kin, num_blocks):
    batch = x_nchw.shape[0]
    bt = batch // num_blocks
    rows = _IMG_STRIDE * bt

    # Stack images along the row axis at a stride of 32 rows (4 zero pad rows).
    x2d = x_nchw[:, 0, :, :].astype(jnp.float32)                  # Cin == 1
    xs = jnp.pad(x2d, ((0, 0), (0, _IMG_STRIDE - 28), (0, 0)))
    xs = xs.reshape(batch * _IMG_STRIDE, 28)

    def const_spec(a):
        nd = a.ndim
        return pl.BlockSpec(a.shape, lambda g: (0,) * nd)

    in_specs = [pl.BlockSpec((rows, 28), lambda g: (g, 0))]
    in_specs += [const_spec(a) for a in kin]

    out = pl.pallas_call(
        _fused_net_kernel,
        out_shape=jax.ShapeDtypeStruct((num_blocks, bt, 10), jnp.float32),
        grid=(num_blocks,),
        in_specs=in_specs,
        out_specs=pl.BlockSpec((1, bt, 10), lambda g: (g, 0, 0)),
        scratch_shapes=[
            pltpu.VMEM((_IMG_STRIDE * bt - 10, 88), jnp.float32),   # h-pooled conv3
            pltpu.VMEM((_POOL_STRIDE * bt - 9, 112), jnp.float32),  # conv5 output
        ],
        compiler_params=pltpu.CompilerParams(
            dimension_semantics=("parallel",),
            vmem_limit_bytes=32 * 1024 * 1024),
    )(xs, *kin)
    return out.reshape(batch, 10)


def mnist_resnet_forward(x_nchw, kernel_inputs, num_blocks=None):
    batch = x_nchw.shape[0]
    if num_blocks is None:
        num_blocks = _pick_num_blocks(batch)
    if batch % num_blocks != 0:
        num_blocks = 1
    return _forward_jit(x_nchw, kernel_inputs, num_blocks)


# ----------------------------------------------------------------------------
# Pure-JAX float32 reference, faithful to the module's forward (eval mode).
# ----------------------------------------------------------------------------
def reference_forward(x_nchw, raw):
    def conv(x, w_oihw, b):
        w = jnp.transpose(w_oihw, (2, 3, 1, 0))                   # OIHW -> HWIO
        y = jax.lax.conv_general_dilated(
            x, w, window_strides=(1, 1), padding="VALID",
            dimension_numbers=("NHWC", "HWIO", "NHWC"))
        return y + b[None, None, None, :]

    def block(x, w, b, s, t):
        # Module order: conv -> relu -> batchnorm (-> dropout, identity in eval).
        return jnp.maximum(conv(x, w, b), 0.0) * s + t

    x = jnp.transpose(x_nchw, (0, 2, 3, 1)).astype(jnp.float32)
    x = block(x, raw["w1"], raw["b1"], raw["s1"], raw["t1"])
    x = block(x, raw["w2"], raw["b2"], raw["s2"], raw["t2"])
    x = block(x, raw["w3"], raw["b3"], raw["s3"], raw["t3"])
    x = jnp.maximum(jnp.maximum(x[:, 0::2, 0::2], x[:, 0::2, 1::2]),
                    jnp.maximum(x[:, 1::2, 0::2], x[:, 1::2, 1::2]))  # 2x2 maxpool
    x = conv(x, raw["wx"], raw["bx"])
    x = block(x, raw["w4"], raw["b4"], raw["s4"], raw["t4"])
    x = block(x, raw["w5"], raw["b5"], raw["s5"], raw["t5"])
    x = conv(x, raw["w6"], raw["b6"])                              # (B, 1, 1, 10)
    return jax.nn.log_softmax(x.reshape(-1, 10), axis=-1)


if __name__ == "__main__":
    key = jax.random.PRNGKey(0)
    k_x, k_p = jax.random.split(key)
    # MNIST-shaped input: batch=2, 1 channel, 28x28 (NCHW like the torch module).
    x = jax.random.normal(k_x, (2, 1, 28, 28), jnp.float32)
    raw = init_raw_params(k_p)
    kin = build_kernel_inputs(raw)

    logp = mnist_resnet_forward(x, kin)
    logp = jax.block_until_ready(logp)

    assert logp.shape == (2, 10), logp.shape
    assert bool(jnp.all(jnp.isfinite(logp)))
    row_sums = jnp.sum(jnp.exp(logp), axis=1)
    assert bool(jnp.all(jnp.abs(row_sums - 1.0) < 1e-3)), row_sums

    # Compare against the float32 reference (kernel uses bf16 weights on MXU).
    ref = reference_forward(x, raw)
    max_err = float(jnp.max(jnp.abs(logp - ref)))
    assert max_err < 0.1, f"max abs err vs f32 reference: {max_err}"

    print("KERNEL_OK")
</pallas_src>

<mosaic_0001>
module attributes {stable_mosaic.version = 11 : i64} {
  func.func @_fused_net_kernel(%arg0: i32, %arg1: memref<64x28xf32, #tpu.memory_space<vmem>>, %arg2: memref<3x28x208xbf16, #tpu.memory_space<vmem>>, %arg3: memref<1x208xf32, #tpu.memory_space<vmem>>, %arg4: memref<3x208x192xbf16, #tpu.memory_space<vmem>>, %arg5: memref<1x192xf32, #tpu.memory_space<vmem>>, %arg6: memref<3x192x88xbf16, #tpu.memory_space<vmem>>, %arg7: memref<3x192x88xbf16, #tpu.memory_space<vmem>>, %arg8: memref<3x88xf32, #tpu.memory_space<vmem>>, %arg9: memref<88x176xbf16, #tpu.memory_space<vmem>>, %arg10: memref<1x176xf32, #tpu.memory_space<vmem>>, %arg11: memref<3x176x144xbf16, #tpu.memory_space<vmem>>, %arg12: memref<1x144xf32, #tpu.memory_space<vmem>>, %arg13: memref<3x144x112xbf16, #tpu.memory_space<vmem>>, %arg14: memref<1x112xf32, #tpu.memory_space<vmem>>, %arg15: memref<7x112x10xbf16, #tpu.memory_space<vmem>>, %arg16: memref<1x10xf32, #tpu.memory_space<vmem>>, %arg17: memref<1x2x10xf32, #tpu.memory_space<vmem>>, %arg18: memref<54x88xf32, #tpu.memory_space<vmem>>, %arg19: memref<23x112xf32, #tpu.memory_space<vmem>>) attributes {dimension_semantics = [#tpu.dimension_semantics<parallel>], iteration_bounds = array<i64: 1>, scalar_prefetch = 0 : i64, scratch_operands = 2 : i64, tpu.core_type = #tpu.core_type<tc>, window_params = [{transform_indices = @transform_0, window_bounds = array<i64: 64, 28>}, {pipeline_mode = #tpu.pipeline_mode<synchronous>, transform_indices = @transform_1, window_bounds = array<i64: 3, 28, 208>}, {pipeline_mode = #tpu.pipeline_mode<synchronous>, transform_indices = @transform_2, window_bounds = array<i64: 1, 208>}, {pipeline_mode = #tpu.pipeline_mode<synchronous>, transform_indices = @transform_3, window_bounds = array<i64: 3, 208, 192>}, {pipeline_mode = #tpu.pipeline_mode<synchronous>, transform_indices = @transform_4, window_bounds = array<i64: 1, 192>}, {pipeline_mode = #tpu.pipeline_mode<synchronous>, transform_indices = @transform_5, window_bounds = array<i64: 3, 192, 88>}, {pipeline_mode = #tpu.pipeline_mode<synchronous>, transform_indices = @transform_6, window_bounds = array<i64: 3, 192, 88>}, {pipeline_mode = #tpu.pipeline_mode<synchronous>, transform_indices = @transform_7, window_bounds = array<i64: 3, 88>}, {pipeline_mode = #tpu.pipeline_mode<synchronous>, transform_indices = @transform_8, window_bounds = array<i64: 88, 176>}, {pipeline_mode = #tpu.pipeline_mode<synchronous>, transform_indices = @transform_9, window_bounds = array<i64: 1, 176>}, {pipeline_mode = #tpu.pipeline_mode<synchronous>, transform_indices = @transform_10, window_bounds = array<i64: 3, 176, 144>}, {pipeline_mode = #tpu.pipeline_mode<synchronous>, transform_indices = @transform_11, window_bounds = array<i64: 1, 144>}, {pipeline_mode = #tpu.pipeline_mode<synchronous>, transform_indices = @transform_12, window_bounds = array<i64: 3, 144, 112>}, {pipeline_mode = #tpu.pipeline_mode<synchronous>, transform_indices = @transform_13, window_bounds = array<i64: 1, 112>}, {pipeline_mode = #tpu.pipeline_mode<synchronous>, transform_indices = @transform_14, window_bounds = array<i64: 7, 112, 10>}, {pipeline_mode = #tpu.pipeline_mode<synchronous>, transform_indices = @transform_15, window_bounds = array<i64: 1, 10>}, {transform_indices = @transform_16, window_bounds = array<i64: 1, 2, 10>}]} {
    %c0 = arith.constant 0 : index
    %c0_0 = arith.constant 0 : index
    %0 = vector.load %arg1[%c0, %c0_0] : memref<64x28xf32, #tpu.memory_space<vmem>>, vector<64x28xf32>
    %1 = arith.truncf %0 : vector<64x28xf32> to vector<64x28xbf16>
    %2 = vector.extract_strided_slice %1 {offsets = [0, 0], sizes = [58, 28], strides = [1, 1]} : vector<64x28xbf16> to vector<58x28xbf16>
    %c0_1 = arith.constant 0 : index
    %c0_2 = arith.constant 0 : index
    %c0_3 = arith.constant 0 : index
    %3 = vector.load %arg2[%c0_1, %c0_2, %c0_3] : memref<3x28x208xbf16, #tpu.memory_space<vmem>>, vector<1x28x208xbf16>
    %4 = vector.shape_cast %3 : vector<1x28x208xbf16> to vector<28x208xbf16>
    %cst = arith.constant dense<0.000000e+00> : vector<58x208xf32>
    %5 = tpu.matmul %2, %4, %cst {dimension_numbers = #tpu.dot_dimension_numbers<[1], [0], [0], [1], [0, 0, 1, 1], [], []>} : vector<58x28xbf16>, vector<28x208xbf16>, vector<58x208xf32> -> vector<58x208xf32>
    %6 = vector.extract_strided_slice %1 {offsets = [1, 0], sizes = [58, 28], strides = [1, 1]} : vector<64x28xbf16> to vector<58x28xbf16>
    %c1 = arith.constant 1 : index
    %c0_4 = arith.constant 0 : index
    %c0_5 = arith.constant 0 : index
    %7 = vector.load %arg2[%c1, %c0_4, %c0_5] : memref<3x28x208xbf16, #tpu.memory_space<vmem>>, vector<1x28x208xbf16>
    %8 = vector.shape_cast %7 : vector<1x28x208xbf16> to vector<28x208xbf16>
    %cst_6 = arith.constant dense<0.000000e+00> : vector<58x208xf32>
    %9 = tpu.matmul %6, %8, %cst_6 {dimension_numbers = #tpu.dot_dimension_numbers<[1], [0], [0], [1], [0, 0, 1, 1], [], []>} : vector<58x28xbf16>, vector<28x208xbf16>, vector<58x208xf32> -> vector<58x208xf32>
    %10 = arith.addf %5, %9 : vector<58x208xf32>
    %11 = vector.extract_strided_slice %1 {offsets = [2, 0], sizes = [58, 28], strides = [1, 1]} : vector<64x28xbf16> to vector<58x28xbf16>
    %c2 = arith.constant 2 : index
    %c0_7 = arith.constant 0 : index
    %c0_8 = arith.constant 0 : index
    %12 = vector.load %arg2[%c2, %c0_7, %c0_8] : memref<3x28x208xbf16, #tpu.memory_space<vmem>>, vector<1x28x208xbf16>
    %13 = vector.shape_cast %12 : vector<1x28x208xbf16> to vector<28x208xbf16>
    %cst_9 = arith.constant dense<0.000000e+00> : vector<58x208xf32>
    %14 = tpu.matmul %11, %13, %cst_9 {dimension_numbers = #tpu.dot_dimension_numbers<[1], [0], [0], [1], [0, 0, 1, 1], [], []>} : vector<58x28xbf16>, vector<28x208xbf16>, vector<58x208xf32> -> vector<58x208xf32>
    %15 = arith.addf %10, %14 : vector<58x208xf32>
    %c0_10 = arith.constant 0 : index
    %c0_11 = arith.constant 0 : index
    %16 = vector.load %arg3[%c0_10, %c0_11] : memref<1x208xf32, #tpu.memory_space<vmem>>, vector<1x208xf32>
    %17 = vector.broadcast %16 : vector<1x208xf32> to vector<58x208xf32>
    %18 = arith.addf %15, %17 : vector<58x208xf32>
    %cst_12 = arith.constant 0.000000e+00 : f32
    %19 = vector.broadcast %cst_12 : f32 to vector<58x208xf32>
    %20 = arith.maximumf %18, %19 : vector<58x208xf32>
    %21 = arith.truncf %20 : vector<58x208xf32> to vector<58x208xbf16>
    %22 = vector.extract_strided_slice %21 {offsets = [0, 0], sizes = [56, 208], strides = [1, 1]} : vector<58x208xbf16> to vector<56x208xbf16>
    %c0_13 = arith.constant 0 : index
    %c0_14 = arith.constant 0 : index
    %c0_15 = arith.constant 0 : index
    %23 = vector.load %arg4[%c0_13, %c0_14, %c0_15] : memref<3x208x192xbf16, #tpu.memory_space<vmem>>, vector<1x208x192xbf16>
    %24 = vector.shape_cast %23 : vector<1x208x192xbf16> to vector<208x192xbf16>
    %cst_16 = arith.constant dense<0.000000e+00> : vector<56x192xf32>
    %25 = tpu.matmul %22, %24, %cst_16 {dimension_numbers = #tpu.dot_dimension_numbers<[1], [0], [0], [1], [0, 0, 1, 1], [], []>} : vector<56x208xbf16>, vector<208x192xbf16>, vector<56x192xf32> -> vector<56x192xf32>
    %26 = vector.extract_strided_slice %21 {offsets = [1, 0], sizes = [56, 208], strides = [1, 1]} : vector<58x208xbf16> to vector<56x208xbf16>
    %c1_17 = arith.constant 1 : index
    %c0_18 = arith.constant 0 : index
    %c0_19 = arith.constant 0 : index
    %27 = vector.load %arg4[%c1_17, %c0_18, %c0_19] : memref<3x208x192xbf16, #tpu.memory_space<vmem>>, vector<1x208x192xbf16>
    %28 = vector.shape_cast %27 : vector<1x208x192xbf16> to vector<208x192xbf16>
    %cst_20 = arith.constant dense<0.000000e+00> : vector<56x192xf32>
    %29 = tpu.matmul %26, %28, %cst_20 {dimension_numbers = #tpu.dot_dimension_numbers<[1], [0], [0], [1], [0, 0, 1, 1], [], []>} : vector<56x208xbf16>, vector<208x192xbf16>, vector<56x192xf32> -> vector<56x192xf32>
    %30 = arith.addf %25, %29 : vector<56x192xf32>
    %31 = vector.extract_strided_slice %21 {offsets = [2, 0], sizes = [56, 208], strides = [1, 1]} : vector<58x208xbf16> to vector<56x208xbf16>
    %c2_21 = arith.constant 2 : index
    %c0_22 = arith.constant 0 : index
    %c0_23 = arith.constant 0 : index
    %32 = vector.load %arg4[%c2_21, %c0_22, %c0_23] : memref<3x208x192xbf16, #tpu.memory_space<vmem>>, vector<1x208x192xbf16>
    %33 = vector.shape_cast %32 : vector<1x208x192xbf16> to vector<208x192xbf16>
    %cst_24 = arith.constant dense<0.000000e+00> : vector<56x192xf32>
    %34 = tpu.matmul %31, %33, %cst_24 {dimension_numbers = #tpu.dot_dimension_numbers<[1], [0], [0], [1], [0, 0, 1, 1], [], []>} : vector<56x208xbf16>, vector<208x192xbf16>, vector<56x192xf32> -> vector<56x192xf32>
    %35 = arith.addf %30, %34 : vector<56x192xf32>
    %c0_25 = arith.constant 0 : index
    %c0_26 = arith.constant 0 : index
    %36 = vector.load %arg5[%c0_25, %c0_26] : memref<1x192xf32, #tpu.memory_space<vmem>>, vector<1x192xf32>
    %37 = vector.broadcast %36 : vector<1x192xf32> to vector<56x192xf32>
    %38 = arith.addf %35, %37 : vector<56x192xf32>
    %cst_27 = arith.constant 0.000000e+00 : f32
    %39 = vector.broadcast %cst_27 : f32 to vector<56x192xf32>
    %40 = arith.maximumf %38, %39 : vector<56x192xf32>
    %41 = arith.truncf %40 : vector<56x192xf32> to vector<56x192xbf16>
    %c0_28 = arith.constant 0 : index
    %c0_29 = arith.constant 0 : index
    %42 = vector.load %arg8[%c0_28, %c0_29] : memref<3x88xf32, #tpu.memory_space<vmem>>, vector<3x88xf32>
    %43 = vector.extract_strided_slice %41 {offsets = [0, 0], sizes = [54, 192], strides = [1, 1]} : vector<56x192xbf16> to vector<54x192xbf16>
    %c0_30 = arith.constant 0 : index
    %c0_31 = arith.constant 0 : index
    %c0_32 = arith.constant 0 : index
    %44 = vector.load %arg6[%c0_30, %c0_31, %c0_32] : memref<3x192x88xbf16, #tpu.memory_space<vmem>>, vector<1x192x88xbf16>
    %45 = vector.shape_cast %44 : vector<1x192x88xbf16> to vector<192x88xbf16>
    %cst_33 = arith.constant dense<0.000000e+00> : vector<54x88xf32>
    %46 = tpu.matmul %43, %45, %cst_33 {dimension_numbers = #tpu.dot_dimension_numbers<[1], [0], [0], [1], [0, 0, 1, 1], [], []>} : vector<54x192xbf16>, vector<192x88xbf16>, vector<54x88xf32> -> vector<54x88xf32>
    %47 = vector.extract_strided_slice %41 {offsets = [1, 0], sizes = [54, 192], strides = [1, 1]} : vector<56x192xbf16> to vector<54x192xbf16>
    %c1_34 = arith.constant 1 : index
    %c0_35 = arith.constant 0 : index
    %c0_36 = arith.constant 0 : index
    %48 = vector.load %arg6[%c1_34, %c0_35, %c0_36] : memref<3x192x88xbf16, #tpu.memory_space<vmem>>, vector<1x192x88xbf16>
    %49 = vector.shape_cast %48 : vector<1x192x88xbf16> to vector<192x88xbf16>
    %cst_37 = arith.constant dense<0.000000e+00> : vector<54x88xf32>
    %50 = tpu.matmul %47, %49, %cst_37 {dimension_numbers = #tpu.dot_dimension_numbers<[1], [0], [0], [1], [0, 0, 1, 1], [], []>} : vector<54x192xbf16>, vector<192x88xbf16>, vector<54x88xf32> -> vector<54x88xf32>
    %51 = arith.addf %46, %50 : vector<54x88xf32>
    %52 = vector.extract_strided_slice %41 {offsets = [2, 0], sizes = [54, 192], strides = [1, 1]} : vector<56x192xbf16> to vector<54x192xbf16>
    %c2_38 = arith.constant 2 : index
    %c0_39 = arith.constant 0 : index
    %c0_40 = arith.constant 0 : index
    %53 = vector.load %arg6[%c2_38, %c0_39, %c0_40] : memref<3x192x88xbf16, #tpu.memory_space<vmem>>, vector<1x192x88xbf16>
    %54 = vector.shape_cast %53 : vector<1x192x88xbf16> to vector<192x88xbf16>
    %cst_41 = arith.constant dense<0.000000e+00> : vector<54x88xf32>
    %55 = tpu.matmul %52, %54, %cst_41 {dimension_numbers = #tpu.dot_dimension_numbers<[1], [0], [0], [1], [0, 0, 1, 1], [], []>} : vector<54x192xbf16>, vector<192x88xbf16>, vector<54x88xf32> -> vector<54x88xf32>
    %56 = arith.addf %51, %55 : vector<54x88xf32>
    %57 = vector.extract_strided_slice %42 {offsets = [0, 0], sizes = [1, 88], strides = [1, 1]} : vector<3x88xf32> to vector<1x88xf32>
    %58 = vector.broadcast %57 : vector<1x88xf32> to vector<54x88xf32>
    %59 = arith.addf %56, %58 : vector<54x88xf32>
    %cst_42 = arith.constant 0.000000e+00 : f32
    %60 = vector.broadcast %cst_42 : f32 to vector<54x88xf32>
    %61 = arith.maximumf %59, %60 : vector<54x88xf32>
    %62 = vector.extract_strided_slice %42 {offsets = [1, 0], sizes = [1, 88], strides = [1, 1]} : vector<3x88xf32> to vector<1x88xf32>
    %63 = vector.broadcast %62 : vector<1x88xf32> to vector<54x88xf32>
    %64 = arith.mulf %61, %63 : vector<54x88xf32>
    %65 = vector.extract_strided_slice %42 {offsets = [2, 0], sizes = [1, 88], strides = [1, 1]} : vector<3x88xf32> to vector<1x88xf32>
    %66 = vector.broadcast %65 : vector<1x88xf32> to vector<54x88xf32>
    %67 = arith.addf %64, %66 : vector<54x88xf32>
    %68 = vector.extract_strided_slice %41 {offsets = [0, 0], sizes = [54, 192], strides = [1, 1]} : vector<56x192xbf16> to vector<54x192xbf16>
    %c0_43 = arith.constant 0 : index
    %c0_44 = arith.constant 0 : index
    %c0_45 = arith.constant 0 : index
    %69 = vector.load %arg7[%c0_43, %c0_44, %c0_45] : memref<3x192x88xbf16, #tpu.memory_space<vmem>>, vector<1x192x88xbf16>
    %70 = vector.shape_cast %69 : vector<1x192x88xbf16> to vector<192x88xbf16>
    %cst_46 = arith.constant dense<0.000000e+00> : vector<54x88xf32>
    %71 = tpu.matmul %68, %70, %cst_46 {dimension_numbers = #tpu.dot_dimension_numbers<[1], [0], [0], [1], [0, 0, 1, 1], [], []>} : vector<54x192xbf16>, vector<192x88xbf16>, vector<54x88xf32> -> vector<54x88xf32>
    %72 = vector.extract_strided_slice %41 {offsets = [1, 0], sizes = [54, 192], strides = [1, 1]} : vector<56x192xbf16> to vector<54x192xbf16>
    %c1_47 = arith.constant 1 : index
    %c0_48 = arith.constant 0 : index
    %c0_49 = arith.constant 0 : index
    %73 = vector.load %arg7[%c1_47, %c0_48, %c0_49] : memref<3x192x88xbf16, #tpu.memory_space<vmem>>, vector<1x192x88xbf16>
    %74 = vector.shape_cast %73 : vector<1x192x88xbf16> to vector<192x88xbf16>
    %cst_50 = arith.constant dense<0.000000e+00> : vector<54x88xf32>
    %75 = tpu.matmul %72, %74, %cst_50 {dimension_numbers = #tpu.dot_dimension_numbers<[1], [0], [0], [1], [0, 0, 1, 1], [], []>} : vector<54x192xbf16>, vector<192x88xbf16>, vector<54x88xf32> -> vector<54x88xf32>
    %76 = arith.addf %71, %75 : vector<54x88xf32>
    %77 = vector.extract_strided_slice %41 {offsets = [2, 0], sizes = [54, 192], strides = [1, 1]} : vector<56x192xbf16> to vector<54x192xbf16>
    %c2_51 = arith.constant 2 : index
    %c0_52 = arith.constant 0 : index
    %c0_53 = arith.constant 0 : index
    %78 = vector.load %arg7[%c2_51, %c0_52, %c0_53] : memref<3x192x88xbf16, #tpu.memory_space<vmem>>, vector<1x192x88xbf16>
    %79 = vector.shape_cast %78 : vector<1x192x88xbf16> to vector<192x88xbf16>
    %cst_54 = arith.constant dense<0.000000e+00> : vector<54x88xf32>
    %80 = tpu.matmul %77, %79, %cst_54 {dimension_numbers = #tpu.dot_dimension_numbers<[1], [0], [0], [1], [0, 0, 1, 1], [], []>} : vector<54x192xbf16>, vector<192x88xbf16>, vector<54x88xf32> -> vector<54x88xf32>
    %81 = arith.addf %76, %80 : vector<54x88xf32>
    %82 = vector.extract_strided_slice %42 {offsets = [0, 0], sizes = [1, 88], strides = [1, 1]} : vector<3x88xf32> to vector<1x88xf32>
    %83 = vector.broadcast %82 : vector<1x88xf32> to vector<54x88xf32>
    %84 = arith.addf %81, %83 : vector<54x88xf32>
    %cst_55 = arith.constant 0.000000e+00 : f32
    %85 = vector.broadcast %cst_55 : f32 to vector<54x88xf32>
    %86 = arith.maximumf %84, %85 : vector<54x88xf32>
    %87 = vector.extract_strided_slice %42 {offsets = [1, 0], sizes = [1, 88], strides = [1, 1]} : vector<3x88xf32> to vector<1x88xf32>
    %88 = vector.broadcast %87 : vector<1x88xf32> to vector<54x88xf32>
    %89 = arith.mulf %86, %88 : vector<54x88xf32>
    %90 = vector.extract_strided_slice %42 {offsets = [2, 0], sizes = [1, 88], strides = [1, 1]} : vector<3x88xf32> to vector<1x88xf32>
    %91 = vector.broadcast %90 : vector<1x88xf32> to vector<54x88xf32>
    %92 = arith.addf %89, %91 : vector<54x88xf32>
    %93 = arith.maximumf %67, %92 : vector<54x88xf32>
    %c0_56 = arith.constant 0 : index
    %c0_57 = arith.constant 0 : index
    %94 = vector.load %arg18[%c0_56, %c0_57] : memref<54x88xf32, #tpu.memory_space<vmem>>, vector<54x88xf32>
    tpu.vector_store %arg18[%c0_56, %c0_57], %93 {strides = array<i32>} : memref<54x88xf32, #tpu.memory_space<vmem>>, vector<54x88xf32>,
    %c0_58 = arith.constant 0 : index
    %c0_59 = arith.constant 0 : index
    %95 = tpu.strided_load %arg18[%c0_58, %c0_59] {strides = array<i32: 2, 1>} : memref<54x88xf32, #tpu.memory_space<vmem>>, vector<27x88xf32>
    %c1_60 = arith.constant 1 : index
    %c0_61 = arith.constant 0 : index
    %96 = tpu.strided_load %arg18[%c1_60, %c0_61] {strides = array<i32: 2, 1>} : memref<54x88xf32, #tpu.memory_space<vmem>>, vector<27x88xf32>
    %97 = arith.maximumf %95, %96 : vector<27x88xf32>
    %98 = arith.truncf %97 : vector<27x88xf32> to vector<27x88xbf16>
    %c0_62 = arith.constant 0 : index
    %c0_63 = arith.constant 0 : index
    %99 = vector.load %arg9[%c0_62, %c0_63] : memref<88x176xbf16, #tpu.memory_space<vmem>>, vector<88x176xbf16>
    %cst_64 = arith.constant dense<0.000000e+00> : vector<27x176xf32>
    %100 = tpu.matmul %98, %99, %cst_64 {dimension_numbers = #tpu.dot_dimension_numbers<[1], [0], [0], [1], [0, 0, 1, 1], [], []>} : vector<27x88xbf16>, vector<88x176xbf16>, vector<27x176xf32> -> vector<27x176xf32>
    %c0_65 = arith.constant 0 : index
    %c0_66 = arith.constant 0 : index
    %101 = vector.load %arg10[%c0_65, %c0_66] : memref<1x176xf32, #tpu.memory_space<vmem>>, vector<1x176xf32>
    %102 = vector.broadcast %101 : vector<1x176xf32> to vector<27x176xf32>
    %103 = arith.addf %100, %102 : vector<27x176xf32>
    %104 = arith.truncf %103 : vector<27x176xf32> to vector<27x176xbf16>
    %105 = vector.extract_strided_slice %104 {offsets = [0, 0], sizes = [25, 176], strides = [1, 1]} : vector<27x176xbf16> to vector<25x176xbf16>
    %c0_67 = arith.constant 0 : index
    %c0_68 = arith.constant 0 : index
    %c0_69 = arith.constant 0 : index
    %106 = vector.load %arg11[%c0_67, %c0_68, %c0_69] : memref<3x176x144xbf16, #tpu.memory_space<vmem>>, vector<1x176x144xbf16>
    %107 = vector.shape_cast %106 : vector<1x176x144xbf16> to vector<176x144xbf16>
    %cst_70 = arith.constant dense<0.000000e+00> : vector<25x144xf32>
    %108 = tpu.matmul %105, %107, %cst_70 {dimension_numbers = #tpu.dot_dimension_numbers<[1], [0], [0], [1], [0, 0, 1, 1], [], []>} : vector<25x176xbf16>, vector<176x144xbf16>, vector<25x144xf32> -> vector<25x144xf32>
    %109 = vector.extract_strided_slice %104 {offsets = [1, 0], sizes = [25, 176], strides = [1, 1]} : vector<27x176xbf16> to vector<25x176xbf16>
    %c1_71 = arith.constant 1 : index
    %c0_72 = arith.constant 0 : index
    %c0_73 = arith.constant 0 : index
    %110 = vector.load %arg11[%c1_71, %c0_72, %c0_73] : memref<3x176x144xbf16, #tpu.memory_space<vmem>>, vector<1x176x144xbf16>
    %111 = vector.shape_cast %110 : vector<1x176x144xbf16> to vector<176x144xbf16>
    %cst_74 = arith.constant dense<0.000000e+00> : vector<25x144xf32>
    %112 = tpu.matmul %109, %111, %cst_74 {dimension_numbers = #tpu.dot_dimension_numbers<[1], [0], [0], [1], [0, 0, 1, 1], [], []>} : vector<25x176xbf16>, vector<176x144xbf16>, vector<25x144xf32> -> vector<25x144xf32>
    %113 = arith.addf %108, %112 : vector<25x144xf32>
    %114 = vector.extract_strided_slice %104 {offsets = [2, 0], sizes = [25, 176], strides = [1, 1]} : vector<27x176xbf16> to vector<25x176xbf16>
    %c2_75 = arith.constant 2 : index
    %c0_76 = arith.constant 0 : index
    %c0_77 = arith.constant 0 : index
    %115 = vector.load %arg11[%c2_75, %c0_76, %c0_77] : memref<3x176x144xbf16, #tpu.memory_space<vmem>>, vector<1x176x144xbf16>
    %116 = vector.shape_cast %115 : vector<1x176x144xbf16> to vector<176x144xbf16>
    %cst_78 = arith.constant dense<0.000000e+00> : vector<25x144xf32>
    %117 = tpu.matmul %114, %116, %cst_78 {dimension_numbers = #tpu.dot_dimension_numbers<[1], [0], [0], [1], [0, 0, 1, 1], [], []>} : vector<25x176xbf16>, vector<176x144xbf16>, vector<25x144xf32> -> vector<25x144xf32>
    %118 = arith.addf %113, %117 : vector<25x144xf32>
    %c0_79 = arith.constant 0 : index
    %c0_80 = arith.constant 0 : index
    %119 = vector.load %arg12[%c0_79, %c0_80] : memref<1x144xf32, #tpu.memory_space<vmem>>, vector<1x144xf32>
    %120 = vector.broadcast %119 : vector<1x144xf32> to vector<25x144xf32>
    %121 = arith.addf %118, %120 : vector<25x144xf32>
    %cst_81 = arith.constant 0.000000e+00 : f32
    %122 = vector.broadcast %cst_81 : f32 to vector<25x144xf32>
    %123 = arith.maximumf %121, %122 : vector<25x144xf32>
    %124 = arith.truncf %123 : vector<25x144xf32> to vector<25x144xbf16>
    %125 = vector.extract_strided_slice %124 {offsets = [0, 0], sizes = [23, 144], strides = [1, 1]} : vector<25x144xbf16> to vector<23x144xbf16>
    %c0_82 = arith.constant 0 : index
    %c0_83 = arith.constant 0 : index
    %c0_84 = arith.constant 0 : index
    %126 = vector.load %arg13[%c0_82, %c0_83, %c0_84] : memref<3x144x112xbf16, #tpu.memory_space<vmem>>, vector<1x144x112xbf16>
    %127 = vector.shape_cast %126 : vector<1x144x112xbf16> to vector<144x112xbf16>
    %cst_85 = arith.constant dense<0.000000e+00> : vector<23x112xf32>
    %128 = tpu.matmul %125, %127, %cst_85 {dimension_numbers = #tpu.dot_dimension_numbers<[1], [0], [0], [1], [0, 0, 1, 1], [], []>} : vector<23x144xbf16>, vector<144x112xbf16>, vector<23x112xf32> -> vector<23x112xf32>
    %129 = vector.extract_strided_slice %124 {offsets = [1, 0], sizes = [23, 144], strides = [1, 1]} : vector<25x144xbf16> to vector<23x144xbf16>
    %c1_86 = arith.constant 1 : index
    %c0_87 = arith.constant 0 : index
    %c0_88 = arith.constant 0 : index
    %130 = vector.load %arg13[%c1_86, %c0_87, %c0_88] : memref<3x144x112xbf16, #tpu.memory_space<vmem>>, vector<1x144x112xbf16>
    %131 = vector.shape_cast %130 : vector<1x144x112xbf16> to vector<144x112xbf16>
    %cst_89 = arith.constant dense<0.000000e+00> : vector<23x112xf32>
    %132 = tpu.matmul %129, %131, %cst_89 {dimension_numbers = #tpu.dot_dimension_numbers<[1], [0], [0], [1], [0, 0, 1, 1], [], []>} : vector<23x144xbf16>, vector<144x112xbf16>, vector<23x112xf32> -> vector<23x112xf32>
    %133 = arith.addf %128, %132 : vector<23x112xf32>
    %134 = vector.extract_strided_slice %124 {offsets = [2, 0], sizes = [23, 144], strides = [1, 1]} : vector<25x144xbf16> to vector<23x144xbf16>
    %c2_90 = arith.constant 2 : index
    %c0_91 = arith.constant 0 : index
    %c0_92 = arith.constant 0 : index
    %135 = vector.load %arg13[%c2_90, %c0_91, %c0_92] : memref<3x144x112xbf16, #tpu.memory_space<vmem>>, vector<1x144x112xbf16>
    %136 = vector.shape_cast %135 : vector<1x144x112xbf16> to vector<144x112xbf16>
    %cst_93 = arith.constant dense<0.000000e+00> : vector<23x112xf32>
    %137 = tpu.matmul %134, %136, %cst_93 {dimension_numbers = #tpu.dot_dimension_numbers<[1], [0], [0], [1], [0, 0, 1, 1], [], []>} : vector<23x144xbf16>, vector<144x112xbf16>, vector<23x112xf32> -> vector<23x112xf32>
    %138 = arith.addf %133, %137 : vector<23x112xf32>
    %c0_94 = arith.constant 0 : index
    %c0_95 = arith.constant 0 : index
    %139 = vector.load %arg14[%c0_94, %c0_95] : memref<1x112xf32, #tpu.memory_space<vmem>>, vector<1x112xf32>
    %140 = vector.broadcast %139 : vector<1x112xf32> to vector<23x112xf32>
    %141 = arith.addf %138, %140 : vector<23x112xf32>
    %cst_96 = arith.constant 0.000000e+00 : f32
    %142 = vector.broadcast %cst_96 : f32 to vector<23x112xf32>
    %143 = arith.maximumf %141, %142 : vector<23x112xf32>
    %c0_97 = arith.constant 0 : index
    %c0_98 = arith.constant 0 : index
    %144 = vector.load %arg19[%c0_97, %c0_98] : memref<23x112xf32, #tpu.memory_space<vmem>>, vector<23x112xf32>
    tpu.vector_store %arg19[%c0_97, %c0_98], %143 {strides = array<i32>} : memref<23x112xf32, #tpu.memory_space<vmem>>, vector<23x112xf32>,
    %cst_99 = arith.constant 0.000000e+00 : f32
    %145 = vector.broadcast %cst_99 : f32 to vector<2x10xf32>
    %c0_100 = arith.constant 0 : index
    %c0_101 = arith.constant 0 : index
    %146 = tpu.strided_load %arg19[%c0_100, %c0_101] {strides = array<i32: 16, 1>} : memref<23x112xf32, #tpu.memory_space<vmem>>, vector<2x112xf32>
    %147 = arith.truncf %146 : vector<2x112xf32> to vector<2x112xbf16>
    %c0_102 = arith.constant 0 : index
    %c0_103 = arith.constant 0 : index
    %c0_104 = arith.constant 0 : index
    %148 = vector.load %arg15[%c0_102, %c0_103, %c0_104] : memref<7x112x10xbf16, #tpu.memory_space<vmem>>, vector<1x112x10xbf16>
    %149 = vector.shape_cast %148 : vector<1x112x10xbf16> to vector<112x10xbf16>
    %cst_105 = arith.constant dense<0.000000e+00> : vector<2x10xf32>
    %150 = tpu.matmul %147, %149, %cst_105 {dimension_numbers = #tpu.dot_dimension_numbers<[1], [0], [0], [1], [0, 0, 1, 1], [], []>} : vector<2x112xbf16>, vector<112x10xbf16>, vector<2x10xf32> -> vector<2x10xf32>
    %151 = arith.addf %145, %150 : vector<2x10xf32>
    %c1_106 = arith.constant 1 : index
    %c0_107 = arith.constant 0 : index
    %152 = tpu.strided_load %arg19[%c1_106, %c0_107] {strides = array<i32: 16, 1>} : memref<23x112xf32, #tpu.memory_space<vmem>>, vector<2x112xf32>
    %153 = arith.truncf %152 : vector<2x112xf32> to vector<2x112xbf16>
    %c1_108 = arith.constant 1 : index
    %c0_109 = arith.constant 0 : index
    %c0_110 = arith.constant 0 : index
    %154 = vector.load %arg15[%c1_108, %c0_109, %c0_110] : memref<7x112x10xbf16, #tpu.memory_space<vmem>>, vector<1x112x10xbf16>
    %155 = vector.shape_cast %154 : vector<1x112x10xbf16> to vector<112x10xbf16>
    %cst_111 = arith.constant dense<0.000000e+00> : vector<2x10xf32>
    %156 = tpu.matmul %153, %155, %cst_111 {dimension_numbers = #tpu.dot_dimension_numbers<[1], [0], [0], [1], [0, 0, 1, 1], [], []>} : vector<2x112xbf16>, vector<112x10xbf16>, vector<2x10xf32> -> vector<2x10xf32>
    %157 = arith.addf %151, %156 : vector<2x10xf32>
    %c2_112 = arith.constant 2 : index
    %c0_113 = arith.constant 0 : index
    %158 = tpu.strided_load %arg19[%c2_112, %c0_113] {strides = array<i32: 16, 1>} : memref<23x112xf32, #tpu.memory_space<vmem>>, vector<2x112xf32>
    %159 = arith.truncf %158 : vector<2x112xf32> to vector<2x112xbf16>
    %c2_114 = arith.constant 2 : index
    %c0_115 = arith.constant 0 : index
    %c0_116 = arith.constant 0 : index
    %160 = vector.load %arg15[%c2_114, %c0_115, %c0_116] : memref<7x112x10xbf16, #tpu.memory_space<vmem>>, vector<1x112x10xbf16>
    %161 = vector.shape_cast %160 : vector<1x112x10xbf16> to vector<112x10xbf16>
    %cst_117 = arith.constant dense<0.000000e+00> : vector<2x10xf32>
    %162 = tpu.matmul %159, %161, %cst_117 {dimension_numbers = #tpu.dot_dimension_numbers<[1], [0], [0], [1], [0, 0, 1, 1], [], []>} : vector<2x112xbf16>, vector<112x10xbf16>, vector<2x10xf32> -> vector<2x10xf32>
    %163 = arith.addf %157, %162 : vector<2x10xf32>
    %c3 = arith.constant 3 : index
    %c0_118 = arith.constant 0 : index
    %164 = tpu.strided_load %arg19[%c3, %c0_118] {strides = array<i32: 16, 1>} : memref<23x112xf32, #tpu.memory_space<vmem>>, vector<2x112xf32>
    %165 = arith.truncf %164 : vector<2x112xf32> to vector<2x112xbf16>
    %c3_119 = arith.constant 3 : index
    %c0_120 = arith.constant 0 : index
    %c0_121 = arith.constant 0 : index
    %166 = vector.load %arg15[%c3_119, %c0_120, %c0_121] : memref<7x112x10xbf16, #tpu.memory_space<vmem>>, vector<1x112x10xbf16>
    %167 = vector.shape_cast %166 : vector<1x112x10xbf16> to vector<112x10xbf16>
    %cst_122 = arith.constant dense<0.000000e+00> : vector<2x10xf32>
    %168 = tpu.matmul %165, %167, %cst_122 {dimension_numbers = #tpu.dot_dimension_numbers<[1], [0], [0], [1], [0, 0, 1, 1], [], []>} : vector<2x112xbf16>, vector<112x10xbf16>, vector<2x10xf32> -> vector<2x10xf32>
    %169 = arith.addf %163, %168 : vector<2x10xf32>
    %c4 = arith.constant 4 : index
    %c0_123 = arith.constant 0 : index
    %170 = tpu.strided_load %arg19[%c4, %c0_123] {strides = array<i32: 16, 1>} : memref<23x112xf32, #tpu.memory_space<vmem>>, vector<2x112xf32>
    %171 = arith.truncf %170 : vector<2x112xf32> to vector<2x112xbf16>
    %c4_124 = arith.constant 4 : index
    %c0_125 = arith.constant 0 : index
    %c0_126 = arith.constant 0 : index
    %172 = vector.load %arg15[%c4_124, %c0_125, %c0_126] : memref<7x112x10xbf16, #tpu.memory_space<vmem>>, vector<1x112x10xbf16>
    %173 = vector.shape_cast %172 : vector<1x112x10xbf16> to vector<112x10xbf16>
    %cst_127 = arith.constant dense<0.000000e+00> : vector<2x10xf32>
    %174 = tpu.matmul %171, %173, %cst_127 {dimension_numbers = #tpu.dot_dimension_numbers<[1], [0], [0], [1], [0, 0, 1, 1], [], []>} : vector<2x112xbf16>, vector<112x10xbf16>, vector<2x10xf32> -> vector<2x10xf32>
    %175 = arith.addf %169, %174 : vector<2x10xf32>
    %c5 = arith.constant 5 : index
    %c0_128 = arith.constant 0 : index
    %176 = tpu.strided_load %arg19[%c5, %c0_128] {strides = array<i32: 16, 1>} : memref<23x112xf32, #tpu.memory_space<vmem>>, vector<2x112xf32>
    %177 = arith.truncf %176 : vector<2x112xf32> to vector<2x112xbf16>
    %c5_129 = arith.constant 5 : index
    %c0_130 = arith.constant 0 : index
    %c0_131 = arith.constant 0 : index
    %178 = vector.load %arg15[%c5_129, %c0_130, %c0_131] : memref<7x112x10xbf16, #tpu.memory_space<vmem>>, vector<1x112x10xbf16>
    %179 = vector.shape_cast %178 : vector<1x112x10xbf16> to vector<112x10xbf16>
    %cst_132 = arith.constant dense<0.000000e+00> : vector<2x10xf32>
    %180 = tpu.matmul %177, %179, %cst_132 {dimension_numbers = #tpu.dot_dimension_numbers<[1], [0], [0], [1], [0, 0, 1, 1], [], []>} : vector<2x112xbf16>, vector<112x10xbf16>, vector<2x10xf32> -> vector<2x10xf32>
    %181 = arith.addf %175, %180 : vector<2x10xf32>
    %c6 = arith.constant 6 : index
    %c0_133 = arith.constant 0 : index
    %182 = tpu.strided_load %arg19[%c6, %c0_133] {strides = array<i32: 16, 1>} : memref<23x112xf32, #tpu.memory_space<vmem>>, vector<2x112xf32>
    %183 = arith.truncf %182 : vector<2x112xf32> to vector<2x112xbf16>
    %c6_134 = arith.constant 6 : index
    %c0_135 = arith.constant 0 : index
    %c0_136 = arith.constant 0 : index
    %184 = vector.load %arg15[%c6_134, %c0_135, %c0_136] : memref<7x112x10xbf16, #tpu.memory_space<vmem>>, vector<1x112x10xbf16>
    %185 = vector.shape_cast %184 : vector<1x112x10xbf16> to vector<112x10xbf16>
    %cst_137 = arith.constant dense<0.000000e+00> : vector<2x10xf32>
    %186 = tpu.matmul %183, %185, %cst_137 {dimension_numbers = #tpu.dot_dimension_numbers<[1], [0], [0], [1], [0, 0, 1, 1], [], []>} : vector<2x112xbf16>, vector<112x10xbf16>, vector<2x10xf32> -> vector<2x10xf32>
    %187 = arith.addf %181, %186 : vector<2x10xf32>
    %c0_138 = arith.constant 0 : index
    %c0_139 = arith.constant 0 : index
    %188 = vector.load %arg16[%c0_138, %c0_139] : memref<1x10xf32, #tpu.memory_space<vmem>>, vector<1x10xf32>
    %189 = vector.broadcast %188 : vector<1x10xf32> to vector<2x10xf32>
    %190 = arith.addf %187, %189 : vector<2x10xf32>
    %cst_140 = arith.constant dense<0xFF800000> : vector<2xf32>
    %191 = vector.multi_reduction <maximumf>, %190, %cst_140 [1] : vector<2x10xf32> to vector<2xf32>
    %192 = vector.shape_cast %191 : vector<2xf32> to vector<2x1xf32>
    %193 = vector.broadcast %192 : vector<2x1xf32> to vector<2x10xf32>
    %194 = arith.subf %190, %193 : vector<2x10xf32>
    %195 = math.exp %194 : vector<2x10xf32>
    %cst_141 = arith.constant dense<0.000000e+00> : vector<2xf32>
    %196 = vector.multi_reduction <add>, %195, %cst_141 [1] : vector<2x10xf32> to vector<2xf32>
    %197 = vector.shape_cast %196 : vector<2xf32> to vector<2x1xf32>
    %198 = math.log %197 : vector<2x1xf32>
    %199 = vector.broadcast %198 : vector<2x1xf32> to vector<2x10xf32>
    %200 = arith.subf %194, %199 : vector<2x10xf32>
    %c0_142 = arith.constant 0 : index
    %c0_143 = arith.constant 0 : index
    %c0_144 = arith.constant 0 : index
    %201 = vector.load %arg17[%c0_142, %c0_143, %c0_144] : memref<1x2x10xf32, #tpu.memory_space<vmem>>, vector<1x2x10xf32>
    %202 = vector.shape_cast %201 : vector<1x2x10xf32> to vector<2x10xf32>
    %203 = vector.shape_cast %200 : vector<2x10xf32> to vector<1x2x10xf32>
    tpu.vector_store %arg17[%c0_142, %c0_143, %c0_144], %203 {strides = array<i32>} : memref<1x2x10xf32, #tpu.memory_space<vmem>>, vector<1x2x10xf32>,
    return
  }
  func.func @transform_0(%arg0: i32) -> (i32, i32) {
    %c0_i32 = arith.constant 0 : i32
    %c0_i32_0 = arith.constant 0 : i32
    return %arg0, %c0_i32 : i32, i32
  }
  func.func @transform_1(%arg0: i32) -> (i32, i32, i32) {
    %c0_i32 = arith.constant 0 : i32
    %c0_i32_0 = arith.constant 0 : i32
    %c0_i32_1 = arith.constant 0 : i32
    %c0_i32_2 = arith.constant 0 : i32
    return %c0_i32, %c0_i32_0, %c0_i32_1 : i32, i32, i32
  }
  func.func @transform_2(%arg0: i32) -> (i32, i32) {
    %c0_i32 = arith.constant 0 : i32
    %c0_i32_0 = arith.constant 0 : i32
    %c0_i32_1 = arith.constant 0 : i32
    return %c0_i32, %c0_i32_0 : i32, i32
  }
  func.func @transform_3(%arg0: i32) -> (i32, i32, i32) {
    %c0_i32 = arith.constant 0 : i32
    %c0_i32_0 = arith.constant 0 : i32
    %c0_i32_1 = arith.constant 0 : i32
    %c0_i32_2 = arith.constant 0 : i32
    return %c0_i32, %c0_i32_0, %c0_i32_1 : i32, i32, i32
  }
  func.func @transform_4(%arg0: i32) -> (i32, i32) {
    %c0_i32 = arith.constant 0 : i32
    %c0_i32_0 = arith.constant 0 : i32
    %c0_i32_1 = arith.constant 0 : i32
    return %c0_i32, %c0_i32_0 : i32, i32
  }
  func.func @transform_5(%arg0: i32) -> (i32, i32, i32) {
    %c0_i32 = arith.constant 0 : i32
    %c0_i32_0 = arith.constant 0 : i32
    %c0_i32_1 = arith.constant 0 : i32
    %c0_i32_2 = arith.constant 0 : i32
    return %c0_i32, %c0_i32_0, %c0_i32_1 : i32, i32, i32
  }
  func.func @transform_6(%arg0: i32) -> (i32, i32, i32) {
    %c0_i32 = arith.constant 0 : i32
    %c0_i32_0 = arith.constant 0 : i32
    %c0_i32_1 = arith.constant 0 : i32
    %c0_i32_2 = arith.constant 0 : i32
    return %c0_i32, %c0_i32_0, %c0_i32_1 : i32, i32, i32
  }
  func.func @transform_7(%arg0: i32) -> (i32, i32) {
    %c0_i32 = arith.constant 0 : i32
    %c0_i32_0 = arith.constant 0 : i32
    %c0_i32_1 = arith.constant 0 : i32
    return %c0_i32, %c0_i32_0 : i32, i32
  }
  func.func @transform_8(%arg0: i32) -> (i32, i32) {
    %c0_i32 = arith.constant 0 : i32
    %c0_i32_0 = arith.constant 0 : i32
    %c0_i32_1 = arith.constant 0 : i32
    return %c0_i32, %c0_i32_0 : i32, i32
  }
  func.func @transform_9(%arg0: i32) -> (i32, i32) {
    %c0_i32 = arith.constant 0 : i32
    %c0_i32_0 = arith.constant 0 : i32
    %c0_i32_1 = arith.constant 0 : i32
    return %c0_i32, %c0_i32_0 : i32, i32
  }
  func.func @transform_10(%arg0: i32) -> (i32, i32, i32) {
    %c0_i32 = arith.constant 0 : i32
    %c0_i32_0 = arith.constant 0 : i32
    %c0_i32_1 = arith.constant 0 : i32
    %c0_i32_2 = arith.constant 0 : i32
    return %c0_i32, %c0_i32_0, %c0_i32_1 : i32, i32, i32
  }
  func.func @transform_11(%arg0: i32) -> (i32, i32) {
    %c0_i32 = arith.constant 0 : i32
    %c0_i32_0 = arith.constant 0 : i32
    %c0_i32_1 = arith.constant 0 : i32
    return %c0_i32, %c0_i32_0 : i32, i32
  }
  func.func @transform_12(%arg0: i32) -> (i32, i32, i32) {
    %c0_i32 = arith.constant 0 : i32
    %c0_i32_0 = arith.constant 0 : i32
    %c0_i32_1 = arith.constant 0 : i32
    %c0_i32_2 = arith.constant 0 : i32
    return %c0_i32, %c0_i32_0, %c0_i32_1 : i32, i32, i32
  }
  func.func @transform_13(%arg0: i32) -> (i32, i32) {
    %c0_i32 = arith.constant 0 : i32
    %c0_i32_0 = arith.constant 0 : i32
    %c0_i32_1 = arith.constant 0 : i32
    return %c0_i32, %c0_i32_0 : i32, i32
  }
  func.func @transform_14(%arg0: i32) -> (i32, i32, i32) {
    %c0_i32 = arith.constant 0 : i32
    %c0_i32_0 = arith.constant 0 : i32
    %c0_i32_1 = arith.constant 0 : i32
    %c0_i32_2 = arith.constant 0 : i32
    return %c0_i32, %c0_i32_0, %c0_i32_1 : i32, i32, i32
  }
  func.func @transform_15(%arg0: i32) -> (i32, i32) {
    %c0_i32 = arith.constant 0 : i32
    %c0_i32_0 = arith.constant 0 : i32
    %c0_i32_1 = arith.constant 0 : i32
    return %c0_i32, %c0_i32_0 : i32, i32
  }
  func.func @transform_16(%arg0: i32) -> (i32, i32, i32) {
    %c0_i32 = arith.constant 0 : i32
    %c0_i32_0 = arith.constant 0 : i32
    %c0_i32_1 = arith.constant 0 : i32
    return %arg0, %c0_i32, %c0_i32_0 : i32, i32, i32
  }
}

</mosaic_0001>

<llo_original>
// kernel: _forward_jit.1
$region0: #{_forward_jit.1}
  #allocation0 [shape = 'u32[]', space=smem, size = 0x4, offset = 0x4, fixed_abs, tag = 'smem constant byte address 0x4 - core index']
  #allocation1 [shape = 'u32[72,128]{1,0:T(1,128)}', space=vmem, size = 0x9000, scoped, tag = 'internal scratch']
  #allocation2 [shape = 'f32[54,88]{1,0:T(8,128)}', space=vmem, size = 0x7000, scoped, tag = 'scratch operand']
  #allocation3 [shape = 'f32[23,112]{1,0:T(8,128)}', space=vmem, size = 0x3000, scoped, tag = 'scratch operand']
  %s0 = inlined_call_operand.vmem [shape: f32[64,28], index: 0, kind: input, shape index: {}]
  %s1 = inlined_call_operand.vmem [shape: bf16[3,28,208], index: 1, kind: input, shape index: {}]
  %s2 = inlined_call_operand.vmem [shape: f32[1,208], index: 2, kind: input, shape index: {}]
  %s3 = inlined_call_operand.vmem [shape: bf16[3,208,192], index: 3, kind: input, shape index: {}]
  %s4 = inlined_call_operand.vmem [shape: f32[1,192], index: 4, kind: input, shape index: {}]
  %s5 = inlined_call_operand.vmem [shape: bf16[3,192,88], index: 5, kind: input, shape index: {}]
  %s6 = inlined_call_operand.vmem [shape: bf16[3,192,88], index: 6, kind: input, shape index: {}]
  %s7 = inlined_call_operand.vmem [shape: f32[3,88], index: 7, kind: input, shape index: {}]
  %s8 = inlined_call_operand.vmem [shape: bf16[88,176], index: 8, kind: input, shape index: {}]
  %s9 = inlined_call_operand.vmem [shape: f32[1,176], index: 9, kind: input, shape index: {}]
  %s10 = inlined_call_operand.vmem [shape: bf16[3,176,144], index: 10, kind: input, shape index: {}]
  %s11 = inlined_call_operand.vmem [shape: f32[1,144], index: 11, kind: input, shape index: {}]
  %s12 = inlined_call_operand.vmem [shape: bf16[3,144,112], index: 12, kind: input, shape index: {}]
  %s13 = inlined_call_operand.vmem [shape: f32[1,112], index: 13, kind: input, shape index: {}]
  %s14 = inlined_call_operand.vmem [shape: bf16[7,112,10], index: 14, kind: input, shape index: {}]
  %s15 = inlined_call_operand.vmem [shape: f32[1,10], index: 15, kind: input, shape index: {}]
  %s16 = inlined_call_operand.hbm [shape: f32[1,2,10], index: 16, kind: output, shape index: {}]
  %s17 = sld [smem:[#allocation0]]
  $region74: #{_forward_jit.1} parent=0
    _
  %s19 = ssub.s32 1, %s17
  %s20 = scalar_select 0, %s19, %s17
  $region1: #{_forward_jit.1} parent=0
    #allocation4 [shape = 'u8[1024]{0}', space=vmem, size = 0x400, scoped, tag = 'output window, operand 0, single buffered']
    #allocation5 [shape = 's32[1]{0}', space=sflag, size = 0x4, scoped, tag = 'scoped memory for _forward_jit.1']
    %21 = vsyncpa [#allocation5], 0
    // Predicated region
    $region2: #{_forward_jit.1} parent=1 // pred_check
      _
    $region3: #{_forward_jit.1} parent=1 // pred_check_branch
      %23 = sbr.rel (0) target = $region5
    $region4: #{_forward_jit.1} parent=1 // pred_region
      _
    $region5: #{_forward_jit.1} parent=1 // pred_fallthru
      _
    // Predicated region
    $region6: #{_forward_jit.1} parent=1 // pred_check
      _
    $region7: #{_forward_jit.1} parent=1 // pred_check_branch
      %25 = sbr.rel (0) target = $region9
    $region8: #{_forward_jit.1} parent=1 // pred_region
      _
    $region9: #{_forward_jit.1} parent=1 // pred_fallthru
      _
    // Predicated region
    $region10: #{_forward_jit.1} parent=1 // pred_check
      _
    $region11: #{_forward_jit.1} parent=1 // pred_check_branch
      %27 = sbr.rel (0) target = $region13
    $region12: #{_forward_jit.1} parent=1 // pred_region
      _
    $region13: #{_forward_jit.1} parent=1 // pred_fallthru
      _
    // Predicated region
    $region14: #{_forward_jit.1} parent=1 // pred_check
      _
    $region15: #{_forward_jit.1} parent=1 // pred_check_branch
      %29 = sbr.rel (0) target = $region17
    $region16: #{_forward_jit.1} parent=1 // pred_region
      _
    $region17: #{_forward_jit.1} parent=1 // pred_fallthru
      _
    // Predicated region
    $region18: #{_forward_jit.1} parent=1 // pred_check
      _
    $region19: #{_forward_jit.1} parent=1 // pred_check_branch
      %31 = sbr.rel (0) target = $region21
    $region20: #{_forward_jit.1} parent=1 // pred_region
      _
    $region21: #{_forward_jit.1} parent=1 // pred_fallthru
      _
    // Predicated region
    $region22: #{_forward_jit.1} parent=1 // pred_check
      _
    $region23: #{_forward_jit.1} parent=1 // pred_check_branch
      %33 = sbr.rel (0) target = $region25
    $region24: #{_forward_jit.1} parent=1 // pred_region
      _
    $region25: #{_forward_jit.1} parent=1 // pred_fallthru
      _
    // Predicated region
    $region26: #{_forward_jit.1} parent=1 // pred_check
      _
    $region27: #{_forward_jit.1} parent=1 // pred_check_branch
      %35 = sbr.rel (0) target = $region29
    $region28: #{_forward_jit.1} parent=1 // pred_region
      _
    $region29: #{_forward_jit.1} parent=1 // pred_fallthru
      _
    // Predicated region
    $region30: #{_forward_jit.1} parent=1 // pred_check
      _
    $region31: #{_forward_jit.1} parent=1 // pred_check_branch
      %37 = sbr.rel (0) target = $region33
    $region32: #{_forward_jit.1} parent=1 // pred_region
      _
    $region33: #{_forward_jit.1} parent=1 // pred_fallthru
      _
    // Predicated region
    $region34: #{_forward_jit.1} parent=1 // pred_check
      _
    $region35: #{_forward_jit.1} parent=1 // pred_check_branch
      %39 = sbr.rel (0) target = $region37
    $region36: #{_forward_jit.1} parent=1 // pred_region
      _
    $region37: #{_forward_jit.1} parent=1 // pred_fallthru
      _
    // Predicated region
    $region38: #{_forward_jit.1} parent=1 // pred_check
      _
    $region39: #{_forward_jit.1} parent=1 // pred_check_branch
      %41 = sbr.rel (0) target = $region41
    $region40: #{_forward_jit.1} parent=1 // pred_region
      _
    $region41: #{_forward_jit.1} parent=1 // pred_fallthru
      _
    // Predicated region
    $region42: #{_forward_jit.1} parent=1 // pred_check
      _
    $region43: #{_forward_jit.1} parent=1 // pred_check_branch
      %43 = sbr.rel (0) target = $region45
    $region44: #{_forward_jit.1} parent=1 // pred_region
      _
    $region45: #{_forward_jit.1} parent=1 // pred_fallthru
      _
    // Predicated region
    $region46: #{_forward_jit.1} parent=1 // pred_check
      _
    $region47: #{_forward_jit.1} parent=1 // pred_check_branch
      %45 = sbr.rel (0) target = $region49
    $region48: #{_forward_jit.1} parent=1 // pred_region
      _
    $region49: #{_forward_jit.1} parent=1 // pred_fallthru
      _
    // Predicated region
    $region50: #{_forward_jit.1} parent=1 // pred_check
      _
    $region51: #{_forward_jit.1} parent=1 // pred_check_branch
      %47 = sbr.rel (0) target = $region53
    $region52: #{_forward_jit.1} parent=1 // pred_region
      _
    $region53: #{_forward_jit.1} parent=1 // pred_fallthru
      _
    // Predicated region
    $region54: #{_forward_jit.1} parent=1 // pred_check
      _
    $region55: #{_forward_jit.1} parent=1 // pred_check_branch
      %49 = sbr.rel (0) target = $region57
    $region56: #{_forward_jit.1} parent=1 // pred_region
      _
    $region57: #{_forward_jit.1} parent=1 // pred_fallthru
      _
    // Predicated region
    $region58: #{_forward_jit.1} parent=1 // pred_check
      _
    $region59: #{_forward_jit.1} parent=1 // pred_check_branch
      %51 = sbr.rel (0) target = $region61
    $region60: #{_forward_jit.1} parent=1 // pred_region
      _
    $region61: #{_forward_jit.1} parent=1 // pred_fallthru
      _
    // Predicated region
    $region62: #{_forward_jit.1} parent=1 // pred_check
      _
    $region63: #{_forward_jit.1} parent=1 // pred_check_branch
      %53 = sbr.rel (0) target = $region65
    $region64: #{_forward_jit.1} parent=1 // pred_region
      _
    $region65: #{_forward_jit.1} parent=1 // pred_fallthru
      _
    %v55 = vld [vmem:[%s0] sm:$0xff]
    %v56 = vld [vmem:[%s0 + $0x8] sm:$0xff]
    %v57 = vld [vmem:[%s0 + $0x10] sm:$0xff]
    %v58 = vld [vmem:[%s0 + $0x18] sm:$0xff]
    %v59 = vld [vmem:[%s0 + $0x20] sm:$0xff]
    %v60 = vld [vmem:[%s0 + $0x28] sm:$0xff]
    %v61 = vld [vmem:[%s0 + $0x30] sm:$0xff]
    %v62 = vld [vmem:[%s0 + $0x38] sm:$0xff]
    %v63 = vpack.c.bf16 %v55, %v55
    %v64 = vpack.c.bf16 %v56, %v56
    %v65 = vpack.c.bf16 %v57, %v57
    %v66 = vpack.c.bf16 %v58, %v58
    %v67 = vpack.c.bf16 %v59, %v59
    %v68 = vpack.c.bf16 %v60, %v60
    %v69 = vpack.c.bf16 %v61, %v61
    %v70 = vpack.c.bf16 %v62, %v62
    %v71 = vld [vmem:[%s1] sm:$0xff]
    %v72 = vld [vmem:[%s1 + $0x8] sm:$0xff]
    %v73 = vld [vmem:[%s1 + $0x10] sm:$0xff]
    %v74 = vld [vmem:[%s1 + $0x18] sm:$0x33]
    %s75 = scalar_lea.vmem %s1, 32
    %v76 = vld [vmem:[%s75] sm:$0xff]
    %v77 = vld [vmem:[%s75 + $0x8] sm:$0xff]
    %v78 = vld [vmem:[%s75 + $0x10] sm:$0xff]
    %v79 = vld [vmem:[%s75 + $0x18] sm:$0x33]
    %v88 = vunpack.c.l.b16 %v63
    %v89 = vunpack.c.l.b16 %v64
    %v90 = vunpack.c.l.b16 %v65
    %v91 = vunpack.c.l.b16 %v66
    %v92 = vunpack.c.l.b16 %v67
    %v93 = vunpack.c.l.b16 %v68
    %v94 = vunpack.c.l.b16 %v69
    %v95 = vunpack.c.l.b16 %v70
    %v96 = vpack.c.b16 %v89, %v88
    %v97 = vpack.c.b16 %v91, %v90
    %v98 = vpack.c.b16 %v93, %v92
    %v99 = vpack.c.b16 %v95, %v94
    %vm100 = vsmask.f32 7424
    %v102 = vshrl.u32 %v96, 16
    %v104 = vshll.u32 %v96, 16
    %v106 = vrot.slane %v104, 1
    %v107 = vor.u32 %v102, %v106
    %v109 = vshll.u32 %v97, 16
    %v111 = vrot.slane %v109, 1
    %v112 = vsel %vm100, %v107, %v111
    %v113 = vshrl.u32 %v97, 16
    %v115 = vor.u32 %v113, %v111
    %v117 = vshll.u32 %v98, 16
    %v119 = vrot.slane %v117, 1
    %v120 = vsel %vm100, %v115, %v119
    %v121 = vshrl.u32 %v98, 16
    %v123 = vor.u32 %v121, %v119
    %v125 = vshll.u32 %v99, 16
    %v127 = vrot.slane %v125, 1
    %v128 = vsel %vm100, %v123, %v127
    %v129 = vshrl.u32 %v99, 16
    %v131 = vor.u32 %v129, %v127
    %v136 = vunpack.c.l.b16 %v76
    %v137 = vunpack.c.h.b16 %v76
    %v138 = vunpack.c.l.b16 %v77
    %v139 = vunpack.c.h.b16 %v77
    %v140 = vunpack.c.l.b16 %v78
    %v141 = vunpack.c.h.b16 %v78
    %v142 = vunpack.c.l.b16 %v79
    %v143 = vunpack.c.h.b16 %v79
    %v144 = vpack.c.b16 %v138, %v136
    %v145 = vpack.c.b16 %v139, %v137
    %v146 = vpack.c.b16 %v142, %v140
    %v147 = vpack.c.b16 %v143, %v141
    %vm150 = vcmask 228352
    %v152 = vsel %vm150, %v112, 0
    %v155 = vsel %vm150, %v120, 0
    %v158 = vsel %vm150, %v128, 0
    %v161 = vsel %vm150, %v131, 0
    %vm163 = vcmask 1045504
    %v165 = vsel %vm163, %v146, 0
    %v168 = vsel %vm163, %v147, 0
    %170 = vmatpush.bf16.msra.mxu0 0
    %171 = vmatpush.bf16.msra.mxu0 0
    %172 = vmatpush.bf16.msra.mxu0 0
    %173 = vmatpush.bf16.msra.mxu0 0
    %174 = vmatpush.bf16.msra.mxu0 0
    %175 = vmatpush.bf16.msra.mxu0 0
    %176 = vmatpush.bf16.msra.mxu0 %v165
    %177 = vmatpush.bf16.msra.mxu0 %v144
    %178 = vmatmul.bf16.gmra.mxu0 %v152
    %v179 = vpop.f32.mrf.mxu0
    %v180 = vadd.f32 0.0, %v179
    %v181 = vpop.f32.mrf.mxu0
    %v182 = vadd.f32 0.0, %v181
    %183 = vmatmul.bf16.gmra.mxu0 %v155
    %v184 = vpop.f32.mrf.mxu0
    %v185 = vadd.f32 0.0, %v184
    %v186 = vpop.f32.mrf.mxu0
    %v187 = vadd.f32 0.0, %v186
    %188 = vmatmul.bf16.gmra.mxu0 %v158
    %v189 = vpop.f32.mrf.mxu0
    %v190 = vadd.f32 0.0, %v189
    %v191 = vpop.f32.mrf.mxu0
    %v192 = vadd.f32 0.0, %v191
    %193 = vmatmul.bf16.gmra.mxu0 %v161
    %v194 = vpop.f32.mrf.mxu0
    %v195 = vadd.f32 0.0, %v194
    %v196 = vpop.f32.mrf.mxu0
    %v197 = vadd.f32 0.0, %v196
    %198 = vdwg.mxu0
    %199 = vmatpush.bf16.msra.mxu0 0
    %200 = vmatpush.bf16.msra.mxu0 0
    %201 = vmatpush.bf16.msra.mxu0 0
    %202 = vmatpush.bf16.msra.mxu0 0
    %203 = vmatpush.bf16.msra.mxu0 0
    %204 = vmatpush.bf16.msra.mxu0 0
    %205 = vmatpush.bf16.msra.mxu0 %v168
    %206 = vmatpush.bf16.msra.mxu0 %v145
    %207 = vmatmul.bf16.gmra.mxu0 %v152
    %v208 = vpop.f32.mrf.mxu0
    %v209 = vadd.f32 0.0, %v208
    %v210 = vpop.f32.mrf.mxu0
    %v211 = vadd.f32 0.0, %v210
    %212 = vmatmul.bf16.gmra.mxu0 %v155
    %v213 = vpop.f32.mrf.mxu0
    %v214 = vadd.f32 0.0, %v213
    %v215 = vpop.f32.mrf.mxu0
    %v216 = vadd.f32 0.0, %v215
    %217 = vmatmul.bf16.gmra.mxu0 %v158
    %v218 = vpop.f32.mrf.mxu0
    %v219 = vadd.f32 0.0, %v218
    %v220 = vpop.f32.mrf.mxu0
    %v221 = vadd.f32 0.0, %v220
    %222 = vmatmul.bf16.gmra.mxu0 %v161
    %v223 = vpop.f32.mrf.mxu0
    %v224 = vadd.f32 0.0, %v223
    %v225 = vpop.f32.mrf.mxu0
    %v226 = vadd.f32 0.0, %v225
    %227 = vdwg.mxu0
    %v232 = vunpack.c.l.b16 %v71
    %v233 = vunpack.c.h.b16 %v71
    %v234 = vunpack.c.l.b16 %v72
    %v235 = vunpack.c.h.b16 %v72
    %v236 = vunpack.c.l.b16 %v73
    %v237 = vunpack.c.h.b16 %v73
    %v238 = vunpack.c.l.b16 %v74
    %v239 = vunpack.c.h.b16 %v74
    %v240 = vpack.c.b16 %v234, %v232
    %v241 = vpack.c.b16 %v235, %v233
    %v242 = vpack.c.b16 %v238, %v236
    %v243 = vpack.c.b16 %v239, %v237
    %v246 = vsel %vm150, %v96, 0
    %v248 = vsel %vm150, %v97, 0
    %v250 = vsel %vm150, %v98, 0
    %v252 = vsel %vm150, %v99, 0
    %v255 = vsel %vm163, %v242, 0
    %v258 = vsel %vm163, %v243, 0
    %260 = vmatpush.bf16.msra.mxu0 0
    %261 = vmatpush.bf16.msra.mxu0 0
    %262 = vmatpush.bf16.msra.mxu0 0
    %263 = vmatpush.bf16.msra.mxu0 0
    %264 = vmatpush.bf16.msra.mxu0 0
    %265 = vmatpush.bf16.msra.mxu0 0
    %266 = vmatpush.bf16.msra.mxu0 %v255
    %267 = vmatpush.bf16.msra.mxu0 %v240
    %268 = vmatmul.bf16.gmra.mxu0 %v246
    %v269 = vpop.f32.mrf.mxu0
    %v270 = vadd.f32 %v180, %v269
    %v271 = vpop.f32.mrf.mxu0
    %v272 = vadd.f32 %v182, %v271
    %273 = vmatmul.bf16.gmra.mxu0 %v248
    %v274 = vpop.f32.mrf.mxu0
    %v275 = vadd.f32 %v185, %v274
    %v276 = vpop.f32.mrf.mxu0
    %v277 = vadd.f32 %v187, %v276
    %278 = vmatmul.bf16.gmra.mxu0 %v250
    %v279 = vpop.f32.mrf.mxu0
    %v280 = vadd.f32 %v190, %v279
    %v281 = vpop.f32.mrf.mxu0
    %v282 = vadd.f32 %v192, %v281
    %283 = vmatmul.bf16.gmra.mxu0 %v252
    %v284 = vpop.f32.mrf.mxu0
    %v285 = vadd.f32 %v195, %v284
    %v286 = vpop.f32.mrf.mxu0
    %v287 = vadd.f32 %v197, %v286
    %288 = vdwg.mxu0
    %289 = vmatpush.bf16.msra.mxu0 0
    %290 = vmatpush.bf16.msra.mxu0 0
    %291 = vmatpush.bf16.msra.mxu0 0
    %292 = vmatpush.bf16.msra.mxu0 0
    %293 = vmatpush.bf16.msra.mxu0 0
    %294 = vmatpush.bf16.msra.mxu0 0
    %295 = vmatpush.bf16.msra.mxu0 %v258
    %296 = vmatpush.bf16.msra.mxu0 %v241
    %297 = vmatmul.bf16.gmra.mxu0 %v246
    %v298 = vpop.f32.mrf.mxu0
    %v299 = vadd.f32 %v209, %v298
    %v300 = vpop.f32.mrf.mxu0
    %v301 = vadd.f32 %v211, %v300
    %302 = vmatmul.bf16.gmra.mxu0 %v248
    %v303 = vpop.f32.mrf.mxu0
    %v304 = vadd.f32 %v214, %v303
    %v305 = vpop.f32.mrf.mxu0
    %v306 = vadd.f32 %v216, %v305
    %307 = vmatmul.bf16.gmra.mxu0 %v250
    %v308 = vpop.f32.mrf.mxu0
    %v309 = vadd.f32 %v219, %v308
    %v310 = vpop.f32.mrf.mxu0
    %v311 = vadd.f32 %v221, %v310
    %312 = vmatmul.bf16.gmra.mxu0 %v252
    %v313 = vpop.f32.mrf.mxu0
    %v314 = vadd.f32 %v224, %v313
    %v315 = vpop.f32.mrf.mxu0
    %v316 = vadd.f32 %v226, %v315
    %317 = vdwg.mxu0
    %s318 = scalar_lea.vmem %s1, 64
    %v319 = vld [vmem:[%s318] sm:$0xff]
    %v320 = vld [vmem:[%s318 + $0x8] sm:$0xff]
    %v321 = vld [vmem:[%s318 + $0x10] sm:$0xff]
    %v322 = vld [vmem:[%s318 + $0x18] sm:$0x33]
    %vm323 = vcmask 1046528
    %v324 = vrot.slane %v96, 1
    %v325 = vrot.slane %v97, 1
    %v326 = vsel %vm323, %v324, %v325
    %v327 = vrot.slane %v98, 1
    %v328 = vsel %vm323, %v325, %v327
    %v329 = vrot.slane %v99, 1
    %v330 = vsel %vm323, %v327, %v329
    %v335 = vunpack.c.l.b16 %v319
    %v336 = vunpack.c.h.b16 %v319
    %v337 = vunpack.c.l.b16 %v320
    %v338 = vunpack.c.h.b16 %v320
    %v339 = vunpack.c.l.b16 %v321
    %v340 = vunpack.c.h.b16 %v321
    %v341 = vunpack.c.l.b16 %v322
    %v342 = vunpack.c.h.b16 %v322
    %v343 = vpack.c.b16 %v337, %v335
    %v344 = vpack.c.b16 %v338, %v336
    %v345 = vpack.c.b16 %v341, %v339
    %v346 = vpack.c.b16 %v342, %v340
    %v350 = vsel %vm150, %v326, 0
    %v353 = vsel %vm150, %v328, 0
    %v356 = vsel %vm150, %v330, 0
    %v359 = vsel %vm150, %v329, 0
    %v362 = vsel %vm163, %v345, 0
    %v365 = vsel %vm163, %v346, 0
    %367 = vmatpush.bf16.msra.mxu0 0
    %368 = vmatpush.bf16.msra.mxu0 0
    %369 = vmatpush.bf16.msra.mxu0 0
    %370 = vmatpush.bf16.msra.mxu0 0
    %371 = vmatpush.bf16.msra.mxu0 0
    %372 = vmatpush.bf16.msra.mxu0 0
    %373 = vmatpush.bf16.msra.mxu0 %v362
    %374 = vmatpush.bf16.msra.mxu0 %v343
    %375 = vmatmul.bf16.gmra.mxu0 %v350
    %v376 = vpop.f32.mrf.mxu0
    %v377 = vadd.f32 0.0, %v376
    %v378 = vpop.f32.mrf.mxu0
    %v379 = vadd.f32 0.0, %v378
    %380 = vmatmul.bf16.gmra.mxu0 %v353
    %v381 = vpop.f32.mrf.mxu0
    %v382 = vadd.f32 0.0, %v381
    %v383 = vpop.f32.mrf.mxu0
    %v384 = vadd.f32 0.0, %v383
    %385 = vmatmul.bf16.gmra.mxu0 %v356
    %v386 = vpop.f32.mrf.mxu0
    %v387 = vadd.f32 0.0, %v386
    %v388 = vpop.f32.mrf.mxu0
    %v389 = vadd.f32 0.0, %v388
    %390 = vmatmul.bf16.gmra.mxu0 %v359
    %v391 = vpop.f32.mrf.mxu0
    %v392 = vadd.f32 0.0, %v391
    %v393 = vpop.f32.mrf.mxu0
    %v394 = vadd.f32 0.0, %v393
    %395 = vdwg.mxu0
    %396 = vmatpush.bf16.msra.mxu0 0
    %397 = vmatpush.bf16.msra.mxu0 0
    %398 = vmatpush.bf16.msra.mxu0 0
    %399 = vmatpush.bf16.msra.mxu0 0
    %400 = vmatpush.bf16.msra.mxu0 0
    %401 = vmatpush.bf16.msra.mxu0 0
    %402 = vmatpush.bf16.msra.mxu0 %v365
    %403 = vmatpush.bf16.msra.mxu0 %v344
    %404 = vmatmul.bf16.gmra.mxu0 %v350
    %v405 = vpop.f32.mrf.mxu0
    %v406 = vadd.f32 0.0, %v405
    %v407 = vpop.f32.mrf.mxu0
    %v408 = vadd.f32 0.0, %v407
    %409 = vmatmul.bf16.gmra.mxu0 %v353
    %v410 = vpop.f32.mrf.mxu0
    %v411 = vadd.f32 0.0, %v410
    %v412 = vpop.f32.mrf.mxu0
    %v413 = vadd.f32 0.0, %v412
    %414 = vmatmul.bf16.gmra.mxu0 %v356
    %v415 = vpop.f32.mrf.mxu0
    %v416 = vadd.f32 0.0, %v415
    %v417 = vpop.f32.mrf.mxu0
    %v418 = vadd.f32 0.0, %v417
    %419 = vmatmul.bf16.gmra.mxu0 %v359
    %v420 = vpop.f32.mrf.mxu0
    %v421 = vadd.f32 0.0, %v420
    %v422 = vpop.f32.mrf.mxu0
    %v423 = vadd.f32 0.0, %v422
    %424 = vdwg.mxu0
    %v425 = vadd.f32 %v270, %v377
    %v426 = vadd.f32 %v299, %v406
    %v427 = vadd.f32 %v272, %v379
    %v428 = vadd.f32 %v301, %v408
    %v429 = vadd.f32 %v275, %v382
    %v430 = vadd.f32 %v304, %v411
    %v431 = vadd.f32 %v277, %v384
    %v432 = vadd.f32 %v306, %v413
    %v433 = vadd.f32 %v280, %v387
    %v434 = vadd.f32 %v309, %v416
    %v435 = vadd.f32 %v282, %v389
    %v436 = vadd.f32 %v311, %v418
    %v437 = vadd.f32 %v285, %v392
    %v438 = vadd.f32 %v314, %v421
    %v439 = vadd.f32 %v287, %v394
    %v440 = vadd.f32 %v316, %v423
    %v441 = vld [vmem:[%s2] sm:$0x3]
    %v443 = vperm.slane %v441, 0
    %v444 = vperm.slane %v441, 1
    %v447 = vadd.f32 %v425, %v443
    %v448 = vadd.f32 %v426, %v444
    %v449 = vadd.f32 %v427, %v443
    %v450 = vadd.f32 %v428, %v444
    %v451 = vadd.f32 %v429, %v443
    %v452 = vadd.f32 %v430, %v444
    %v453 = vadd.f32 %v431, %v443
    %v454 = vadd.f32 %v432, %v444
    %v455 = vadd.f32 %v433, %v443
    %v456 = vadd.f32 %v434, %v444
    %v457 = vadd.f32 %v435, %v443
    %v458 = vadd.f32 %v436, %v444
    %v459 = vadd.f32 %v437, %v443
    %v460 = vadd.f32 %v438, %v444
    %v461 = vadd.f32 %v439, %v443
    %v462 = vadd.f32 %v440, %v444
    %v463 = vmax.f32 %v447, 0.0
    %v464 = vmax.f32 %v448, 0.0
    %v465 = vmax.f32 %v449, 0.0
    %v466 = vmax.f32 %v450, 0.0
    %v467 = vmax.f32 %v451, 0.0
    %v468 = vmax.f32 %v452, 0.0
    %v469 = vmax.f32 %v453, 0.0
    %v470 = vmax.f32 %v454, 0.0
    %v471 = vmax.f32 %v455, 0.0
    %v472 = vmax.f32 %v456, 0.0
    %v473 = vmax.f32 %v457, 0.0
    %v474 = vmax.f32 %v458, 0.0
    %v475 = vmax.f32 %v459, 0.0
    %v476 = vmax.f32 %v460, 0.0
    %v477 = vmax.f32 %v461, 0.0
    %v478 = vmax.f32 %v462, 0.0
    %v479 = vpack.c.bf16 %v464, %v463
    %v480 = vpack.c.bf16 %v466, %v465
    %v481 = vpack.c.bf16 %v468, %v467
    %v482 = vpack.c.bf16 %v470, %v469
    %v483 = vpack.c.bf16 %v472, %v471
    %v484 = vpack.c.bf16 %v474, %v473
    %v485 = vpack.c.bf16 %v476, %v475
    %v486 = vpack.c.bf16 %v478, %v477
    %v487 = vld [vmem:[%s3] sm:$0xff]
    %v488 = vld [vmem:[%s3 + $0x8] sm:$0xff]
    %v489 = vld [vmem:[%s3 + $0x10] sm:$0xff]
    %v490 = vld [vmem:[%s3 + $0x18] sm:$0xff]
    %v491 = vld [vmem:[%s3 + $0x20] sm:$0xff]
    %v492 = vld [vmem:[%s3 + $0x28] sm:$0xff]
    %v493 = vld [vmem:[%s3 + $0x30] sm:$0xff]
    %v494 = vld [vmem:[%s3 + $0x38] sm:$0xff]
    %v495 = vld [vmem:[%s3 + $0x40] sm:$0xff]
    %v496 = vld [vmem:[%s3 + $0x48] sm:$0xff]
    %v497 = vld [vmem:[%s3 + $0x50] sm:$0xff]
    %v498 = vld [vmem:[%s3 + $0x58] sm:$0xff]
    %v499 = vld [vmem:[%s3 + $0x60] sm:$0xff]
    %v500 = vld [vmem:[%s3 + $0x68] sm:$0xff]
    %v501 = vld [vmem:[%s3 + $0x70] sm:$0xff]
    %v502 = vld [vmem:[%s3 + $0x78] sm:$0xff]
    %v503 = vld [vmem:[%s3 + $0x80] sm:$0xff]
    %v504 = vld [vmem:[%s3 + $0x88] sm:$0xff]
    %v505 = vld [vmem:[%s3 + $0x90] sm:$0xff]
    %v506 = vld [vmem:[%s3 + $0x98] sm:$0xff]
    %v507 = vld [vmem:[%s3 + $0xa0] sm:$0xff]
    %v508 = vld [vmem:[%s3 + $0xa8] sm:$0xff]
    %v509 = vld [vmem:[%s3 + $0xb0] sm:$0xff]
    %v510 = vld [vmem:[%s3 + $0xb8] sm:$0xff]
    %v511 = vld [vmem:[%s3 + $0xc0] sm:$0xff]
    %v512 = vld [vmem:[%s3 + $0xc8] sm:$0xff]
    %s513 = scalar_lea.vmem %s3, 208
    %v514 = vld [vmem:[%s513] sm:$0xff]
    %v515 = vld [vmem:[%s513 + $0x8] sm:$0xff]
    %v516 = vld [vmem:[%s513 + $0x10] sm:$0xff]
    %v517 = vld [vmem:[%s513 + $0x18] sm:$0xff]
    %v518 = vld [vmem:[%s513 + $0x20] sm:$0xff]
    %v519 = vld [vmem:[%s513 + $0x28] sm:$0xff]
    %v520 = vld [vmem:[%s513 + $0x30] sm:$0xff]
    %v521 = vld [vmem:[%s513 + $0x38] sm:$0xff]
    %v522 = vld [vmem:[%s513 + $0x40] sm:$0xff]
    %v523 = vld [vmem:[%s513 + $0x48] sm:$0xff]
    %v524 = vld [vmem:[%s513 + $0x50] sm:$0xff]
    %v525 = vld [vmem:[%s513 + $0x58] sm:$0xff]
    %v526 = vld [vmem:[%s513 + $0x60] sm:$0xff]
    %v527 = vld [vmem:[%s513 + $0x68] sm:$0xff]
    %v528 = vld [vmem:[%s513 + $0x70] sm:$0xff]
    %v529 = vld [vmem:[%s513 + $0x78] sm:$0xff]
    %v530 = vld [vmem:[%s513 + $0x80] sm:$0xff]
    %v531 = vld [vmem:[%s513 + $0x88] sm:$0xff]
    %v532 = vld [vmem:[%s513 + $0x90] sm:$0xff]
    %v533 = vld [vmem:[%s513 + $0x98] sm:$0xff]
    %v534 = vld [vmem:[%s513 + $0xa0] sm:$0xff]
    %v535 = vld [vmem:[%s513 + $0xa8] sm:$0xff]
    %v536 = vld [vmem:[%s513 + $0xb0] sm:$0xff]
    %v537 = vld [vmem:[%s513 + $0xb8] sm:$0xff]
    %v538 = vld [vmem:[%s513 + $0xc0] sm:$0xff]
    %v539 = vld [vmem:[%s513 + $0xc8] sm:$0xff]
    %v548 = vunpack.c.l.b16 %v479
    %v549 = vunpack.c.h.b16 %v479
    %v550 = vunpack.c.l.b16 %v480
    %v551 = vunpack.c.h.b16 %v480
    %v552 = vunpack.c.l.b16 %v481
    %v553 = vunpack.c.h.b16 %v481
    %v554 = vunpack.c.l.b16 %v482
    %v555 = vunpack.c.h.b16 %v482
    %v556 = vunpack.c.l.b16 %v483
    %v557 = vunpack.c.h.b16 %v483
    %v558 = vunpack.c.l.b16 %v484
    %v559 = vunpack.c.h.b16 %v484
    %v560 = vunpack.c.l.b16 %v485
    %v561 = vunpack.c.h.b16 %v485
    %v562 = vunpack.c.l.b16 %v486
    %v563 = vunpack.c.h.b16 %v486
    %v564 = vpack.c.b16 %v550, %v548
    %v565 = vpack.c.b16 %v551, %v549
    %v566 = vpack.c.b16 %v554, %v552
    %v567 = vpack.c.b16 %v555, %v553
    %v568 = vpack.c.b16 %v558, %v556
    %v569 = vpack.c.b16 %v559, %v557
    %v570 = vpack.c.b16 %v562, %v560
    %v571 = vpack.c.b16 %v563, %v561
    %v573 = vshrl.u32 %v564, 16
    %v575 = vshll.u32 %v564, 16
    %v577 = vrot.slane %v575, 1
    %v578 = vor.u32 %v573, %v577
    %v580 = vshll.u32 %v566, 16
    %v582 = vrot.slane %v580, 1
    %v583 = vsel %vm100, %v578, %v582
    %v585 = vshrl.u32 %v565, 16
    %v587 = vshll.u32 %v565, 16
    %v589 = vrot.slane %v587, 1
    %v590 = vor.u32 %v585, %v589
    %v592 = vshll.u32 %v567, 16
    %v594 = vrot.slane %v592, 1
    %v595 = vsel %vm100, %v590, %v594
    %v596 = vshrl.u32 %v566, 16
    %v598 = vor.u32 %v596, %v582
    %v600 = vshll.u32 %v568, 16
    %v602 = vrot.slane %v600, 1
    %v603 = vsel %vm100, %v598, %v602
    %v604 = vshrl.u32 %v567, 16
    %v606 = vor.u32 %v604, %v594
    %v608 = vshll.u32 %v569, 16
    %v610 = vrot.slane %v608, 1
    %v611 = vsel %vm100, %v606, %v610
    %v612 = vshrl.u32 %v568, 16
    %v614 = vor.u32 %v612, %v602
    %v616 = vshll.u32 %v570, 16
    %v618 = vrot.slane %v616, 1
    %v619 = vsel %vm100, %v614, %v618
    %v620 = vshrl.u32 %v569, 16
    %v622 = vor.u32 %v620, %v610
    %v624 = vshll.u32 %v571, 16
    %v626 = vrot.slane %v624, 1
    %v627 = vsel %vm100, %v622, %v626
    %v628 = vshrl.u32 %v570, 16
    %v630 = vor.u32 %v628, %v618
    %v631 = vshrl.u32 %v571, 16
    %v633 = vor.u32 %v631, %v626
    %v664 = vunpack.c.l.b16 %v514
    %v665 = vunpack.c.h.b16 %v514
    %v666 = vunpack.c.l.b16 %v515
    %v667 = vunpack.c.h.b16 %v515
    %v668 = vunpack.c.l.b16 %v516
    %v669 = vunpack.c.h.b16 %v516
    %v670 = vunpack.c.l.b16 %v517
    %v671 = vunpack.c.h.b16 %v517
    %v672 = vunpack.c.l.b16 %v518
    %v673 = vunpack.c.h.b16 %v518
    %v674 = vunpack.c.l.b16 %v519
    %v675 = vunpack.c.h.b16 %v519
    %v676 = vunpack.c.l.b16 %v520
    %v677 = vunpack.c.h.b16 %v520
    %v678 = vunpack.c.l.b16 %v521
    %v679 = vunpack.c.h.b16 %v521
    %v680 = vunpack.c.l.b16 %v522
    %v681 = vunpack.c.h.b16 %v522
    %v682 = vunpack.c.l.b16 %v523
    %v683 = vunpack.c.h.b16 %v523
    %v684 = vunpack.c.l.b16 %v524
    %v685 = vunpack.c.h.b16 %v524
    %v686 = vunpack.c.l.b16 %v525
    %v687 = vunpack.c.h.b16 %v525
    %v688 = vunpack.c.l.b16 %v526
    %v689 = vunpack.c.h.b16 %v526
    %v690 = vunpack.c.l.b16 %v527
    %v691 = vunpack.c.h.b16 %v527
    %v692 = vunpack.c.l.b16 %v528
    %v693 = vunpack.c.h.b16 %v528
    %v694 = vunpack.c.l.b16 %v529
    %v695 = vunpack.c.h.b16 %v529
    %v696 = vunpack.c.l.b16 %v530
    %v697 = vunpack.c.h.b16 %v530
    %v698 = vunpack.c.l.b16 %v531
    %v699 = vunpack.c.h.b16 %v531
    %v700 = vunpack.c.l.b16 %v532
    %v701 = vunpack.c.h.b16 %v532
    %v702 = vunpack.c.l.b16 %v533
    %v703 = vunpack.c.h.b16 %v533
    %v704 = vunpack.c.l.b16 %v534
    %v705 = vunpack.c.h.b16 %v534
    %v706 = vunpack.c.l.b16 %v535
    %v707 = vunpack.c.h.b16 %v535
    %v708 = vunpack.c.l.b16 %v536
    %v709 = vunpack.c.h.b16 %v536
    %v710 = vunpack.c.l.b16 %v537
    %v711 = vunpack.c.h.b16 %v537
    %v712 = vunpack.c.l.b16 %v538
    %v713 = vunpack.c.h.b16 %v538
    %v714 = vunpack.c.l.b16 %v539
    %v715 = vunpack.c.h.b16 %v539
    %v716 = vpack.c.b16 %v666, %v664
    %v717 = vpack.c.b16 %v667, %v665
    %v718 = vpack.c.b16 %v670, %v668
    %v719 = vpack.c.b16 %v671, %v669
    %v720 = vpack.c.b16 %v674, %v672
    %v721 = vpack.c.b16 %v675, %v673
    %v722 = vpack.c.b16 %v678, %v676
    %v723 = vpack.c.b16 %v679, %v677
    %v724 = vpack.c.b16 %v682, %v680
    %v725 = vpack.c.b16 %v683, %v681
    %v726 = vpack.c.b16 %v686, %v684
    %v727 = vpack.c.b16 %v687, %v685
    %v728 = vpack.c.b16 %v690, %v688
    %v729 = vpack.c.b16 %v691, %v689
    %v730 = vpack.c.b16 %v694, %v692
    %v731 = vpack.c.b16 %v695, %v693
    %v732 = vpack.c.b16 %v698, %v696
    %v733 = vpack.c.b16 %v699, %v697
    %v734 = vpack.c.b16 %v702, %v700
    %v735 = vpack.c.b16 %v703, %v701
    %v736 = vpack.c.b16 %v706, %v704
    %v737 = vpack.c.b16 %v707, %v705
    %v738 = vpack.c.b16 %v710, %v708
    %v739 = vpack.c.b16 %v711, %v709
    %v740 = vpack.c.b16 %v714, %v712
    %v741 = vpack.c.b16 %v715, %v713
    %vm768 = vcmask 654336
    %v770 = vsel %vm768, %v595, 0
    %v773 = vsel %vm768, %v611, 0
    %v776 = vsel %vm768, %v627, 0
    %v779 = vsel %vm768, %v633, 0
    %781 = vmatpush.bf16.msra.mxu0 %v730
    %782 = vmatpush.bf16.msra.mxu0 %v728
    %783 = vmatpush.bf16.msra.mxu0 %v726
    %784 = vmatpush.bf16.msra.mxu0 %v724
    %785 = vmatpush.bf16.msra.mxu0 %v722
    %786 = vmatpush.bf16.msra.mxu0 %v720
    %787 = vmatpush.bf16.msra.mxu0 %v718
    %788 = vmatpush.bf16.msra.mxu0 %v716
    %789 = vmatmul.bf16.gmra.mxu0 %v583
    %v790 = vpop.f32.mrf.mxu0
    %v791 = vadd.f32 0.0, %v790
    %v792 = vpop.f32.mrf.mxu0
    %v793 = vadd.f32 0.0, %v792
    %794 = vmatmul.bf16.gmra.mxu0 %v603
    %v795 = vpop.f32.mrf.mxu0
    %v796 = vadd.f32 0.0, %v795
    %v797 = vpop.f32.mrf.mxu0
    %v798 = vadd.f32 0.0, %v797
    %799 = vmatmul.bf16.gmra.mxu0 %v619
    %v800 = vpop.f32.mrf.mxu0
    %v801 = vadd.f32 0.0, %v800
    %v802 = vpop.f32.mrf.mxu0
    %v803 = vadd.f32 0.0, %v802
    %804 = vmatmul.bf16.gmra.mxu0 %v630
    %v805 = vpop.f32.mrf.mxu0
    %v806 = vadd.f32 0.0, %v805
    %v807 = vpop.f32.mrf.mxu0
    %808 = vdwg.mxu0
    %809 = vmatpush.bf16.msra.mxu0 0
    %810 = vmatpush.bf16.msra.mxu0 0
    %811 = vmatpush.bf16.msra.mxu0 0
    %812 = vmatpush.bf16.msra.mxu0 %v740
    %813 = vmatpush.bf16.msra.mxu0 %v738
    %814 = vmatpush.bf16.msra.mxu0 %v736
    %815 = vmatpush.bf16.msra.mxu0 %v734
    %816 = vmatpush.bf16.msra.mxu0 %v732
    %817 = vmatmul.bf16.gmra.mxu0 %v770
    %v818 = vpop.f32.mrf.mxu0
    %v819 = vadd.f32 %v791, %v818
    %v820 = vpop.f32.mrf.mxu0
    %v821 = vadd.f32 %v793, %v820
    %822 = vmatmul.bf16.gmra.mxu0 %v773
    %v823 = vpop.f32.mrf.mxu0
    %v824 = vadd.f32 %v796, %v823
    %v825 = vpop.f32.mrf.mxu0
    %v826 = vadd.f32 %v798, %v825
    %827 = vmatmul.bf16.gmra.mxu0 %v776
    %v828 = vpop.f32.mrf.mxu0
    %v829 = vadd.f32 %v801, %v828
    %v830 = vpop.f32.mrf.mxu0
    %v831 = vadd.f32 %v803, %v830
    %832 = vmatmul.bf16.gmra.mxu0 %v779
    %v833 = vpop.f32.mrf.mxu0
    %v834 = vadd.f32 %v806, %v833
    %v835 = vpop.f32.mrf.mxu0
    %836 = vdwg.mxu0
    %837 = vmatpush.bf16.msra.mxu0 %v731
    %838 = vmatpush.bf16.msra.mxu0 %v729
    %839 = vmatpush.bf16.msra.mxu0 %v727
    %840 = vmatpush.bf16.msra.mxu0 %v725
    %841 = vmatpush.bf16.msra.mxu0 %v723
    %842 = vmatpush.bf16.msra.mxu0 %v721
    %843 = vmatpush.bf16.msra.mxu0 %v719
    %844 = vmatpush.bf16.msra.mxu0 %v717
    %845 = vmatmul.bf16.gmra.mxu0 %v583
    %v846 = vpop.f32.mrf.mxu0
    %v847 = vadd.f32 0.0, %v846
    %v848 = vpop.f32.mrf.mxu0
    %v849 = vadd.f32 0.0, %v848
    %850 = vmatmul.bf16.gmra.mxu0 %v603
    %v851 = vpop.f32.mrf.mxu0
    %v852 = vadd.f32 0.0, %v851
    %v853 = vpop.f32.mrf.mxu0
    %v854 = vadd.f32 0.0, %v853
    %855 = vmatmul.bf16.gmra.mxu0 %v619
    %v856 = vpop.f32.mrf.mxu0
    %v857 = vadd.f32 0.0, %v856
    %v858 = vpop.f32.mrf.mxu0
    %v859 = vadd.f32 0.0, %v858
    %860 = vmatmul.bf16.gmra.mxu0 %v630
    %v861 = vpop.f32.mrf.mxu0
    %v862 = vadd.f32 0.0, %v861
    %v863 = vpop.f32.mrf.mxu0
    %864 = vdwg.mxu0
    %865 = vmatpush.bf16.msra.mxu0 0
    %866 = vmatpush.bf16.msra.mxu0 0
    %867 = vmatpush.bf16.msra.mxu0 0
    %868 = vmatpush.bf16.msra.mxu0 %v741
    %869 = vmatpush.bf16.msra.mxu0 %v739
    %870 = vmatpush.bf16.msra.mxu0 %v737
    %871 = vmatpush.bf16.msra.mxu0 %v735
    %872 = vmatpush.bf16.msra.mxu0 %v733
    %873 = vmatmul.bf16.gmra.mxu0 %v770
    %v874 = vpop.f32.mrf.mxu0
    %v875 = vadd.f32 %v847, %v874
    %v876 = vpop.f32.mrf.mxu0
    %v877 = vadd.f32 %v849, %v876
    %878 = vmatmul.bf16.gmra.mxu0 %v773
    %v879 = vpop.f32.mrf.mxu0
    %v880 = vadd.f32 %v852, %v879
    %v881 = vpop.f32.mrf.mxu0
    %v882 = vadd.f32 %v854, %v881
    %883 = vmatmul.bf16.gmra.mxu0 %v776
    %v884 = vpop.f32.mrf.mxu0
    %v885 = vadd.f32 %v857, %v884
    %v886 = vpop.f32.mrf.mxu0
    %v887 = vadd.f32 %v859, %v886
    %888 = vmatmul.bf16.gmra.mxu0 %v779
    %v889 = vpop.f32.mrf.mxu0
    %v890 = vadd.f32 %v862, %v889
    %v891 = vpop.f32.mrf.mxu0
    %892 = vdwg.mxu0
    %v893 = vpack.c.b16 %v560, %v560
    %v894 = vpack.c.b16 %v561, %v561
    %v925 = vunpack.c.l.b16 %v487
    %v926 = vunpack.c.h.b16 %v487
    %v927 = vunpack.c.l.b16 %v488
    %v928 = vunpack.c.h.b16 %v488
    %v929 = vunpack.c.l.b16 %v489
    %v930 = vunpack.c.h.b16 %v489
    %v931 = vunpack.c.l.b16 %v490
    %v932 = vunpack.c.h.b16 %v490
    %v933 = vunpack.c.l.b16 %v491
    %v934 = vunpack.c.h.b16 %v491
    %v935 = vunpack.c.l.b16 %v492
    %v936 = vunpack.c.h.b16 %v492
    %v937 = vunpack.c.l.b16 %v493
    %v938 = vunpack.c.h.b16 %v493
    %v939 = vunpack.c.l.b16 %v494
    %v940 = vunpack.c.h.b16 %v494
    %v941 = vunpack.c.l.b16 %v495
    %v942 = vunpack.c.h.b16 %v495
    %v943 = vunpack.c.l.b16 %v496
    %v944 = vunpack.c.h.b16 %v496
    %v945 = vunpack.c.l.b16 %v497
    %v946 = vunpack.c.h.b16 %v497
    %v947 = vunpack.c.l.b16 %v498
    %v948 = vunpack.c.h.b16 %v498
    %v949 = vunpack.c.l.b16 %v499
    %v950 = vunpack.c.h.b16 %v499
    %v951 = vunpack.c.l.b16 %v500
    %v952 = vunpack.c.h.b16 %v500
    %v953 = vunpack.c.l.b16 %v501
    %v954 = vunpack.c.h.b16 %v501
    %v955 = vunpack.c.l.b16 %v502
    %v956 = vunpack.c.h.b16 %v502
    %v957 = vunpack.c.l.b16 %v503
    %v958 = vunpack.c.h.b16 %v503
    %v959 = vunpack.c.l.b16 %v504
    %v960 = vunpack.c.h.b16 %v504
    %v961 = vunpack.c.l.b16 %v505
    %v962 = vunpack.c.h.b16 %v505
    %v963 = vunpack.c.l.b16 %v506
    %v964 = vunpack.c.h.b16 %v506
    %v965 = vunpack.c.l.b16 %v507
    %v966 = vunpack.c.h.b16 %v507
    %v967 = vunpack.c.l.b16 %v508
    %v968 = vunpack.c.h.b16 %v508
    %v969 = vunpack.c.l.b16 %v509
    %v970 = vunpack.c.h.b16 %v509
    %v971 = vunpack.c.l.b16 %v510
    %v972 = vunpack.c.h.b16 %v510
    %v973 = vunpack.c.l.b16 %v511
    %v974 = vunpack.c.h.b16 %v511
    %v975 = vunpack.c.l.b16 %v512
    %v976 = vunpack.c.h.b16 %v512
    %v977 = vpack.c.b16 %v927, %v925
    %v978 = vpack.c.b16 %v928, %v926
    %v979 = vpack.c.b16 %v931, %v929
    %v980 = vpack.c.b16 %v932, %v930
    %v981 = vpack.c.b16 %v935, %v933
    %v982 = vpack.c.b16 %v936, %v934
    %v983 = vpack.c.b16 %v939, %v937
    %v984 = vpack.c.b16 %v940, %v938
    %v985 = vpack.c.b16 %v943, %v941
    %v986 = vpack.c.b16 %v944, %v942
    %v987 = vpack.c.b16 %v947, %v945
    %v988 = vpack.c.b16 %v948, %v946
    %v989 = vpack.c.b16 %v951, %v949
    %v990 = vpack.c.b16 %v952, %v950
    %v991 = vpack.c.b16 %v955, %v953
    %v992 = vpack.c.b16 %v956, %v954
    %v993 = vpack.c.b16 %v959, %v957
    %v994 = vpack.c.b16 %v960, %v958
    %v995 = vpack.c.b16 %v963, %v961
    %v996 = vpack.c.b16 %v964, %v962
    %v997 = vpack.c.b16 %v967, %v965
    %v998 = vpack.c.b16 %v968, %v966
    %v999 = vpack.c.b16 %v971, %v969
    %v1000 = vpack.c.b16 %v972, %v970
    %v1001 = vpack.c.b16 %v975, %v973
    %v1002 = vpack.c.b16 %v976, %v974
    %v1029 = vsel %vm768, %v565, 0
    %v1031 = vsel %vm768, %v567, 0
    %v1033 = vsel %vm768, %v569, 0
    %v1036 = vsel %vm768, %v894, 0
    %1038 = vmatpush.bf16.msra.mxu0 %v991
    %1039 = vmatpush.bf16.msra.mxu0 %v989
    %1040 = vmatpush.bf16.msra.mxu0 %v987
    %1041 = vmatpush.bf16.msra.mxu0 %v985
    %1042 = vmatpush.bf16.msra.mxu0 %v983
    %1043 = vmatpush.bf16.msra.mxu0 %v981
    %1044 = vmatpush.bf16.msra.mxu0 %v979
    %1045 = vmatpush.bf16.msra.mxu0 %v977
    %1046 = vmatmul.bf16.gmra.mxu0 %v564
    %v1047 = vpop.f32.mrf.mxu0
    %v1048 = vadd.f32 %v819, %v1047
    %v1049 = vpop.f32.mrf.mxu0
    %v1050 = vadd.f32 %v821, %v1049
    %1051 = vmatmul.bf16.gmra.mxu0 %v566
    %v1052 = vpop.f32.mrf.mxu0
    %v1053 = vadd.f32 %v824, %v1052
    %v1054 = vpop.f32.mrf.mxu0
    %v1055 = vadd.f32 %v826, %v1054
    %1056 = vmatmul.bf16.gmra.mxu0 %v568
    %v1057 = vpop.f32.mrf.mxu0
    %v1058 = vadd.f32 %v829, %v1057
    %v1059 = vpop.f32.mrf.mxu0
    %v1060 = vadd.f32 %v831, %v1059
    %1061 = vmatmul.bf16.gmra.mxu0 %v893
    %v1062 = vpop.f32.mrf.mxu0
    %v1063 = vadd.f32 %v834, %v1062
    %v1064 = vpop.f32.mrf.mxu0
    %1065 = vdwg.mxu0
    %1066 = vmatpush.bf16.msra.mxu0 0
    %1067 = vmatpush.bf16.msra.mxu0 0
    %1068 = vmatpush.bf16.msra.mxu0 0
    %1069 = vmatpush.bf16.msra.mxu0 %v1001
    %1070 = vmatpush.bf16.msra.mxu0 %v999
    %1071 = vmatpush.bf16.msra.mxu0 %v997
    %1072 = vmatpush.bf16.msra.mxu0 %v995
    %1073 = vmatpush.bf16.msra.mxu0 %v993
    %1074 = vmatmul.bf16.gmra.mxu0 %v1029
    %v1075 = vpop.f32.mrf.mxu0
    %v1076 = vadd.f32 %v1048, %v1075
    %v1077 = vpop.f32.mrf.mxu0
    %v1078 = vadd.f32 %v1050, %v1077
    %1079 = vmatmul.bf16.gmra.mxu0 %v1031
    %v1080 = vpop.f32.mrf.mxu0
    %v1081 = vadd.f32 %v1053, %v1080
    %v1082 = vpop.f32.mrf.mxu0
    %v1083 = vadd.f32 %v1055, %v1082
    %1084 = vmatmul.bf16.gmra.mxu0 %v1033
    %v1085 = vpop.f32.mrf.mxu0
    %v1086 = vadd.f32 %v1058, %v1085
    %v1087 = vpop.f32.mrf.mxu0
    %v1088 = vadd.f32 %v1060, %v1087
    %1089 = vmatmul.bf16.gmra.mxu0 %v1036
    %v1090 = vpop.f32.mrf.mxu0
    %v1091 = vadd.f32 %v1063, %v1090
    %v1092 = vpop.f32.mrf.mxu0
    %1093 = vdwg.mxu0
    %1094 = vmatpush.bf16.msra.mxu0 %v992
    %1095 = vmatpush.bf16.msra.mxu0 %v990
    %1096 = vmatpush.bf16.msra.mxu0 %v988
    %1097 = vmatpush.bf16.msra.mxu0 %v986
    %1098 = vmatpush.bf16.msra.mxu0 %v984
    %1099 = vmatpush.bf16.msra.mxu0 %v982
    %1100 = vmatpush.bf16.msra.mxu0 %v980
    %1101 = vmatpush.bf16.msra.mxu0 %v978
    %1102 = vmatmul.bf16.gmra.mxu0 %v564
    %v1103 = vpop.f32.mrf.mxu0
    %v1104 = vadd.f32 %v875, %v1103
    %v1105 = vpop.f32.mrf.mxu0
    %v1106 = vadd.f32 %v877, %v1105
    %1107 = vmatmul.bf16.gmra.mxu0 %v566
    %v1108 = vpop.f32.mrf.mxu0
    %v1109 = vadd.f32 %v880, %v1108
    %v1110 = vpop.f32.mrf.mxu0
    %v1111 = vadd.f32 %v882, %v1110
    %1112 = vmatmul.bf16.gmra.mxu0 %v568
    %v1113 = vpop.f32.mrf.mxu0
    %v1114 = vadd.f32 %v885, %v1113
    %v1115 = vpop.f32.mrf.mxu0
    %v1116 = vadd.f32 %v887, %v1115
    %1117 = vmatmul.bf16.gmra.mxu0 %v893
    %v1118 = vpop.f32.mrf.mxu0
    %v1119 = vadd.f32 %v890, %v1118
    %v1120 = vpop.f32.mrf.mxu0
    %1121 = vdwg.mxu0
    %1122 = vmatpush.bf16.msra.mxu0 0
    %1123 = vmatpush.bf16.msra.mxu0 0
    %1124 = vmatpush.bf16.msra.mxu0 0
    %1125 = vmatpush.bf16.msra.mxu0 %v1002
    %1126 = vmatpush.bf16.msra.mxu0 %v1000
    %1127 = vmatpush.bf16.msra.mxu0 %v998
    %1128 = vmatpush.bf16.msra.mxu0 %v996
    %1129 = vmatpush.bf16.msra.mxu0 %v994
    %1130 = vmatmul.bf16.gmra.mxu0 %v1029
    %v1131 = vpop.f32.mrf.mxu0
    %v1132 = vadd.f32 %v1104, %v1131
    %v1133 = vpop.f32.mrf.mxu0
    %v1134 = vadd.f32 %v1106, %v1133
    %1135 = vmatmul.bf16.gmra.mxu0 %v1031
    %v1136 = vpop.f32.mrf.mxu0
    %v1137 = vadd.f32 %v1109, %v1136
    %v1138 = vpop.f32.mrf.mxu0
    %v1139 = vadd.f32 %v1111, %v1138
    %1140 = vmatmul.bf16.gmra.mxu0 %v1033
    %v1141 = vpop.f32.mrf.mxu0
    %v1142 = vadd.f32 %v1114, %v1141
    %v1143 = vpop.f32.mrf.mxu0
    %v1144 = vadd.f32 %v1116, %v1143
    %1145 = vmatmul.bf16.gmra.mxu0 %v1036
    %v1146 = vpop.f32.mrf.mxu0
    %v1147 = vadd.f32 %v1119, %v1146
    %v1148 = vpop.f32.mrf.mxu0
    %1149 = vdwg.mxu0
    %s1150 = scalar_lea.vmem %s3, 416
    %v1151 = vld [vmem:[%s1150] sm:$0xff]
    %v1152 = vld [vmem:[%s1150 + $0x8] sm:$0xff]
    %v1153 = vld [vmem:[%s1150 + $0x10] sm:$0xff]
    %v1154 = vld [vmem:[%s1150 + $0x18] sm:$0xff]
    %v1155 = vld [vmem:[%s1150 + $0x20] sm:$0xff]
    %v1156 = vld [vmem:[%s1150 + $0x28] sm:$0xff]
    %v1157 = vld [vmem:[%s1150 + $0x30] sm:$0xff]
    %v1158 = vld [vmem:[%s1150 + $0x38] sm:$0xff]
    %v1159 = vld [vmem:[%s1150 + $0x40] sm:$0xff]
    %v1160 = vld [vmem:[%s1150 + $0x48] sm:$0xff]
    %v1161 = vld [vmem:[%s1150 + $0x50] sm:$0xff]
    %v1162 = vld [vmem:[%s1150 + $0x58] sm:$0xff]
    %v1163 = vld [vmem:[%s1150 + $0x60] sm:$0xff]
    %v1164 = vld [vmem:[%s1150 + $0x68] sm:$0xff]
    %v1165 = vld [vmem:[%s1150 + $0x70] sm:$0xff]
    %v1166 = vld [vmem:[%s1150 + $0x78] sm:$0xff]
    %v1167 = vld [vmem:[%s1150 + $0x80] sm:$0xff]
    %v1168 = vld [vmem:[%s1150 + $0x88] sm:$0xff]
    %v1169 = vld [vmem:[%s1150 + $0x90] sm:$0xff]
    %v1170 = vld [vmem:[%s1150 + $0x98] sm:$0xff]
    %v1171 = vld [vmem:[%s1150 + $0xa0] sm:$0xff]
    %v1172 = vld [vmem:[%s1150 + $0xa8] sm:$0xff]
    %v1173 = vld [vmem:[%s1150 + $0xb0] sm:$0xff]
    %v1174 = vld [vmem:[%s1150 + $0xb8] sm:$0xff]
    %v1175 = vld [vmem:[%s1150 + $0xc0] sm:$0xff]
    %v1176 = vld [vmem:[%s1150 + $0xc8] sm:$0xff]
    %v1177 = vrot.slane %v564, 1
    %v1178 = vrot.slane %v566, 1
    %v1179 = vsel %vm323, %v1177, %v1178
    %v1180 = vrot.slane %v565, 1
    %v1181 = vrot.slane %v567, 1
    %v1182 = vsel %vm323, %v1180, %v1181
    %v1183 = vrot.slane %v568, 1
    %v1184 = vsel %vm323, %v1178, %v1183
    %v1185 = vrot.slane %v569, 1
    %v1186 = vsel %vm323, %v1181, %v1185
    %v1187 = vrot.slane %v570, 1
    %v1188 = vsel %vm323, %v1183, %v1187
    %v1189 = vrot.slane %v571, 1
    %v1190 = vsel %vm323, %v1185, %v1189
    %v1221 = vunpack.c.l.b16 %v1151
    %v1222 = vunpack.c.h.b16 %v1151
    %v1223 = vunpack.c.l.b16 %v1152
    %v1224 = vunpack.c.h.b16 %v1152
    %v1225 = vunpack.c.l.b16 %v1153
    %v1226 = vunpack.c.h.b16 %v1153
    %v1227 = vunpack.c.l.b16 %v1154
    %v1228 = vunpack.c.h.b16 %v1154
    %v1229 = vunpack.c.l.b16 %v1155
    %v1230 = vunpack.c.h.b16 %v1155
    %v1231 = vunpack.c.l.b16 %v1156
    %v1232 = vunpack.c.h.b16 %v1156
    %v1233 = vunpack.c.l.b16 %v1157
    %v1234 = vunpack.c.h.b16 %v1157
    %v1235 = vunpack.c.l.b16 %v1158
    %v1236 = vunpack.c.h.b16 %v1158
    %v1237 = vunpack.c.l.b16 %v1159
    %v1238 = vunpack.c.h.b16 %v1159
    %v1239 = vunpack.c.l.b16 %v1160
    %v1240 = vunpack.c.h.b16 %v1160
    %v1241 = vunpack.c.l.b16 %v1161
    %v1242 = vunpack.c.h.b16 %v1161
    %v1243 = vunpack.c.l.b16 %v1162
    %v1244 = vunpack.c.h.b16 %v1162
    %v1245 = vunpack.c.l.b16 %v1163
    %v1246 = vunpack.c.h.b16 %v1163
    %v1247 = vunpack.c.l.b16 %v1164
    %v1248 = vunpack.c.h.b16 %v1164
    %v1249 = vunpack.c.l.b16 %v1165
    %v1250 = vunpack.c.h.b16 %v1165
    %v1251 = vunpack.c.l.b16 %v1166
    %v1252 = vunpack.c.h.b16 %v1166
    %v1253 = vunpack.c.l.b16 %v1167
    %v1254 = vunpack.c.h.b16 %v1167
    %v1255 = vunpack.c.l.b16 %v1168
    %v1256 = vunpack.c.h.b16 %v1168
    %v1257 = vunpack.c.l.b16 %v1169
    %v1258 = vunpack.c.h.b16 %v1169
    %v1259 = vunpack.c.l.b16 %v1170
    %v1260 = vunpack.c.h.b16 %v1170
    %v1261 = vunpack.c.l.b16 %v1171
    %v1262 = vunpack.c.h.b16 %v1171
    %v1263 = vunpack.c.l.b16 %v1172
    %v1264 = vunpack.c.h.b16 %v1172
    %v1265 = vunpack.c.l.b16 %v1173
    %v1266 = vunpack.c.h.b16 %v1173
    %v1267 = vunpack.c.l.b16 %v1174
    %v1268 = vunpack.c.h.b16 %v1174
    %v1269 = vunpack.c.l.b16 %v1175
    %v1270 = vunpack.c.h.b16 %v1175
    %v1271 = vunpack.c.l.b16 %v1176
    %v1272 = vunpack.c.h.b16 %v1176
    %v1273 = vpack.c.b16 %v1223, %v1221
    %v1274 = vpack.c.b16 %v1224, %v1222
    %v1275 = vpack.c.b16 %v1227, %v1225
    %v1276 = vpack.c.b16 %v1228, %v1226
    %v1277 = vpack.c.b16 %v1231, %v1229
    %v1278 = vpack.c.b16 %v1232, %v1230
    %v1279 = vpack.c.b16 %v1235, %v1233
    %v1280 = vpack.c.b16 %v1236, %v1234
    %v1281 = vpack.c.b16 %v1239, %v1237
    %v1282 = vpack.c.b16 %v1240, %v1238
    %v1283 = vpack.c.b16 %v1243, %v1241
    %v1284 = vpack.c.b16 %v1244, %v1242
    %v1285 = vpack.c.b16 %v1247, %v1245
    %v1286 = vpack.c.b16 %v1248, %v1246
    %v1287 = vpack.c.b16 %v1251, %v1249
    %v1288 = vpack.c.b16 %v1252, %v1250
    %v1289 = vpack.c.b16 %v1255, %v1253
    %v1290 = vpack.c.b16 %v1256, %v1254
    %v1291 = vpack.c.b16 %v1259, %v1257
    %v1292 = vpack.c.b16 %v1260, %v1258
    %v1293 = vpack.c.b16 %v1263, %v1261
    %v1294 = vpack.c.b16 %v1264, %v1262
    %v1295 = vpack.c.b16 %v1267, %v1265
    %v1296 = vpack.c.b16 %v1268, %v1266
    %v1297 = vpack.c.b16 %v1271, %v1269
    %v1298 = vpack.c.b16 %v1272, %v1270
    %v1326 = vsel %vm768, %v1182, 0
    %v1329 = vsel %vm768, %v1186, 0
    %v1332 = vsel %vm768, %v1190, 0
    %v1335 = vsel %vm768, %v1189, 0
    %1337 = vmatpush.bf16.msra.mxu0 %v1287
    %1338 = vmatpush.bf16.msra.mxu0 %v1285
    %1339 = vmatpush.bf16.msra.mxu0 %v1283
    %1340 = vmatpush.bf16.msra.mxu0 %v1281
    %1341 = vmatpush.bf16.msra.mxu0 %v1279
    %1342 = vmatpush.bf16.msra.mxu0 %v1277
    %1343 = vmatpush.bf16.msra.mxu0 %v1275
    %1344 = vmatpush.bf16.msra.mxu0 %v1273
    %1345 = vmatmul.bf16.gmra.mxu0 %v1179
    %v1346 = vpop.f32.mrf.mxu0
    %v1347 = vadd.f32 0.0, %v1346
    %v1348 = vpop.f32.mrf.mxu0
    %v1349 = vadd.f32 0.0, %v1348
    %1350 = vmatmul.bf16.gmra.mxu0 %v1184
    %v1351 = vpop.f32.mrf.mxu0
    %v1352 = vadd.f32 0.0, %v1351
    %v1353 = vpop.f32.mrf.mxu0
    %v1354 = vadd.f32 0.0, %v1353
    %1355 = vmatmul.bf16.gmra.mxu0 %v1188
    %v1356 = vpop.f32.mrf.mxu0
    %v1357 = vadd.f32 0.0, %v1356
    %v1358 = vpop.f32.mrf.mxu0
    %v1359 = vadd.f32 0.0, %v1358
    %1360 = vmatmul.bf16.gmra.mxu0 %v1187
    %v1361 = vpop.f32.mrf.mxu0
    %v1362 = vadd.f32 0.0, %v1361
    %v1363 = vpop.f32.mrf.mxu0
    %1364 = vdwg.mxu0
    %1365 = vmatpush.bf16.msra.mxu0 0
    %1366 = vmatpush.bf16.msra.mxu0 0
    %1367 = vmatpush.bf16.msra.mxu0 0
    %1368 = vmatpush.bf16.msra.mxu0 %v1297
    %1369 = vmatpush.bf16.msra.mxu0 %v1295
    %1370 = vmatpush.bf16.msra.mxu0 %v1293
    %1371 = vmatpush.bf16.msra.mxu0 %v1291
    %1372 = vmatpush.bf16.msra.mxu0 %v1289
    %1373 = vmatmul.bf16.gmra.mxu0 %v1326
    %v1374 = vpop.f32.mrf.mxu0
    %v1375 = vadd.f32 %v1347, %v1374
    %v1376 = vpop.f32.mrf.mxu0
    %v1377 = vadd.f32 %v1349, %v1376
    %1378 = vmatmul.bf16.gmra.mxu0 %v1329
    %v1379 = vpop.f32.mrf.mxu0
    %v1380 = vadd.f32 %v1352, %v1379
    %v1381 = vpop.f32.mrf.mxu0
    %v1382 = vadd.f32 %v1354, %v1381
    %1383 = vmatmul.bf16.gmra.mxu0 %v1332
    %v1384 = vpop.f32.mrf.mxu0
    %v1385 = vadd.f32 %v1357, %v1384
    %v1386 = vpop.f32.mrf.mxu0
    %v1387 = vadd.f32 %v1359, %v1386
    %1388 = vmatmul.bf16.gmra.mxu0 %v1335
    %v1389 = vpop.f32.mrf.mxu0
    %v1390 = vadd.f32 %v1362, %v1389
    %v1391 = vpop.f32.mrf.mxu0
    %1392 = vdwg.mxu0
    %1393 = vmatpush.bf16.msra.mxu0 %v1288
    %1394 = vmatpush.bf16.msra.mxu0 %v1286
    %1395 = vmatpush.bf16.msra.mxu0 %v1284
    %1396 = vmatpush.bf16.msra.mxu0 %v1282
    %1397 = vmatpush.bf16.msra.mxu0 %v1280
    %1398 = vmatpush.bf16.msra.mxu0 %v1278
    %1399 = vmatpush.bf16.msra.mxu0 %v1276
    %1400 = vmatpush.bf16.msra.mxu0 %v1274
    %1401 = vmatmul.bf16.gmra.mxu0 %v1179
    %v1402 = vpop.f32.mrf.mxu0
    %v1403 = vadd.f32 0.0, %v1402
    %v1404 = vpop.f32.mrf.mxu0
    %v1405 = vadd.f32 0.0, %v1404
    %1406 = vmatmul.bf16.gmra.mxu0 %v1184
    %v1407 = vpop.f32.mrf.mxu0
    %v1408 = vadd.f32 0.0, %v1407
    %v1409 = vpop.f32.mrf.mxu0
    %v1410 = vadd.f32 0.0, %v1409
    %1411 = vmatmul.bf16.gmra.mxu0 %v1188
    %v1412 = vpop.f32.mrf.mxu0
    %v1413 = vadd.f32 0.0, %v1412
    %v1414 = vpop.f32.mrf.mxu0
    %v1415 = vadd.f32 0.0, %v1414
    %1416 = vmatmul.bf16.gmra.mxu0 %v1187
    %v1417 = vpop.f32.mrf.mxu0
    %v1418 = vadd.f32 0.0, %v1417
    %v1419 = vpop.f32.mrf.mxu0
    %1420 = vdwg.mxu0
    %1421 = vmatpush.bf16.msra.mxu0 0
    %1422 = vmatpush.bf16.msra.mxu0 0
    %1423 = vmatpush.bf16.msra.mxu0 0
    %1424 = vmatpush.bf16.msra.mxu0 %v1298
    %1425 = vmatpush.bf16.msra.mxu0 %v1296
    %1426 = vmatpush.bf16.msra.mxu0 %v1294
    %1427 = vmatpush.bf16.msra.mxu0 %v1292
    %1428 = vmatpush.bf16.msra.mxu0 %v1290
    %1429 = vmatmul.bf16.gmra.mxu0 %v1326
    %v1430 = vpop.f32.mrf.mxu0
    %v1431 = vadd.f32 %v1403, %v1430
    %v1432 = vpop.f32.mrf.mxu0
    %v1433 = vadd.f32 %v1405, %v1432
    %1434 = vmatmul.bf16.gmra.mxu0 %v1329
    %v1435 = vpop.f32.mrf.mxu0
    %v1436 = vadd.f32 %v1408, %v1435
    %v1437 = vpop.f32.mrf.mxu0
    %v1438 = vadd.f32 %v1410, %v1437
    %1439 = vmatmul.bf16.gmra.mxu0 %v1332
    %v1440 = vpop.f32.mrf.mxu0
    %v1441 = vadd.f32 %v1413, %v1440
    %v1442 = vpop.f32.mrf.mxu0
    %v1443 = vadd.f32 %v1415, %v1442
    %1444 = vmatmul.bf16.gmra.mxu0 %v1335
    %v1445 = vpop.f32.mrf.mxu0
    %v1446 = vadd.f32 %v1418, %v1445
    %v1447 = vpop.f32.mrf.mxu0
    %1448 = vdwg.mxu0
    %v1449 = vadd.f32 %v1076, %v1375
    %v1450 = vadd.f32 %v1132, %v1431
    %v1451 = vadd.f32 %v1078, %v1377
    %v1452 = vadd.f32 %v1134, %v1433
    %v1453 = vadd.f32 %v1081, %v1380
    %v1454 = vadd.f32 %v1137, %v1436
    %v1455 = vadd.f32 %v1083, %v1382
    %v1456 = vadd.f32 %v1139, %v1438
    %v1457 = vadd.f32 %v1086, %v1385
    %v1458 = vadd.f32 %v1142, %v1441
    %v1459 = vadd.f32 %v1088, %v1387
    %v1460 = vadd.f32 %v1144, %v1443
    %v1461 = vadd.f32 %v1091, %v1390
    %v1462 = vadd.f32 %v1147, %v1446
    %v1463 = vld [vmem:[%s4] sm:$0x3]
    %v1465 = vperm.slane %v1463, 0
    %v1466 = vperm.slane %v1463, 1
    %v1469 = vadd.f32 %v1449, %v1465
    %v1470 = vadd.f32 %v1450, %v1466
    %v1471 = vadd.f32 %v1451, %v1465
    %v1472 = vadd.f32 %v1452, %v1466
    %v1473 = vadd.f32 %v1453, %v1465
    %v1474 = vadd.f32 %v1454, %v1466
    %v1475 = vadd.f32 %v1455, %v1465
    %v1476 = vadd.f32 %v1456, %v1466
    %v1477 = vadd.f32 %v1457, %v1465
    %v1478 = vadd.f32 %v1458, %v1466
    %v1479 = vadd.f32 %v1459, %v1465
    %v1480 = vadd.f32 %v1460, %v1466
    %v1481 = vadd.f32 %v1461, %v1465
    %v1482 = vadd.f32 %v1462, %v1466
    %v1483 = vmax.f32 %v1469, 0.0
    %v1484 = vmax.f32 %v1470, 0.0
    %v1485 = vmax.f32 %v1471, 0.0
    %v1486 = vmax.f32 %v1472, 0.0
    %v1487 = vmax.f32 %v1473, 0.0
    %v1488 = vmax.f32 %v1474, 0.0
    %v1489 = vmax.f32 %v1475, 0.0
    %v1490 = vmax.f32 %v1476, 0.0
    %v1491 = vmax.f32 %v1477, 0.0
    %v1492 = vmax.f32 %v1478, 0.0
    %v1493 = vmax.f32 %v1479, 0.0
    %v1494 = vmax.f32 %v1480, 0.0
    %v1495 = vmax.f32 %v1481, 0.0
    %v1496 = vmax.f32 %v1482, 0.0
    %v1497 = vpack.c.bf16 %v1484, %v1483
    %v1498 = vpack.c.bf16 %v1486, %v1485
    %v1499 = vpack.c.bf16 %v1488, %v1487
    %v1500 = vpack.c.bf16 %v1490, %v1489
    %v1501 = vpack.c.bf16 %v1492, %v1491
    %v1502 = vpack.c.bf16 %v1494, %v1493
    %v1503 = vpack.c.bf16 %v1496, %v1495
    %v1504 = vld [vmem:[%s7] sm:$0x7]
    %v1505 = vld [vmem:[%s5] sm:$0xf]
    %v1506 = vld [vmem:[%s5 + $0x4] sm:$0xf]
    %v1507 = vld [vmem:[%s5 + $0x8] sm:$0xf]
    %v1508 = vld [vmem:[%s5 + $0xc] sm:$0xf]
    %v1509 = vld [vmem:[%s5 + $0x10] sm:$0xf]
    %v1510 = vld [vmem:[%s5 + $0x14] sm:$0xf]
    %v1511 = vld [vmem:[%s5 + $0x18] sm:$0xf]
    %v1512 = vld [vmem:[%s5 + $0x1c] sm:$0xf]
    %v1513 = vld [vmem:[%s5 + $0x20] sm:$0xf]
    %v1514 = vld [vmem:[%s5 + $0x24] sm:$0xf]
    %v1515 = vld [vmem:[%s5 + $0x28] sm:$0xf]
    %v1516 = vld [vmem:[%s5 + $0x2c] sm:$0xf]
    %v1517 = vld [vmem:[%s5 + $0x30] sm:$0xf]
    %v1518 = vld [vmem:[%s5 + $0x34] sm:$0xf]
    %v1519 = vld [vmem:[%s5 + $0x38] sm:$0xf]
    %v1520 = vld [vmem:[%s5 + $0x3c] sm:$0xf]
    %v1521 = vld [vmem:[%s5 + $0x40] sm:$0xf]
    %v1522 = vld [vmem:[%s5 + $0x44] sm:$0xf]
    %v1523 = vld [vmem:[%s5 + $0x48] sm:$0xf]
    %v1524 = vld [vmem:[%s5 + $0x4c] sm:$0xf]
    %v1525 = vld [vmem:[%s5 + $0x50] sm:$0xf]
    %v1526 = vld [vmem:[%s5 + $0x54] sm:$0xf]
    %v1527 = vld [vmem:[%s5 + $0x58] sm:$0xf]
    %v1528 = vld [vmem:[%s5 + $0x5c] sm:$0xf]
    %s1529 = scalar_lea.vmem %s5, 96
    %v1530 = vld [vmem:[%s1529] sm:$0xf]
    %v1531 = vld [vmem:[%s1529 + $0x4] sm:$0xf]
    %v1532 = vld [vmem:[%s1529 + $0x8] sm:$0xf]
    %v1533 = vld [vmem:[%s1529 + $0xc] sm:$0xf]
    %v1534 = vld [vmem:[%s1529 + $0x10] sm:$0xf]
    %v1535 = vld [vmem:[%s1529 + $0x14] sm:$0xf]
    %v1536 = vld [vmem:[%s1529 + $0x18] sm:$0xf]
    %v1537 = vld [vmem:[%s1529 + $0x1c] sm:$0xf]
    %v1538 = vld [vmem:[%s1529 + $0x20] sm:$0xf]
    %v1539 = vld [vmem:[%s1529 + $0x24] sm:$0xf]
    %v1540 = vld [vmem:[%s1529 + $0x28] sm:$0xf]
    %v1541 = vld [vmem:[%s1529 + $0x2c] sm:$0xf]
    %v1542 = vld [vmem:[%s1529 + $0x30] sm:$0xf]
    %v1543 = vld [vmem:[%s1529 + $0x34] sm:$0xf]
    %v1544 = vld [vmem:[%s1529 + $0x38] sm:$0xf]
    %v1545 = vld [vmem:[%s1529 + $0x3c] sm:$0xf]
    %v1546 = vld [vmem:[%s1529 + $0x40] sm:$0xf]
    %v1547 = vld [vmem:[%s1529 + $0x44] sm:$0xf]
    %v1548 = vld [vmem:[%s1529 + $0x48] sm:$0xf]
    %v1549 = vld [vmem:[%s1529 + $0x4c] sm:$0xf]
    %v1550 = vld [vmem:[%s1529 + $0x50] sm:$0xf]
    %v1551 = vld [vmem:[%s1529 + $0x54] sm:$0xf]
    %v1552 = vld [vmem:[%s1529 + $0x58] sm:$0xf]
    %v1553 = vld [vmem:[%s1529 + $0x5c] sm:$0xf]
    %v1561 = vunpack.c.l.b16 %v1497
    %v1562 = vunpack.c.h.b16 %v1497
    %v1563 = vunpack.c.l.b16 %v1498
    %v1564 = vunpack.c.h.b16 %v1498
    %v1565 = vunpack.c.l.b16 %v1499
    %v1566 = vunpack.c.h.b16 %v1499
    %v1567 = vunpack.c.l.b16 %v1500
    %v1568 = vunpack.c.h.b16 %v1500
    %v1569 = vunpack.c.l.b16 %v1501
    %v1570 = vunpack.c.h.b16 %v1501
    %v1571 = vunpack.c.l.b16 %v1502
    %v1572 = vunpack.c.h.b16 %v1502
    %v1573 = vunpack.c.l.b16 %v1503
    %v1574 = vunpack.c.h.b16 %v1503
    %v1575 = vpack.c.b16 %v1563, %v1561
    %v1576 = vpack.c.b16 %v1564, %v1562
    %v1577 = vpack.c.b16 %v1567, %v1565
    %v1578 = vpack.c.b16 %v1568, %v1566
    %v1579 = vpack.c.b16 %v1571, %v1569
    %v1580 = vpack.c.b16 %v1572, %v1570
    %v1581 = vpack.c.b16 %v1573, %v1573
    %v1582 = vpack.c.b16 %v1574, %v1574
    %v1584 = vshrl.u32 %v1575, 16
    %v1586 = vshll.u32 %v1575, 16
    %v1588 = vrot.slane %v1586, 1
    %v1589 = vor.u32 %v1584, %v1588
    %v1591 = vshll.u32 %v1577, 16
    %v1593 = vrot.slane %v1591, 1
    %v1594 = vsel %vm100, %v1589, %v1593
    %v1596 = vshrl.u32 %v1576, 16
    %v1598 = vshll.u32 %v1576, 16
    %v1600 = vrot.slane %v1598, 1
    %v1601 = vor.u32 %v1596, %v1600
    %v1603 = vshll.u32 %v1578, 16
    %v1605 = vrot.slane %v1603, 1
    %v1606 = vsel %vm100, %v1601, %v1605
    %v1607 = vshrl.u32 %v1577, 16
    %v1609 = vor.u32 %v1607, %v1593
    %v1611 = vshll.u32 %v1579, 16
    %v1613 = vrot.slane %v1611, 1
    %v1614 = vsel %vm100, %v1609, %v1613
    %v1615 = vshrl.u32 %v1578, 16
    %v1617 = vor.u32 %v1615, %v1605
    %v1619 = vshll.u32 %v1580, 16
    %v1621 = vrot.slane %v1619, 1
    %v1622 = vsel %vm100, %v1617, %v1621
    %v1623 = vshrl.u32 %v1579, 16
    %v1625 = vor.u32 %v1623, %v1613
    %v1627 = vshll.u32 %v1581, 16
    %v1629 = vrot.slane %v1627, 1
    %v1630 = vsel %vm100, %v1625, %v1629
    %v1631 = vshrl.u32 %v1580, 16
    %v1633 = vor.u32 %v1631, %v1621
    %v1635 = vshll.u32 %v1582, 16
    %v1637 = vrot.slane %v1635, 1
    %v1638 = vsel %vm100, %v1633, %v1637
    %v1639 = vshrl.u32 %v1581, 16
    %v1641 = vor.u32 %v1639, %v1629
    %v1642 = vshrl.u32 %v1582, 16
    %v1644 = vor.u32 %v1642, %v1637
    %v1673 = vunpack.c.l.b16 %v1530
    %v1674 = vunpack.c.l.b16 %v1531
    %v1675 = vunpack.c.l.b16 %v1532
    %v1676 = vunpack.c.l.b16 %v1533
    %v1677 = vunpack.c.l.b16 %v1534
    %v1678 = vunpack.c.l.b16 %v1535
    %v1679 = vunpack.c.l.b16 %v1536
    %v1680 = vunpack.c.l.b16 %v1537
    %v1681 = vunpack.c.l.b16 %v1538
    %v1682 = vunpack.c.l.b16 %v1539
    %v1683 = vunpack.c.l.b16 %v1540
    %v1684 = vunpack.c.l.b16 %v1541
    %v1685 = vunpack.c.l.b16 %v1542
    %v1686 = vunpack.c.l.b16 %v1543
    %v1687 = vunpack.c.l.b16 %v1544
    %v1688 = vunpack.c.l.b16 %v1545
    %v1689 = vunpack.c.l.b16 %v1546
    %v1690 = vunpack.c.l.b16 %v1547
    %v1691 = vunpack.c.l.b16 %v1548
    %v1692 = vunpack.c.l.b16 %v1549
    %v1693 = vunpack.c.l.b16 %v1550
    %v1694 = vunpack.c.l.b16 %v1551
    %v1695 = vunpack.c.l.b16 %v1552
    %v1696 = vunpack.c.l.b16 %v1553
    %v1697 = vpack.c.b16 %v1674, %v1673
    %v1698 = vpack.c.b16 %v1676, %v1675
    %v1699 = vpack.c.b16 %v1678, %v1677
    %v1700 = vpack.c.b16 %v1680, %v1679
    %v1701 = vpack.c.b16 %v1682, %v1681
    %v1702 = vpack.c.b16 %v1684, %v1683
    %v1703 = vpack.c.b16 %v1686, %v1685
    %v1704 = vpack.c.b16 %v1688, %v1687
    %v1705 = vpack.c.b16 %v1690, %v1689
    %v1706 = vpack.c.b16 %v1692, %v1691
    %v1707 = vpack.c.b16 %v1694, %v1693
    %v1708 = vpack.c.b16 %v1696, %v1695
    %vm1721 = vcmask 523264
    %v1723 = vsel %vm1721, %v1606, 0
    %v1726 = vsel %vm1721, %v1622, 0
    %v1729 = vsel %vm1721, %v1638, 0
    %v1732 = vsel %vm1721, %v1644, 0
    %1734 = vmatpush.bf16.msra.mxu0 %v1704
    %1735 = vmatpush.bf16.msra.mxu0 %v1703
    %1736 = vmatpush.bf16.msra.mxu0 %v1702
    %1737 = vmatpush.bf16.msra.mxu0 %v1701
    %1738 = vmatpush.bf16.msra.mxu0 %v1700
    %1739 = vmatpush.bf16.msra.mxu0 %v1699
    %1740 = vmatpush.bf16.msra.mxu0 %v1698
    %1741 = vmatpush.bf16.msra.mxu0 %v1697
    %1742 = vmatmul.bf16.gmra.mxu0 %v1594
    %v1743 = vpop.f32.mrf.mxu0
    %v1744 = vadd.f32 0.0, %v1743
    %v1745 = vpop.f32.mrf.mxu0
    %v1746 = vadd.f32 0.0, %v1745
    %1747 = vmatmul.bf16.gmra.mxu0 %v1614
    %v1748 = vpop.f32.mrf.mxu0
    %v1749 = vadd.f32 0.0, %v1748
    %v1750 = vpop.f32.mrf.mxu0
    %v1751 = vadd.f32 0.0, %v1750
    %1752 = vmatmul.bf16.gmra.mxu0 %v1630
    %v1753 = vpop.f32.mrf.mxu0
    %v1754 = vadd.f32 0.0, %v1753
    %v1755 = vpop.f32.mrf.mxu0
    %v1756 = vadd.f32 0.0, %v1755
    %1757 = vmatmul.bf16.gmra.mxu0 %v1641
    %v1758 = vpop.f32.mrf.mxu0
    %v1759 = vadd.f32 0.0, %v1758
    %v1760 = vpop.f32.mrf.mxu0
    %1761 = vdwg.mxu0
    %1762 = vmatpush.bf16.msra.mxu0 0
    %1763 = vmatpush.bf16.msra.mxu0 0
    %1764 = vmatpush.bf16.msra.mxu0 0
    %1765 = vmatpush.bf16.msra.mxu0 0
    %1766 = vmatpush.bf16.msra.mxu0 %v1708
    %1767 = vmatpush.bf16.msra.mxu0 %v1707
    %1768 = vmatpush.bf16.msra.mxu0 %v1706
    %1769 = vmatpush.bf16.msra.mxu0 %v1705
    %1770 = vmatmul.bf16.gmra.mxu0 %v1723
    %v1771 = vpop.f32.mrf.mxu0
    %v1772 = vadd.f32 %v1744, %v1771
    %v1773 = vpop.f32.mrf.mxu0
    %v1774 = vadd.f32 %v1746, %v1773
    %1775 = vmatmul.bf16.gmra.mxu0 %v1726
    %v1776 = vpop.f32.mrf.mxu0
    %v1777 = vadd.f32 %v1749, %v1776
    %v1778 = vpop.f32.mrf.mxu0
    %v1779 = vadd.f32 %v1751, %v1778
    %1780 = vmatmul.bf16.gmra.mxu0 %v1729
    %v1781 = vpop.f32.mrf.mxu0
    %v1782 = vadd.f32 %v1754, %v1781
    %v1783 = vpop.f32.mrf.mxu0
    %v1784 = vadd.f32 %v1756, %v1783
    %1785 = vmatmul.bf16.gmra.mxu0 %v1732
    %v1786 = vpop.f32.mrf.mxu0
    %v1787 = vadd.f32 %v1759, %v1786
    %v1788 = vpop.f32.mrf.mxu0
    %1789 = vdwg.mxu0
    %v1818 = vunpack.c.l.b16 %v1505
    %v1819 = vunpack.c.l.b16 %v1506
    %v1820 = vunpack.c.l.b16 %v1507
    %v1821 = vunpack.c.l.b16 %v1508
    %v1822 = vunpack.c.l.b16 %v1509
    %v1823 = vunpack.c.l.b16 %v1510
    %v1824 = vunpack.c.l.b16 %v1511
    %v1825 = vunpack.c.l.b16 %v1512
    %v1826 = vunpack.c.l.b16 %v1513
    %v1827 = vunpack.c.l.b16 %v1514
    %v1828 = vunpack.c.l.b16 %v1515
    %v1829 = vunpack.c.l.b16 %v1516
    %v1830 = vunpack.c.l.b16 %v1517
    %v1831 = vunpack.c.l.b16 %v1518
    %v1832 = vunpack.c.l.b16 %v1519
    %v1833 = vunpack.c.l.b16 %v1520
    %v1834 = vunpack.c.l.b16 %v1521
    %v1835 = vunpack.c.l.b16 %v1522
    %v1836 = vunpack.c.l.b16 %v1523
    %v1837 = vunpack.c.l.b16 %v1524
    %v1838 = vunpack.c.l.b16 %v1525
    %v1839 = vunpack.c.l.b16 %v1526
    %v1840 = vunpack.c.l.b16 %v1527
    %v1841 = vunpack.c.l.b16 %v1528
    %v1842 = vpack.c.b16 %v1819, %v1818
    %v1843 = vpack.c.b16 %v1821, %v1820
    %v1844 = vpack.c.b16 %v1823, %v1822
    %v1845 = vpack.c.b16 %v1825, %v1824
    %v1846 = vpack.c.b16 %v1827, %v1826
    %v1847 = vpack.c.b16 %v1829, %v1828
    %v1848 = vpack.c.b16 %v1831, %v1830
    %v1849 = vpack.c.b16 %v1833, %v1832
    %v1850 = vpack.c.b16 %v1835, %v1834
    %v1851 = vpack.c.b16 %v1837, %v1836
    %v1852 = vpack.c.b16 %v1839, %v1838
    %v1853 = vpack.c.b16 %v1841, %v1840
    %v1866 = vsel %vm1721, %v1576, 0
    %v1868 = vsel %vm1721, %v1578, 0
    %v1870 = vsel %vm1721, %v1580, 0
    %v1872 = vsel %vm1721, %v1582, 0
    %1874 = vmatpush.bf16.msra.mxu0 %v1849
    %1875 = vmatpush.bf16.msra.mxu0 %v1848
    %1876 = vmatpush.bf16.msra.mxu0 %v1847
    %1877 = vmatpush.bf16.msra.mxu0 %v1846
    %1878 = vmatpush.bf16.msra.mxu0 %v1845
    %1879 = vmatpush.bf16.msra.mxu0 %v1844
    %1880 = vmatpush.bf16.msra.mxu0 %v1843
    %1881 = vmatpush.bf16.msra.mxu0 %v1842
    %1882 = vmatmul.bf16.gmra.mxu0 %v1575
    %v1883 = vpop.f32.mrf.mxu0
    %v1884 = vadd.f32 %v1772, %v1883
    %v1885 = vpop.f32.mrf.mxu0
    %v1886 = vadd.f32 %v1774, %v1885
    %1887 = vmatmul.bf16.gmra.mxu0 %v1577
    %v1888 = vpop.f32.mrf.mxu0
    %v1889 = vadd.f32 %v1777, %v1888
    %v1890 = vpop.f32.mrf.mxu0
    %v1891 = vadd.f32 %v1779, %v1890
    %1892 = vmatmul.bf16.gmra.mxu0 %v1579
    %v1893 = vpop.f32.mrf.mxu0
    %v1894 = vadd.f32 %v1782, %v1893
    %v1895 = vpop.f32.mrf.mxu0
    %v1896 = vadd.f32 %v1784, %v1895
    %1897 = vmatmul.bf16.gmra.mxu0 %v1581
    %v1898 = vpop.f32.mrf.mxu0
    %v1899 = vadd.f32 %v1787, %v1898
    %v1900 = vpop.f32.mrf.mxu0
    %1901 = vdwg.mxu0
    %1902 = vmatpush.bf16.msra.mxu0 0
    %1903 = vmatpush.bf16.msra.mxu0 0
    %1904 = vmatpush.bf16.msra.mxu0 0
    %1905 = vmatpush.bf16.msra.mxu0 0
    %1906 = vmatpush.bf16.msra.mxu0 %v1853
    %1907 = vmatpush.bf16.msra.mxu0 %v1852
    %1908 = vmatpush.bf16.msra.mxu0 %v1851
    %1909 = vmatpush.bf16.msra.mxu0 %v1850
    %1910 = vmatmul.bf16.gmra.mxu0 %v1866
    %v1911 = vpop.f32.mrf.mxu0
    %v1912 = vadd.f32 %v1884, %v1911
    %v1913 = vpop.f32.mrf.mxu0
    %v1914 = vadd.f32 %v1886, %v1913
    %1915 = vmatmul.bf16.gmra.mxu0 %v1868
    %v1916 = vpop.f32.mrf.mxu0
    %v1917 = vadd.f32 %v1889, %v1916
    %v1918 = vpop.f32.mrf.mxu0
    %v1919 = vadd.f32 %v1891, %v1918
    %1920 = vmatmul.bf16.gmra.mxu0 %v1870
    %v1921 = vpop.f32.mrf.mxu0
    %v1922 = vadd.f32 %v1894, %v1921
    %v1923 = vpop.f32.mrf.mxu0
    %v1924 = vadd.f32 %v1896, %v1923
    %1925 = vmatmul.bf16.gmra.mxu0 %v1872
    %v1926 = vpop.f32.mrf.mxu0
    %v1927 = vadd.f32 %v1899, %v1926
    %v1928 = vpop.f32.mrf.mxu0
    %1929 = vdwg.mxu0
    %s1930 = scalar_lea.vmem %s5, 192
    %v1931 = vld [vmem:[%s1930] sm:$0xf]
    %v1932 = vld [vmem:[%s1930 + $0x4] sm:$0xf]
    %v1933 = vld [vmem:[%s1930 + $0x8] sm:$0xf]
    %v1934 = vld [vmem:[%s1930 + $0xc] sm:$0xf]
    %v1935 = vld [vmem:[%s1930 + $0x10] sm:$0xf]
    %v1936 = vld [vmem:[%s1930 + $0x14] sm:$0xf]
    %v1937 = vld [vmem:[%s1930 + $0x18] sm:$0xf]
    %v1938 = vld [vmem:[%s1930 + $0x1c] sm:$0xf]
    %v1939 = vld [vmem:[%s1930 + $0x20] sm:$0xf]
    %v1940 = vld [vmem:[%s1930 + $0x24] sm:$0xf]
    %v1941 = vld [vmem:[%s1930 + $0x28] sm:$0xf]
    %v1942 = vld [vmem:[%s1930 + $0x2c] sm:$0xf]
    %v1943 = vld [vmem:[%s1930 + $0x30] sm:$0xf]
    %v1944 = vld [vmem:[%s1930 + $0x34] sm:$0xf]
    %v1945 = vld [vmem:[%s1930 + $0x38] sm:$0xf]
    %v1946 = vld [vmem:[%s1930 + $0x3c] sm:$0xf]
    %v1947 = vld [vmem:[%s1930 + $0x40] sm:$0xf]
    %v1948 = vld [vmem:[%s1930 + $0x44] sm:$0xf]
    %v1949 = vld [vmem:[%s1930 + $0x48] sm:$0xf]
    %v1950 = vld [vmem:[%s1930 + $0x4c] sm:$0xf]
    %v1951 = vld [vmem:[%s1930 + $0x50] sm:$0xf]
    %v1952 = vld [vmem:[%s1930 + $0x54] sm:$0xf]
    %v1953 = vld [vmem:[%s1930 + $0x58] sm:$0xf]
    %v1954 = vld [vmem:[%s1930 + $0x5c] sm:$0xf]
    %v1955 = vrot.slane %v1575, 1
    %v1956 = vrot.slane %v1577, 1
    %v1957 = vsel %vm323, %v1955, %v1956
    %v1958 = vrot.slane %v1576, 1
    %v1959 = vrot.slane %v1578, 1
    %v1960 = vsel %vm323, %v1958, %v1959
    %v1961 = vrot.slane %v1579, 1
    %v1962 = vsel %vm323, %v1956, %v1961
    %v1963 = vrot.slane %v1580, 1
    %v1964 = vsel %vm323, %v1959, %v1963
    %v1965 = vrot.slane %v1581, 1
    %v1966 = vsel %vm323, %v1961, %v1965
    %v1967 = vrot.slane %v1582, 1
    %v1968 = vsel %vm323, %v1963, %v1967
    %v1997 = vunpack.c.l.b16 %v1931
    %v1998 = vunpack.c.l.b16 %v1932
    %v1999 = vunpack.c.l.b16 %v1933
    %v2000 = vunpack.c.l.b16 %v1934
    %v2001 = vunpack.c.l.b16 %v1935
    %v2002 = vunpack.c.l.b16 %v1936
    %v2003 = vunpack.c.l.b16 %v1937
    %v2004 = vunpack.c.l.b16 %v1938
    %v2005 = vunpack.c.l.b16 %v1939
    %v2006 = vunpack.c.l.b16 %v1940
    %v2007 = vunpack.c.l.b16 %v1941
    %v2008 = vunpack.c.l.b16 %v1942
    %v2009 = vunpack.c.l.b16 %v1943
    %v2010 = vunpack.c.l.b16 %v1944
    %v2011 = vunpack.c.l.b16 %v1945
    %v2012 = vunpack.c.l.b16 %v1946
    %v2013 = vunpack.c.l.b16 %v1947
    %v2014 = vunpack.c.l.b16 %v1948
    %v2015 = vunpack.c.l.b16 %v1949
    %v2016 = vunpack.c.l.b16 %v1950
    %v2017 = vunpack.c.l.b16 %v1951
    %v2018 = vunpack.c.l.b16 %v1952
    %v2019 = vunpack.c.l.b16 %v1953
    %v2020 = vunpack.c.l.b16 %v1954
    %v2021 = vpack.c.b16 %v1998, %v1997
    %v2022 = vpack.c.b16 %v2000, %v1999
    %v2023 = vpack.c.b16 %v2002, %v2001
    %v2024 = vpack.c.b16 %v2004, %v2003
    %v2025 = vpack.c.b16 %v2006, %v2005
    %v2026 = vpack.c.b16 %v2008, %v2007
    %v2027 = vpack.c.b16 %v2010, %v2009
    %v2028 = vpack.c.b16 %v2012, %v2011
    %v2029 = vpack.c.b16 %v2014, %v2013
    %v2030 = vpack.c.b16 %v2016, %v2015
    %v2031 = vpack.c.b16 %v2018, %v2017
    %v2032 = vpack.c.b16 %v2020, %v2019
    %v2046 = vsel %vm1721, %v1960, 0
    %v2049 = vsel %vm1721, %v1964, 0
    %v2052 = vsel %vm1721, %v1968, 0
    %v2055 = vsel %vm1721, %v1967, 0
    %2057 = vmatpush.bf16.msra.mxu0 %v2028
    %2058 = vmatpush.bf16.msra.mxu0 %v2027
    %2059 = vmatpush.bf16.msra.mxu0 %v2026
    %2060 = vmatpush.bf16.msra.mxu0 %v2025
    %2061 = vmatpush.bf16.msra.mxu0 %v2024
    %2062 = vmatpush.bf16.msra.mxu0 %v2023
    %2063 = vmatpush.bf16.msra.mxu0 %v2022
    %2064 = vmatpush.bf16.msra.mxu0 %v2021
    %2065 = vmatmul.bf16.gmra.mxu0 %v1957
    %v2066 = vpop.f32.mrf.mxu0
    %v2067 = vadd.f32 0.0, %v2066
    %v2068 = vpop.f32.mrf.mxu0
    %v2069 = vadd.f32 0.0, %v2068
    %2070 = vmatmul.bf16.gmra.mxu0 %v1962
    %v2071 = vpop.f32.mrf.mxu0
    %v2072 = vadd.f32 0.0, %v2071
    %v2073 = vpop.f32.mrf.mxu0
    %v2074 = vadd.f32 0.0, %v2073
    %2075 = vmatmul.bf16.gmra.mxu0 %v1966
    %v2076 = vpop.f32.mrf.mxu0
    %v2077 = vadd.f32 0.0, %v2076
    %v2078 = vpop.f32.mrf.mxu0
    %v2079 = vadd.f32 0.0, %v2078
    %2080 = vmatmul.bf16.gmra.mxu0 %v1965
    %v2081 = vpop.f32.mrf.mxu0
    %v2082 = vadd.f32 0.0, %v2081
    %v2083 = vpop.f32.mrf.mxu0
    %2084 = vdwg.mxu0
    %2085 = vmatpush.bf16.msra.mxu0 0
    %2086 = vmatpush.bf16.msra.mxu0 0
    %2087 = vmatpush.bf16.msra.mxu0 0
    %2088 = vmatpush.bf16.msra.mxu0 0
    %2089 = vmatpush.bf16.msra.mxu0 %v2032
    %2090 = vmatpush.bf16.msra.mxu0 %v2031
    %2091 = vmatpush.bf16.msra.mxu0 %v2030
    %2092 = vmatpush.bf16.msra.mxu0 %v2029
    %2093 = vmatmul.bf16.gmra.mxu0 %v2046
    %v2094 = vpop.f32.mrf.mxu0
    %v2095 = vadd.f32 %v2067, %v2094
    %v2096 = vpop.f32.mrf.mxu0
    %v2097 = vadd.f32 %v2069, %v2096
    %2098 = vmatmul.bf16.gmra.mxu0 %v2049
    %v2099 = vpop.f32.mrf.mxu0
    %v2100 = vadd.f32 %v2072, %v2099
    %v2101 = vpop.f32.mrf.mxu0
    %v2102 = vadd.f32 %v2074, %v2101
    %2103 = vmatmul.bf16.gmra.mxu0 %v2052
    %v2104 = vpop.f32.mrf.mxu0
    %v2105 = vadd.f32 %v2077, %v2104
    %v2106 = vpop.f32.mrf.mxu0
    %v2107 = vadd.f32 %v2079, %v2106
    %2108 = vmatmul.bf16.gmra.mxu0 %v2055
    %v2109 = vpop.f32.mrf.mxu0
    %v2110 = vadd.f32 %v2082, %v2109
    %v2111 = vpop.f32.mrf.mxu0
    %2112 = vdwg.mxu0
    %v2113 = vadd.f32 %v1912, %v2095
    %v2114 = vadd.f32 %v1914, %v2097
    %v2115 = vadd.f32 %v1917, %v2100
    %v2116 = vadd.f32 %v1919, %v2102
    %v2117 = vadd.f32 %v1922, %v2105
    %v2118 = vadd.f32 %v1924, %v2107
    %v2119 = vadd.f32 %v1927, %v2110
    %v2120 = vperm.slane %v1504, 0
    %v2121 = vadd.f32 %v2113, %v2120
    %v2122 = vadd.f32 %v2114, %v2120
    %v2123 = vadd.f32 %v2115, %v2120
    %v2124 = vadd.f32 %v2116, %v2120
    %v2125 = vadd.f32 %v2117, %v2120
    %v2126 = vadd.f32 %v2118, %v2120
    %v2127 = vadd.f32 %v2119, %v2120
    %v2128 = vmax.f32 %v2121, 0.0
    %v2129 = vmax.f32 %v2122, 0.0
    %v2130 = vmax.f32 %v2123, 0.0
    %v2131 = vmax.f32 %v2124, 0.0
    %v2132 = vmax.f32 %v2125, 0.0
    %v2133 = vmax.f32 %v2126, 0.0
    %v2134 = vmax.f32 %v2127, 0.0
    %v2135 = vperm.slane %v1504, 1
    %v2136 = vmul.f32 %v2128, %v2135
    %v2137 = vmul.f32 %v2129, %v2135
    %v2138 = vmul.f32 %v2130, %v2135
    %v2139 = vmul.f32 %v2131, %v2135
    %v2140 = vmul.f32 %v2132, %v2135
    %v2141 = vmul.f32 %v2133, %v2135
    %v2142 = vmul.f32 %v2134, %v2135
    %v2143 = vperm.slane %v1504, 2
    %v2144 = vadd.f32 %v2136, %v2143
    %v2145 = vadd.f32 %v2137, %v2143
    %v2146 = vadd.f32 %v2138, %v2143
    %v2147 = vadd.f32 %v2139, %v2143
    %v2148 = vadd.f32 %v2140, %v2143
    %v2149 = vadd.f32 %v2141, %v2143
    %v2150 = vadd.f32 %v2142, %v2143
    %v2151 = vld [vmem:[%s6] sm:$0xf]
    %v2152 = vld [vmem:[%s6 + $0x4] sm:$0xf]
    %v2153 = vld [vmem:[%s6 + $0x8] sm:$0xf]
    %v2154 = vld [vmem:[%s6 + $0xc] sm:$0xf]
    %v2155 = vld [vmem:[%s6 + $0x10] sm:$0xf]
    %v2156 = vld [vmem:[%s6 + $0x14] sm:$0xf]
    %v2157 = vld [vmem:[%s6 + $0x18] sm:$0xf]
    %v2158 = vld [vmem:[%s6 + $0x1c] sm:$0xf]
    %v2159 = vld [vmem:[%s6 + $0x20] sm:$0xf]
    %v2160 = vld [vmem:[%s6 + $0x24] sm:$0xf]
    %v2161 = vld [vmem:[%s6 + $0x28] sm:$0xf]
    %v2162 = vld [vmem:[%s6 + $0x2c] sm:$0xf]
    %v2163 = vld [vmem:[%s6 + $0x30] sm:$0xf]
    %v2164 = vld [vmem:[%s6 + $0x34] sm:$0xf]
    %v2165 = vld [vmem:[%s6 + $0x38] sm:$0xf]
    %v2166 = vld [vmem:[%s6 + $0x3c] sm:$0xf]
    %v2167 = vld [vmem:[%s6 + $0x40] sm:$0xf]
    %v2168 = vld [vmem:[%s6 + $0x44] sm:$0xf]
    %v2169 = vld [vmem:[%s6 + $0x48] sm:$0xf]
    %v2170 = vld [vmem:[%s6 + $0x4c] sm:$0xf]
    %v2171 = vld [vmem:[%s6 + $0x50] sm:$0xf]
    %v2172 = vld [vmem:[%s6 + $0x54] sm:$0xf]
    %v2173 = vld [vmem:[%s6 + $0x58] sm:$0xf]
    %v2174 = vld [vmem:[%s6 + $0x5c] sm:$0xf]
    %s2175 = scalar_lea.vmem %s6, 96
    %v2176 = vld [vmem:[%s2175] sm:$0xf]
    %v2177 = vld [vmem:[%s2175 + $0x4] sm:$0xf]
    %v2178 = vld [vmem:[%s2175 + $0x8] sm:$0xf]
    %v2179 = vld [vmem:[%s2175 + $0xc] sm:$0xf]
    %v2180 = vld [vmem:[%s2175 + $0x10] sm:$0xf]
    %v2181 = vld [vmem:[%s2175 + $0x14] sm:$0xf]
    %v2182 = vld [vmem:[%s2175 + $0x18] sm:$0xf]
    %v2183 = vld [vmem:[%s2175 + $0x1c] sm:$0xf]
    %v2184 = vld [vmem:[%s2175 + $0x20] sm:$0xf]
    %v2185 = vld [vmem:[%s2175 + $0x24] sm:$0xf]
    %v2186 = vld [vmem:[%s2175 + $0x28] sm:$0xf]
    %v2187 = vld [vmem:[%s2175 + $0x2c] sm:$0xf]
    %v2188 = vld [vmem:[%s2175 + $0x30] sm:$0xf]
    %v2189 = vld [vmem:[%s2175 + $0x34] sm:$0xf]
    %v2190 = vld [vmem:[%s2175 + $0x38] sm:$0xf]
    %v2191 = vld [vmem:[%s2175 + $0x3c] sm:$0xf]
    %v2192 = vld [vmem:[%s2175 + $0x40] sm:$0xf]
    %v2193 = vld [vmem:[%s2175 + $0x44] sm:$0xf]
    %v2194 = vld [vmem:[%s2175 + $0x48] sm:$0xf]
    %v2195 = vld [vmem:[%s2175 + $0x4c] sm:$0xf]
    %v2196 = vld [vmem:[%s2175 + $0x50] sm:$0xf]
    %v2197 = vld [vmem:[%s2175 + $0x54] sm:$0xf]
    %v2198 = vld [vmem:[%s2175 + $0x58] sm:$0xf]
    %v2199 = vld [vmem:[%s2175 + $0x5c] sm:$0xf]
    %v2224 = vunpack.c.l.b16 %v2176
    %v2225 = vunpack.c.l.b16 %v2177
    %v2226 = vunpack.c.l.b16 %v2178
    %v2227 = vunpack.c.l.b16 %v2179
    %v2228 = vunpack.c.l.b16 %v2180
    %v2229 = vunpack.c.l.b16 %v2181
    %v2230 = vunpack.c.l.b16 %v2182
    %v2231 = vunpack.c.l.b16 %v2183
    %v2232 = vunpack.c.l.b16 %v2184
    %v2233 = vunpack.c.l.b16 %v2185
    %v2234 = vunpack.c.l.b16 %v2186
    %v2235 = vunpack.c.l.b16 %v2187
    %v2236 = vunpack.c.l.b16 %v2188
    %v2237 = vunpack.c.l.b16 %v2189
    %v2238 = vunpack.c.l.b16 %v2190
    %v2239 = vunpack.c.l.b16 %v2191
    %v2240 = vunpack.c.l.b16 %v2192
    %v2241 = vunpack.c.l.b16 %v2193
    %v2242 = vunpack.c.l.b16 %v2194
    %v2243 = vunpack.c.l.b16 %v2195
    %v2244 = vunpack.c.l.b16 %v2196
    %v2245 = vunpack.c.l.b16 %v2197
    %v2246 = vunpack.c.l.b16 %v2198
    %v2247 = vunpack.c.l.b16 %v2199
    %v2248 = vpack.c.b16 %v2225, %v2224
    %v2249 = vpack.c.b16 %v2227, %v2226
    %v2250 = vpack.c.b16 %v2229, %v2228
    %v2251 = vpack.c.b16 %v2231, %v2230
    %v2252 = vpack.c.b16 %v2233, %v2232
    %v2253 = vpack.c.b16 %v2235, %v2234
    %v2254 = vpack.c.b16 %v2237, %v2236
    %v2255 = vpack.c.b16 %v2239, %v2238
    %v2256 = vpack.c.b16 %v2241, %v2240
    %v2257 = vpack.c.b16 %v2243, %v2242
    %v2258 = vpack.c.b16 %v2245, %v2244
    %v2259 = vpack.c.b16 %v2247, %v2246
    %2272 = vmatpush.bf16.msra.mxu0 %v2255
    %2273 = vmatpush.bf16.msra.mxu0 %v2254
    %2274 = vmatpush.bf16.msra.mxu0 %v2253
    %2275 = vmatpush.bf16.msra.mxu0 %v2252
    %2276 = vmatpush.bf16.msra.mxu0 %v2251
    %2277 = vmatpush.bf16.msra.mxu0 %v2250
    %2278 = vmatpush.bf16.msra.mxu0 %v2249
    %2279 = vmatpush.bf16.msra.mxu0 %v2248
    %2280 = vmatmul.bf16.gmra.mxu0 %v1594
    %v2281 = vpop.f32.mrf.mxu0
    %v2282 = vadd.f32 0.0, %v2281
    %v2283 = vpop.f32.mrf.mxu0
    %v2284 = vadd.f32 0.0, %v2283
    %2285 = vmatmul.bf16.gmra.mxu0 %v1614
    %v2286 = vpop.f32.mrf.mxu0
    %v2287 = vadd.f32 0.0, %v2286
    %v2288 = vpop.f32.mrf.mxu0
    %v2289 = vadd.f32 0.0, %v2288
    %2290 = vmatmul.bf16.gmra.mxu0 %v1630
    %v2291 = vpop.f32.mrf.mxu0
    %v2292 = vadd.f32 0.0, %v2291
    %v2293 = vpop.f32.mrf.mxu0
    %v2294 = vadd.f32 0.0, %v2293
    %2295 = vmatmul.bf16.gmra.mxu0 %v1641
    %v2296 = vpop.f32.mrf.mxu0
    %v2297 = vadd.f32 0.0, %v2296
    %v2298 = vpop.f32.mrf.mxu0
    %2299 = vdwg.mxu0
    %2300 = vmatpush.bf16.msra.mxu0 0
    %2301 = vmatpush.bf16.msra.mxu0 0
    %2302 = vmatpush.bf16.msra.mxu0 0
    %2303 = vmatpush.bf16.msra.mxu0 0
    %2304 = vmatpush.bf16.msra.mxu0 %v2259
    %2305 = vmatpush.bf16.msra.mxu0 %v2258
    %2306 = vmatpush.bf16.msra.mxu0 %v2257
    %2307 = vmatpush.bf16.msra.mxu0 %v2256
    %2308 = vmatmul.bf16.gmra.mxu0 %v1723
    %v2309 = vpop.f32.mrf.mxu0
    %v2310 = vadd.f32 %v2282, %v2309
    %v2311 = vpop.f32.mrf.mxu0
    %v2312 = vadd.f32 %v2284, %v2311
    %2313 = vmatmul.bf16.gmra.mxu0 %v1726
    %v2314 = vpop.f32.mrf.mxu0
    %v2315 = vadd.f32 %v2287, %v2314
    %v2316 = vpop.f32.mrf.mxu0
    %v2317 = vadd.f32 %v2289, %v2316
    %2318 = vmatmul.bf16.gmra.mxu0 %v1729
    %v2319 = vpop.f32.mrf.mxu0
    %v2320 = vadd.f32 %v2292, %v2319
    %v2321 = vpop.f32.mrf.mxu0
    %v2322 = vadd.f32 %v2294, %v2321
    %2323 = vmatmul.bf16.gmra.mxu0 %v1732
    %v2324 = vpop.f32.mrf.mxu0
    %v2325 = vadd.f32 %v2297, %v2324
    %v2326 = vpop.f32.mrf.mxu0
    %2327 = vdwg.mxu0
    %v2352 = vunpack.c.l.b16 %v2151
    %v2353 = vunpack.c.l.b16 %v2152
    %v2354 = vunpack.c.l.b16 %v2153
    %v2355 = vunpack.c.l.b16 %v2154
    %v2356 = vunpack.c.l.b16 %v2155
    %v2357 = vunpack.c.l.b16 %v2156
    %v2358 = vunpack.c.l.b16 %v2157
    %v2359 = vunpack.c.l.b16 %v2158
    %v2360 = vunpack.c.l.b16 %v2159
    %v2361 = vunpack.c.l.b16 %v2160
    %v2362 = vunpack.c.l.b16 %v2161
    %v2363 = vunpack.c.l.b16 %v2162
    %v2364 = vunpack.c.l.b16 %v2163
    %v2365 = vunpack.c.l.b16 %v2164
    %v2366 = vunpack.c.l.b16 %v2165
    %v2367 = vunpack.c.l.b16 %v2166
    %v2368 = vunpack.c.l.b16 %v2167
    %v2369 = vunpack.c.l.b16 %v2168
    %v2370 = vunpack.c.l.b16 %v2169
    %v2371 = vunpack.c.l.b16 %v2170
    %v2372 = vunpack.c.l.b16 %v2171
    %v2373 = vunpack.c.l.b16 %v2172
    %v2374 = vunpack.c.l.b16 %v2173
    %v2375 = vunpack.c.l.b16 %v2174
    %v2376 = vpack.c.b16 %v2353, %v2352
    %v2377 = vpack.c.b16 %v2355, %v2354
    %v2378 = vpack.c.b16 %v2357, %v2356
    %v2379 = vpack.c.b16 %v2359, %v2358
    %v2380 = vpack.c.b16 %v2361, %v2360
    %v2381 = vpack.c.b16 %v2363, %v2362
    %v2382 = vpack.c.b16 %v2365, %v2364
    %v2383 = vpack.c.b16 %v2367, %v2366
    %v2384 = vpack.c.b16 %v2369, %v2368
    %v2385 = vpack.c.b16 %v2371, %v2370
    %v2386 = vpack.c.b16 %v2373, %v2372
    %v2387 = vpack.c.b16 %v2375, %v2374
    %2400 = vmatpush.bf16.msra.mxu0 %v2383
    %2401 = vmatpush.bf16.msra.mxu0 %v2382
    %2402 = vmatpush.bf16.msra.mxu0 %v2381
    %2403 = vmatpush.bf16.msra.mxu0 %v2380
    %2404 = vmatpush.bf16.msra.mxu0 %v2379
    %2405 = vmatpush.bf16.msra.mxu0 %v2378
    %2406 = vmatpush.bf16.msra.mxu0 %v2377
    %2407 = vmatpush.bf16.msra.mxu0 %v2376
    %2408 = vmatmul.bf16.gmra.mxu0 %v1575
    %v2409 = vpop.f32.mrf.mxu0
    %v2410 = vadd.f32 %v2310, %v2409
    %v2411 = vpop.f32.mrf.mxu0
    %v2412 = vadd.f32 %v2312, %v2411
    %2413 = vmatmul.bf16.gmra.mxu0 %v1577
    %v2414 = vpop.f32.mrf.mxu0
    %v2415 = vadd.f32 %v2315, %v2414
    %v2416 = vpop.f32.mrf.mxu0
    %v2417 = vadd.f32 %v2317, %v2416
    %2418 = vmatmul.bf16.gmra.mxu0 %v1579
    %v2419 = vpop.f32.mrf.mxu0
    %v2420 = vadd.f32 %v2320, %v2419
    %v2421 = vpop.f32.mrf.mxu0
    %v2422 = vadd.f32 %v2322, %v2421
    %2423 = vmatmul.bf16.gmra.mxu0 %v1581
    %v2424 = vpop.f32.mrf.mxu0
    %v2425 = vadd.f32 %v2325, %v2424
    %v2426 = vpop.f32.mrf.mxu0
    %2427 = vdwg.mxu0
    %2428 = vmatpush.bf16.msra.mxu0 0
    %2429 = vmatpush.bf16.msra.mxu0 0
    %2430 = vmatpush.bf16.msra.mxu0 0
    %2431 = vmatpush.bf16.msra.mxu0 0
    %2432 = vmatpush.bf16.msra.mxu0 %v2387
    %2433 = vmatpush.bf16.msra.mxu0 %v2386
    %2434 = vmatpush.bf16.msra.mxu0 %v2385
    %2435 = vmatpush.bf16.msra.mxu0 %v2384
    %2436 = vmatmul.bf16.gmra.mxu0 %v1866
    %v2437 = vpop.f32.mrf.mxu0
    %v2438 = vadd.f32 %v2410, %v2437
    %v2439 = vpop.f32.mrf.mxu0
    %v2440 = vadd.f32 %v2412, %v2439
    %2441 = vmatmul.bf16.gmra.mxu0 %v1868
    %v2442 = vpop.f32.mrf.mxu0
    %v2443 = vadd.f32 %v2415, %v2442
    %v2444 = vpop.f32.mrf.mxu0
    %v2445 = vadd.f32 %v2417, %v2444
    %2446 = vmatmul.bf16.gmra.mxu0 %v1870
    %v2447 = vpop.f32.mrf.mxu0
    %v2448 = vadd.f32 %v2420, %v2447
    %v2449 = vpop.f32.mrf.mxu0
    %v2450 = vadd.f32 %v2422, %v2449
    %2451 = vmatmul.bf16.gmra.mxu0 %v1872
    %v2452 = vpop.f32.mrf.mxu0
    %v2453 = vadd.f32 %v2425, %v2452
    %v2454 = vpop.f32.mrf.mxu0
    %2455 = vdwg.mxu0
    %s2456 = scalar_lea.vmem %s6, 192
    %v2457 = vld [vmem:[%s2456] sm:$0xf]
    %v2458 = vld [vmem:[%s2456 + $0x4] sm:$0xf]
    %v2459 = vld [vmem:[%s2456 + $0x8] sm:$0xf]
    %v2460 = vld [vmem:[%s2456 + $0xc] sm:$0xf]
    %v2461 = vld [vmem:[%s2456 + $0x10] sm:$0xf]
    %v2462 = vld [vmem:[%s2456 + $0x14] sm:$0xf]
    %v2463 = vld [vmem:[%s2456 + $0x18] sm:$0xf]
    %v2464 = vld [vmem:[%s2456 + $0x1c] sm:$0xf]
    %v2465 = vld [vmem:[%s2456 + $0x20] sm:$0xf]
    %v2466 = vld [vmem:[%s2456 + $0x24] sm:$0xf]
    %v2467 = vld [vmem:[%s2456 + $0x28] sm:$0xf]
    %v2468 = vld [vmem:[%s2456 + $0x2c] sm:$0xf]
    %v2469 = vld [vmem:[%s2456 + $0x30] sm:$0xf]
    %v2470 = vld [vmem:[%s2456 + $0x34] sm:$0xf]
    %v2471 = vld [vmem:[%s2456 + $0x38] sm:$0xf]
    %v2472 = vld [vmem:[%s2456 + $0x3c] sm:$0xf]
    %v2473 = vld [vmem:[%s2456 + $0x40] sm:$0xf]
    %v2474 = vld [vmem:[%s2456 + $0x44] sm:$0xf]
    %v2475 = vld [vmem:[%s2456 + $0x48] sm:$0xf]
    %v2476 = vld [vmem:[%s2456 + $0x4c] sm:$0xf]
    %v2477 = vld [vmem:[%s2456 + $0x50] sm:$0xf]
    %v2478 = vld [vmem:[%s2456 + $0x54] sm:$0xf]
    %v2479 = vld [vmem:[%s2456 + $0x58] sm:$0xf]
    %v2480 = vld [vmem:[%s2456 + $0x5c] sm:$0xf]
    %v2505 = vunpack.c.l.b16 %v2457
    %v2506 = vunpack.c.l.b16 %v2458
    %v2507 = vunpack.c.l.b16 %v2459
    %v2508 = vunpack.c.l.b16 %v2460
    %v2509 = vunpack.c.l.b16 %v2461
    %v2510 = vunpack.c.l.b16 %v2462
    %v2511 = vunpack.c.l.b16 %v2463
    %v2512 = vunpack.c.l.b16 %v2464
    %v2513 = vunpack.c.l.b16 %v2465
    %v2514 = vunpack.c.l.b16 %v2466
    %v2515 = vunpack.c.l.b16 %v2467
    %v2516 = vunpack.c.l.b16 %v2468
    %v2517 = vunpack.c.l.b16 %v2469
    %v2518 = vunpack.c.l.b16 %v2470
    %v2519 = vunpack.c.l.b16 %v2471
    %v2520 = vunpack.c.l.b16 %v2472
    %v2521 = vunpack.c.l.b16 %v2473
    %v2522 = vunpack.c.l.b16 %v2474
    %v2523 = vunpack.c.l.b16 %v2475
    %v2524 = vunpack.c.l.b16 %v2476
    %v2525 = vunpack.c.l.b16 %v2477
    %v2526 = vunpack.c.l.b16 %v2478
    %v2527 = vunpack.c.l.b16 %v2479
    %v2528 = vunpack.c.l.b16 %v2480
    %v2529 = vpack.c.b16 %v2506, %v2505
    %v2530 = vpack.c.b16 %v2508, %v2507
    %v2531 = vpack.c.b16 %v2510, %v2509
    %v2532 = vpack.c.b16 %v2512, %v2511
    %v2533 = vpack.c.b16 %v2514, %v2513
    %v2534 = vpack.c.b16 %v2516, %v2515
    %v2535 = vpack.c.b16 %v2518, %v2517
    %v2536 = vpack.c.b16 %v2520, %v2519
    %v2537 = vpack.c.b16 %v2522, %v2521
    %v2538 = vpack.c.b16 %v2524, %v2523
    %v2539 = vpack.c.b16 %v2526, %v2525
    %v2540 = vpack.c.b16 %v2528, %v2527
    %2553 = vmatpush.bf16.msra.mxu0 %v2536
    %2554 = vmatpush.bf16.msra.mxu0 %v2535
    %2555 = vmatpush.bf16.msra.mxu0 %v2534
    %2556 = vmatpush.bf16.msra.mxu0 %v2533
    %2557 = vmatpush.bf16.msra.mxu0 %v2532
    %2558 = vmatpush.bf16.msra.mxu0 %v2531
    %2559 = vmatpush.bf16.msra.mxu0 %v2530
    %2560 = vmatpush.bf16.msra.mxu0 %v2529
    %2561 = vmatmul.bf16.gmra.mxu0 %v1957
    %v2562 = vpop.f32.mrf.mxu0
    %v2563 = vadd.f32 0.0, %v2562
    %v2564 = vpop.f32.mrf.mxu0
    %v2565 = vadd.f32 0.0, %v2564
    %2566 = vmatmul.bf16.gmra.mxu0 %v1962
    %v2567 = vpop.f32.mrf.mxu0
    %v2568 = vadd.f32 0.0, %v2567
    %v2569 = vpop.f32.mrf.mxu0
    %v2570 = vadd.f32 0.0, %v2569
    %2571 = vmatmul.bf16.gmra.mxu0 %v1966
    %v2572 = vpop.f32.mrf.mxu0
    %v2573 = vadd.f32 0.0, %v2572
    %v2574 = vpop.f32.mrf.mxu0
    %v2575 = vadd.f32 0.0, %v2574
    %2576 = vmatmul.bf16.gmra.mxu0 %v1965
    %v2577 = vpop.f32.mrf.mxu0
    %v2578 = vadd.f32 0.0, %v2577
    %v2579 = vpop.f32.mrf.mxu0
    %2580 = vdwg.mxu0
    %2581 = vmatpush.bf16.msra.mxu0 0
    %2582 = vmatpush.bf16.msra.mxu0 0
    %2583 = vmatpush.bf16.msra.mxu0 0
    %2584 = vmatpush.bf16.msra.mxu0 0
    %2585 = vmatpush.bf16.msra.mxu0 %v2540
    %2586 = vmatpush.bf16.msra.mxu0 %v2539
    %2587 = vmatpush.bf16.msra.mxu0 %v2538
    %2588 = vmatpush.bf16.msra.mxu0 %v2537
    %2589 = vmatmul.bf16.gmra.mxu0 %v2046
    %v2590 = vpop.f32.mrf.mxu0
    %v2591 = vadd.f32 %v2563, %v2590
    %v2592 = vpop.f32.mrf.mxu0
    %v2593 = vadd.f32 %v2565, %v2592
    %2594 = vmatmul.bf16.gmra.mxu0 %v2049
    %v2595 = vpop.f32.mrf.mxu0
    %v2596 = vadd.f32 %v2568, %v2595
    %v2597 = vpop.f32.mrf.mxu0
    %v2598 = vadd.f32 %v2570, %v2597
    %2599 = vmatmul.bf16.gmra.mxu0 %v2052
    %v2600 = vpop.f32.mrf.mxu0
    %v2601 = vadd.f32 %v2573, %v2600
    %v2602 = vpop.f32.mrf.mxu0
    %v2603 = vadd.f32 %v2575, %v2602
    %2604 = vmatmul.bf16.gmra.mxu0 %v2055
    %v2605 = vpop.f32.mrf.mxu0
    %v2606 = vadd.f32 %v2578, %v2605
    %v2607 = vpop.f32.mrf.mxu0
    %2608 = vdwg.mxu0
    %v2609 = vadd.f32 %v2438, %v2591
    %v2610 = vadd.f32 %v2440, %v2593
    %v2611 = vadd.f32 %v2443, %v2596
    %v2612 = vadd.f32 %v2445, %v2598
    %v2613 = vadd.f32 %v2448, %v2601
    %v2614 = vadd.f32 %v2450, %v2603
    %v2615 = vadd.f32 %v2453, %v2606
    %v2616 = vadd.f32 %v2609, %v2120
    %v2617 = vadd.f32 %v2610, %v2120
    %v2618 = vadd.f32 %v2611, %v2120
    %v2619 = vadd.f32 %v2612, %v2120
    %v2620 = vadd.f32 %v2613, %v2120
    %v2621 = vadd.f32 %v2614, %v2120
    %v2622 = vadd.f32 %v2615, %v2120
    %v2623 = vmax.f32 %v2616, 0.0
    %v2624 = vmax.f32 %v2617, 0.0
    %v2625 = vmax.f32 %v2618, 0.0
    %v2626 = vmax.f32 %v2619, 0.0
    %v2627 = vmax.f32 %v2620, 0.0
    %v2628 = vmax.f32 %v2621, 0.0
    %v2629 = vmax.f32 %v2622, 0.0
    %v2630 = vmul.f32 %v2623, %v2135
    %v2631 = vmul.f32 %v2624, %v2135
    %v2632 = vmul.f32 %v2625, %v2135
    %v2633 = vmul.f32 %v2626, %v2135
    %v2634 = vmul.f32 %v2627, %v2135
    %v2635 = vmul.f32 %v2628, %v2135
    %v2636 = vmul.f32 %v2629, %v2135
    %v2637 = vadd.f32 %v2630, %v2143
    %v2638 = vadd.f32 %v2631, %v2143
    %v2639 = vadd.f32 %v2632, %v2143
    %v2640 = vadd.f32 %v2633, %v2143
    %v2641 = vadd.f32 %v2634, %v2143
    %v2642 = vadd.f32 %v2635, %v2143
    %v2643 = vadd.f32 %v2636, %v2143
    %v2644 = vmax.f32 %v2144, %v2637
    %v2645 = vmax.f32 %v2145, %v2638
    %v2646 = vmax.f32 %v2146, %v2639
    %v2647 = vmax.f32 %v2147, %v2640
    %v2648 = vmax.f32 %v2148, %v2641
    %v2649 = vmax.f32 %v2149, %v2642
    %v2650 = vmax.f32 %v2150, %v2643
    %vm2651 = vcmask 719872
    %2652 = vst.msk [vmem:[#allocation2] sm:$0xff] %vm2651, %v2644
    %2653 = vst.msk [vmem:[#allocation2 + $0x8] sm:$0xff] %vm2651, %v2645
    %2654 = vst.msk [vmem:[#allocation2 + $0x10] sm:$0xff] %vm2651, %v2646
    %2655 = vst.msk [vmem:[#allocation2 + $0x18] sm:$0xff] %vm2651, %v2647
    %2656 = vst.msk [vmem:[#allocation2 + $0x20] sm:$0xff] %vm2651, %v2648
    %2657 = vst.msk [vmem:[#allocation2 + $0x28] sm:$0xff] %vm2651, %v2649
    %vm2658 = vcmask 717824
    %2659 = vst.msk [vmem:[#allocation2 + $0x30] sm:$0x3f] %vm2658, %v2650
    %v2660 = vld [vmem:[#allocation2] ss:$2 sm:$0xff]
    %s2661 = scalar_lea.vmem [#allocation2], 16
    %v2662 = vld [vmem:[%s2661] ss:$2 sm:$0xff]
    %s2663 = scalar_lea.vmem [#allocation2], 32
    %v2664 = vld [vmem:[%s2663] ss:$2 sm:$0xff]
    %s2665 = scalar_lea.vmem [#allocation2], 48
    %v2666 = vld [vmem:[%s2665] ss:$2 sm:$0x7]
    %s2667 = scalar_lea.vmem [#allocation2], 1
    %v2668 = vld [vmem:[%s2667] ss:$2 sm:$0xff]
    %s2669 = scalar_lea.vmem [#allocation2], 17
    %v2670 = vld [vmem:[%s2669] ss:$2 sm:$0xff]
    %s2671 = scalar_lea.vmem [#allocation2], 33
    %v2672 = vld [vmem:[%s2671] ss:$2 sm:$0xff]
    %s2673 = scalar_lea.vmem [#allocation2], 49
    %v2674 = vld [vmem:[%s2673] ss:$2 sm:$0x7]
    %v2675 = vmax.f32 %v2660, %v2668
    %v2676 = vmax.f32 %v2662, %v2670
    %v2677 = vmax.f32 %v2664, %v2672
    %v2678 = vmax.f32 %v2666, %v2674
    %v2679 = vpack.c.bf16 %v2676, %v2675
    %v2680 = vpack.c.bf16 %v2678, %v2677
    %v2681 = vld [vmem:[%s8] sm:$0xff]
    %v2682 = vld [vmem:[%s8 + $0x8] sm:$0xff]
    %v2683 = vld [vmem:[%s8 + $0x10] sm:$0xff]
    %v2684 = vld [vmem:[%s8 + $0x18] sm:$0xff]
    %v2685 = vld [vmem:[%s8 + $0x20] sm:$0xff]
    %v2686 = vld [vmem:[%s8 + $0x28] sm:$0xff]
    %v2687 = vld [vmem:[%s8 + $0x30] sm:$0xff]
    %v2688 = vld [vmem:[%s8 + $0x38] sm:$0xff]
    %v2689 = vld [vmem:[%s8 + $0x40] sm:$0xff]
    %v2690 = vld [vmem:[%s8 + $0x48] sm:$0xff]
    %v2691 = vld [vmem:[%s8 + $0x50] sm:$0xff]
    %v2692 = vld [vmem:[%s9] sm:$0x3]
    %v2694 = vperm.slane %v2692, 0
    %v2695 = vperm.slane %v2692, 1
    %v2709 = vunpack.c.l.b16 %v2681
    %v2710 = vunpack.c.h.b16 %v2681
    %v2711 = vunpack.c.l.b16 %v2682
    %v2712 = vunpack.c.h.b16 %v2682
    %v2713 = vunpack.c.l.b16 %v2683
    %v2714 = vunpack.c.h.b16 %v2683
    %v2715 = vunpack.c.l.b16 %v2684
    %v2716 = vunpack.c.h.b16 %v2684
    %v2717 = vunpack.c.l.b16 %v2685
    %v2718 = vunpack.c.h.b16 %v2685
    %v2719 = vunpack.c.l.b16 %v2686
    %v2720 = vunpack.c.h.b16 %v2686
    %v2721 = vunpack.c.l.b16 %v2687
    %v2722 = vunpack.c.h.b16 %v2687
    %v2723 = vunpack.c.l.b16 %v2688
    %v2724 = vunpack.c.h.b16 %v2688
    %v2725 = vunpack.c.l.b16 %v2689
    %v2726 = vunpack.c.h.b16 %v2689
    %v2727 = vunpack.c.l.b16 %v2690
    %v2728 = vunpack.c.h.b16 %v2690
    %v2729 = vunpack.c.l.b16 %v2691
    %v2730 = vunpack.c.h.b16 %v2691
    %v2731 = vpack.c.b16 %v2711, %v2709
    %v2732 = vpack.c.b16 %v2712, %v2710
    %v2733 = vpack.c.b16 %v2715, %v2713
    %v2734 = vpack.c.b16 %v2716, %v2714
    %v2735 = vpack.c.b16 %v2719, %v2717
    %v2736 = vpack.c.b16 %v2720, %v2718
    %v2737 = vpack.c.b16 %v2723, %v2721
    %v2738 = vpack.c.b16 %v2724, %v2722
    %v2739 = vpack.c.b16 %v2727, %v2725
    %v2740 = vpack.c.b16 %v2728, %v2726
    %v2741 = vpack.c.b16 %v2729, %v2729
    %v2742 = vpack.c.b16 %v2730, %v2730
    %v2754 = vsel %vm2651, %v2679, 0
    %v2757 = vsel %vm2651, %v2680, 0
    %vm2759 = vcmask 1043456
    %v2761 = vsel %vm2759, %v2741, 0
    %v2764 = vsel %vm2759, %v2742, 0
    %2766 = vmatpush.bf16.msra.mxu0 0
    %2767 = vmatpush.bf16.msra.mxu0 0
    %2768 = vmatpush.bf16.msra.mxu0 %v2761
    %2769 = vmatpush.bf16.msra.mxu0 %v2739
    %2770 = vmatpush.bf16.msra.mxu0 %v2737
    %2771 = vmatpush.bf16.msra.mxu0 %v2735
    %2772 = vmatpush.bf16.msra.mxu0 %v2733
    %2773 = vmatpush.bf16.msra.mxu0 %v2731
    %2774 = vmatmul.bf16.gmra.mxu0 %v2754
    %v2775 = vpop.f32.mrf.mxu0
    %v2776 = vadd.f32 %v2694, %v2775
    %v2777 = vpop.f32.mrf.mxu0
    %v2778 = vadd.f32 %v2694, %v2777
    %2779 = vmatmul.bf16.gmra.mxu0 %v2757
    %v2780 = vpop.f32.mrf.mxu0
    %v2781 = vadd.f32 %v2694, %v2780
    %v2782 = vpop.f32.mrf.mxu0
    %v2783 = vadd.f32 %v2694, %v2782
    %2784 = vdwg.mxu0
    %2785 = vmatpush.bf16.msra.mxu0 0
    %2786 = vmatpush.bf16.msra.mxu0 0
    %2787 = vmatpush.bf16.msra.mxu0 %v2764
    %2788 = vmatpush.bf16.msra.mxu0 %v2740
    %2789 = vmatpush.bf16.msra.mxu0 %v2738
    %2790 = vmatpush.bf16.msra.mxu0 %v2736
    %2791 = vmatpush.bf16.msra.mxu0 %v2734
    %2792 = vmatpush.bf16.msra.mxu0 %v2732
    %2793 = vmatmul.bf16.gmra.mxu0 %v2754
    %v2794 = vpop.f32.mrf.mxu0
    %v2795 = vadd.f32 %v2695, %v2794
    %v2796 = vpop.f32.mrf.mxu0
    %v2797 = vadd.f32 %v2695, %v2796
    %2798 = vmatmul.bf16.gmra.mxu0 %v2757
    %v2799 = vpop.f32.mrf.mxu0
    %v2800 = vadd.f32 %v2695, %v2799
    %v2801 = vpop.f32.mrf.mxu0
    %v2802 = vadd.f32 %v2695, %v2801
    %2803 = vdwg.mxu0
    %v2804 = vpack.c.bf16 %v2795, %v2776
    %v2805 = vpack.c.bf16 %v2797, %v2778
    %v2806 = vpack.c.bf16 %v2800, %v2781
    %v2807 = vpack.c.bf16 %v2802, %v2783
    %v2808 = vld [vmem:[%s10] sm:$0xff]
    %v2809 = vld [vmem:[%s10 + $0x8] sm:$0xff]
    %v2810 = vld [vmem:[%s10 + $0x10] sm:$0xff]
    %v2811 = vld [vmem:[%s10 + $0x18] sm:$0xff]
    %v2812 = vld [vmem:[%s10 + $0x20] sm:$0xff]
    %v2813 = vld [vmem:[%s10 + $0x28] sm:$0xff]
    %v2814 = vld [vmem:[%s10 + $0x30] sm:$0xff]
    %v2815 = vld [vmem:[%s10 + $0x38] sm:$0xff]
    %v2816 = vld [vmem:[%s10 + $0x40] sm:$0xff]
    %v2817 = vld [vmem:[%s10 + $0x48] sm:$0xff]
    %v2818 = vld [vmem:[%s10 + $0x50] sm:$0xff]
    %v2819 = vld [vmem:[%s10 + $0x58] sm:$0xff]
    %v2820 = vld [vmem:[%s10 + $0x60] sm:$0xff]
    %v2821 = vld [vmem:[%s10 + $0x68] sm:$0xff]
    %v2822 = vld [vmem:[%s10 + $0x70] sm:$0xff]
    %v2823 = vld [vmem:[%s10 + $0x78] sm:$0xff]
    %v2824 = vld [vmem:[%s10 + $0x80] sm:$0xff]
    %v2825 = vld [vmem:[%s10 + $0x88] sm:$0xff]
    %v2826 = vld [vmem:[%s10 + $0x90] sm:$0xff]
    %v2827 = vld [vmem:[%s10 + $0x98] sm:$0xff]
    %v2828 = vld [vmem:[%s10 + $0xa0] sm:$0xff]
    %v2829 = vld [vmem:[%s10 + $0xa8] sm:$0xff]
    %s2830 = scalar_lea.vmem %s10, 176
    %v2831 = vld [vmem:[%s2830] sm:$0xff]
    %v2832 = vld [vmem:[%s2830 + $0x8] sm:$0xff]
    %v2833 = vld [vmem:[%s2830 + $0x10] sm:$0xff]
    %v2834 = vld [vmem:[%s2830 + $0x18] sm:$0xff]
    %v2835 = vld [vmem:[%s2830 + $0x20] sm:$0xff]
    %v2836 = vld [vmem:[%s2830 + $0x28] sm:$0xff]
    %v2837 = vld [vmem:[%s2830 + $0x30] sm:$0xff]
    %v2838 = vld [vmem:[%s2830 + $0x38] sm:$0xff]
    %v2839 = vld [vmem:[%s2830 + $0x40] sm:$0xff]
    %v2840 = vld [vmem:[%s2830 + $0x48] sm:$0xff]
    %v2841 = vld [vmem:[%s2830 + $0x50] sm:$0xff]
    %v2842 = vld [vmem:[%s2830 + $0x58] sm:$0xff]
    %v2843 = vld [vmem:[%s2830 + $0x60] sm:$0xff]
    %v2844 = vld [vmem:[%s2830 + $0x68] sm:$0xff]
    %v2845 = vld [vmem:[%s2830 + $0x70] sm:$0xff]
    %v2846 = vld [vmem:[%s2830 + $0x78] sm:$0xff]
    %v2847 = vld [vmem:[%s2830 + $0x80] sm:$0xff]
    %v2848 = vld [vmem:[%s2830 + $0x88] sm:$0xff]
    %v2849 = vld [vmem:[%s2830 + $0x90] sm:$0xff]
    %v2850 = vld [vmem:[%s2830 + $0x98] sm:$0xff]
    %v2851 = vld [vmem:[%s2830 + $0xa0] sm:$0xff]
    %v2852 = vld [vmem:[%s2830 + $0xa8] sm:$0xff]
    %v2857 = vunpack.c.l.b16 %v2804
    %v2858 = vunpack.c.h.b16 %v2804
    %v2859 = vunpack.c.l.b16 %v2805
    %v2860 = vunpack.c.h.b16 %v2805
    %v2861 = vunpack.c.l.b16 %v2806
    %v2862 = vunpack.c.h.b16 %v2806
    %v2863 = vunpack.c.l.b16 %v2807
    %v2864 = vunpack.c.h.b16 %v2807
    %v2865 = vpack.c.b16 %v2859, %v2857
    %v2866 = vpack.c.b16 %v2860, %v2858
    %v2867 = vpack.c.b16 %v2863, %v2861
    %v2868 = vpack.c.b16 %v2864, %v2862
    %v2870 = vshrl.u32 %v2865, 16
    %v2872 = vshll.u32 %v2865, 16
    %v2874 = vrot.slane %v2872, 1
    %v2875 = vor.u32 %v2870, %v2874
    %v2877 = vshll.u32 %v2867, 16
    %v2879 = vrot.slane %v2877, 1
    %v2880 = vsel %vm100, %v2875, %v2879
    %v2882 = vshrl.u32 %v2866, 16
    %v2884 = vshll.u32 %v2866, 16
    %v2886 = vrot.slane %v2884, 1
    %v2887 = vor.u32 %v2882, %v2886
    %v2889 = vshll.u32 %v2868, 16
    %v2891 = vrot.slane %v2889, 1
    %v2892 = vsel %vm100, %v2887, %v2891
    %v2893 = vshrl.u32 %v2867, 16
    %v2895 = vor.u32 %v2893, %v2879
    %v2896 = vshrl.u32 %v2868, 16
    %v2898 = vor.u32 %v2896, %v2891
    %v2923 = vunpack.c.l.b16 %v2831
    %v2924 = vunpack.c.h.b16 %v2831
    %v2925 = vunpack.c.l.b16 %v2832
    %v2926 = vunpack.c.h.b16 %v2832
    %v2927 = vunpack.c.l.b16 %v2833
    %v2928 = vunpack.c.h.b16 %v2833
    %v2929 = vunpack.c.l.b16 %v2834
    %v2930 = vunpack.c.h.b16 %v2834
    %v2931 = vunpack.c.l.b16 %v2835
    %v2932 = vunpack.c.h.b16 %v2835
    %v2933 = vunpack.c.l.b16 %v2836
    %v2934 = vunpack.c.h.b16 %v2836
    %v2935 = vunpack.c.l.b16 %v2837
    %v2936 = vunpack.c.h.b16 %v2837
    %v2937 = vunpack.c.l.b16 %v2838
    %v2938 = vunpack.c.h.b16 %v2838
    %v2939 = vunpack.c.l.b16 %v2839
    %v2940 = vunpack.c.h.b16 %v2839
    %v2941 = vunpack.c.l.b16 %v2840
    %v2942 = vunpack.c.h.b16 %v2840
    %v2943 = vunpack.c.l.b16 %v2841
    %v2944 = vunpack.c.h.b16 %v2841
    %v2945 = vunpack.c.l.b16 %v2842
    %v2946 = vunpack.c.h.b16 %v2842
    %v2947 = vunpack.c.l.b16 %v2843
    %v2948 = vunpack.c.h.b16 %v2843
    %v2949 = vunpack.c.l.b16 %v2844
    %v2950 = vunpack.c.h.b16 %v2844
    %v2951 = vunpack.c.l.b16 %v2845
    %v2952 = vunpack.c.h.b16 %v2845
    %v2953 = vunpack.c.l.b16 %v2846
    %v2954 = vunpack.c.h.b16 %v2846
    %v2955 = vunpack.c.l.b16 %v2847
    %v2956 = vunpack.c.h.b16 %v2847
    %v2957 = vunpack.c.l.b16 %v2848
    %v2958 = vunpack.c.h.b16 %v2848
    %v2959 = vunpack.c.l.b16 %v2849
    %v2960 = vunpack.c.h.b16 %v2849
    %v2961 = vunpack.c.l.b16 %v2850
    %v2962 = vunpack.c.h.b16 %v2850
    %v2963 = vunpack.c.l.b16 %v2851
    %v2964 = vunpack.c.h.b16 %v2851
    %v2965 = vunpack.c.l.b16 %v2852
    %v2966 = vunpack.c.h.b16 %v2852
    %v2967 = vpack.c.b16 %v2925, %v2923
    %v2968 = vpack.c.b16 %v2926, %v2924
    %v2969 = vpack.c.b16 %v2929, %v2927
    %v2970 = vpack.c.b16 %v2930, %v2928
    %v2971 = vpack.c.b16 %v2933, %v2931
    %v2972 = vpack.c.b16 %v2934, %v2932
    %v2973 = vpack.c.b16 %v2937, %v2935
    %v2974 = vpack.c.b16 %v2938, %v2936
    %v2975 = vpack.c.b16 %v2941, %v2939
    %v2976 = vpack.c.b16 %v2942, %v2940
    %v2977 = vpack.c.b16 %v2945, %v2943
    %v2978 = vpack.c.b16 %v2946, %v2944
    %v2979 = vpack.c.b16 %v2949, %v2947
    %v2980 = vpack.c.b16 %v2950, %v2948
    %v2981 = vpack.c.b16 %v2953, %v2951
    %v2982 = vpack.c.b16 %v2954, %v2952
    %v2983 = vpack.c.b16 %v2957, %v2955
    %v2984 = vpack.c.b16 %v2958, %v2956
    %v2985 = vpack.c.b16 %v2961, %v2959
    %v2986 = vpack.c.b16 %v2962, %v2960
    %v2987 = vpack.c.b16 %v2965, %v2963
    %v2988 = vpack.c.b16 %v2966, %v2964
    %vm3011 = vcmask 392192
    %v3013 = vsel %vm3011, %v2892, 0
    %v3016 = vsel %vm3011, %v2898, 0
    %3018 = vmatpush.bf16.msra.mxu0 %v2981
    %3019 = vmatpush.bf16.msra.mxu0 %v2979
    %3020 = vmatpush.bf16.msra.mxu0 %v2977
    %3021 = vmatpush.bf16.msra.mxu0 %v2975
    %3022 = vmatpush.bf16.msra.mxu0 %v2973
    %3023 = vmatpush.bf16.msra.mxu0 %v2971
    %3024 = vmatpush.bf16.msra.mxu0 %v2969
    %3025 = vmatpush.bf16.msra.mxu0 %v2967
    %3026 = vmatmul.bf16.gmra.mxu0 %v2880
    %v3027 = vpop.f32.mrf.mxu0
    %v3028 = vadd.f32 0.0, %v3027
    %v3029 = vpop.f32.mrf.mxu0
    %v3030 = vadd.f32 0.0, %v3029
    %3031 = vmatmul.bf16.gmra.mxu0 %v2895
    %v3032 = vpop.f32.mrf.mxu0
    %v3033 = vadd.f32 0.0, %v3032
    %v3034 = vpop.f32.mrf.mxu0
    %v3035 = vadd.f32 0.0, %v3034
    %3036 = vdwg.mxu0
    %3037 = vmatpush.bf16.msra.mxu0 0
    %3038 = vmatpush.bf16.msra.mxu0 0
    %3039 = vmatpush.bf16.msra.mxu0 0
    %3040 = vmatpush.bf16.msra.mxu0 0
    %3041 = vmatpush.bf16.msra.mxu0 0
    %3042 = vmatpush.bf16.msra.mxu0 %v2987
    %3043 = vmatpush.bf16.msra.mxu0 %v2985
    %3044 = vmatpush.bf16.msra.mxu0 %v2983
    %3045 = vmatmul.bf16.gmra.mxu0 %v3013
    %v3046 = vpop.f32.mrf.mxu0
    %v3047 = vadd.f32 %v3028, %v3046
    %v3048 = vpop.f32.mrf.mxu0
    %v3049 = vadd.f32 %v3030, %v3048
    %3050 = vmatmul.bf16.gmra.mxu0 %v3016
    %v3051 = vpop.f32.mrf.mxu0
    %v3052 = vadd.f32 %v3033, %v3051
    %v3053 = vpop.f32.mrf.mxu0
    %v3054 = vadd.f32 %v3035, %v3053
    %3055 = vdwg.mxu0
    %3056 = vmatpush.bf16.msra.mxu0 %v2982
    %3057 = vmatpush.bf16.msra.mxu0 %v2980
    %3058 = vmatpush.bf16.msra.mxu0 %v2978
    %3059 = vmatpush.bf16.msra.mxu0 %v2976
    %3060 = vmatpush.bf16.msra.mxu0 %v2974
    %3061 = vmatpush.bf16.msra.mxu0 %v2972
    %3062 = vmatpush.bf16.msra.mxu0 %v2970
    %3063 = vmatpush.bf16.msra.mxu0 %v2968
    %3064 = vmatmul.bf16.gmra.mxu0 %v2880
    %v3065 = vpop.f32.mrf.mxu0
    %v3066 = vadd.f32 0.0, %v3065
    %v3067 = vpop.f32.mrf.mxu0
    %v3068 = vadd.f32 0.0, %v3067
    %3069 = vmatmul.bf16.gmra.mxu0 %v2895
    %v3070 = vpop.f32.mrf.mxu0
    %v3071 = vadd.f32 0.0, %v3070
    %v3072 = vpop.f32.mrf.mxu0
    %v3073 = vadd.f32 0.0, %v3072
    %3074 = vdwg.mxu0
    %3075 = vmatpush.bf16.msra.mxu0 0
    %3076 = vmatpush.bf16.msra.mxu0 0
    %3077 = vmatpush.bf16.msra.mxu0 0
    %3078 = vmatpush.bf16.msra.mxu0 0
    %3079 = vmatpush.bf16.msra.mxu0 0
    %3080 = vmatpush.bf16.msra.mxu0 %v2988
    %3081 = vmatpush.bf16.msra.mxu0 %v2986
    %3082 = vmatpush.bf16.msra.mxu0 %v2984
    %3083 = vmatmul.bf16.gmra.mxu0 %v3013
    %v3084 = vpop.f32.mrf.mxu0
    %v3085 = vadd.f32 %v3066, %v3084
    %v3086 = vpop.f32.mrf.mxu0
    %v3087 = vadd.f32 %v3068, %v3086
    %3088 = vmatmul.bf16.gmra.mxu0 %v3016
    %v3089 = vpop.f32.mrf.mxu0
    %v3090 = vadd.f32 %v3071, %v3089
    %v3091 = vpop.f32.mrf.mxu0
    %v3092 = vadd.f32 %v3073, %v3091
    %3093 = vdwg.mxu0
    %v3118 = vunpack.c.l.b16 %v2808
    %v3119 = vunpack.c.h.b16 %v2808
    %v3120 = vunpack.c.l.b16 %v2809
    %v3121 = vunpack.c.h.b16 %v2809
    %v3122 = vunpack.c.l.b16 %v2810
    %v3123 = vunpack.c.h.b16 %v2810
    %v3124 = vunpack.c.l.b16 %v2811
    %v3125 = vunpack.c.h.b16 %v2811
    %v3126 = vunpack.c.l.b16 %v2812
    %v3127 = vunpack.c.h.b16 %v2812
    %v3128 = vunpack.c.l.b16 %v2813
    %v3129 = vunpack.c.h.b16 %v2813
    %v3130 = vunpack.c.l.b16 %v2814
    %v3131 = vunpack.c.h.b16 %v2814
    %v3132 = vunpack.c.l.b16 %v2815
    %v3133 = vunpack.c.h.b16 %v2815
    %v3134 = vunpack.c.l.b16 %v2816
    %v3135 = vunpack.c.h.b16 %v2816
    %v3136 = vunpack.c.l.b16 %v2817
    %v3137 = vunpack.c.h.b16 %v2817
    %v3138 = vunpack.c.l.b16 %v2818
    %v3139 = vunpack.c.h.b16 %v2818
    %v3140 = vunpack.c.l.b16 %v2819
    %v3141 = vunpack.c.h.b16 %v2819
    %v3142 = vunpack.c.l.b16 %v2820
    %v3143 = vunpack.c.h.b16 %v2820
    %v3144 = vunpack.c.l.b16 %v2821
    %v3145 = vunpack.c.h.b16 %v2821
    %v3146 = vunpack.c.l.b16 %v2822
    %v3147 = vunpack.c.h.b16 %v2822
    %v3148 = vunpack.c.l.b16 %v2823
    %v3149 = vunpack.c.h.b16 %v2823
    %v3150 = vunpack.c.l.b16 %v2824
    %v3151 = vunpack.c.h.b16 %v2824
    %v3152 = vunpack.c.l.b16 %v2825
    %v3153 = vunpack.c.h.b16 %v2825
    %v3154 = vunpack.c.l.b16 %v2826
    %v3155 = vunpack.c.h.b16 %v2826
    %v3156 = vunpack.c.l.b16 %v2827
    %v3157 = vunpack.c.h.b16 %v2827
    %v3158 = vunpack.c.l.b16 %v2828
    %v3159 = vunpack.c.h.b16 %v2828
    %v3160 = vunpack.c.l.b16 %v2829
    %v3161 = vunpack.c.h.b16 %v2829
    %v3162 = vpack.c.b16 %v3120, %v3118
    %v3163 = vpack.c.b16 %v3121, %v3119
    %v3164 = vpack.c.b16 %v3124, %v3122
    %v3165 = vpack.c.b16 %v3125, %v3123
    %v3166 = vpack.c.b16 %v3128, %v3126
    %v3167 = vpack.c.b16 %v3129, %v3127
    %v3168 = vpack.c.b16 %v3132, %v3130
    %v3169 = vpack.c.b16 %v3133, %v3131
    %v3170 = vpack.c.b16 %v3136, %v3134
    %v3171 = vpack.c.b16 %v3137, %v3135
    %v3172 = vpack.c.b16 %v3140, %v3138
    %v3173 = vpack.c.b16 %v3141, %v3139
    %v3174 = vpack.c.b16 %v3144, %v3142
    %v3175 = vpack.c.b16 %v3145, %v3143
    %v3176 = vpack.c.b16 %v3148, %v3146
    %v3177 = vpack.c.b16 %v3149, %v3147
    %v3178 = vpack.c.b16 %v3152, %v3150
    %v3179 = vpack.c.b16 %v3153, %v3151
    %v3180 = vpack.c.b16 %v3156, %v3154
    %v3181 = vpack.c.b16 %v3157, %v3155
    %v3182 = vpack.c.b16 %v3160, %v3158
    %v3183 = vpack.c.b16 %v3161, %v3159
    %v3206 = vsel %vm3011, %v2866, 0
    %v3208 = vsel %vm3011, %v2868, 0
    %3210 = vmatpush.bf16.msra.mxu0 %v3176
    %3211 = vmatpush.bf16.msra.mxu0 %v3174
    %3212 = vmatpush.bf16.msra.mxu0 %v3172
    %3213 = vmatpush.bf16.msra.mxu0 %v3170
    %3214 = vmatpush.bf16.msra.mxu0 %v3168
    %3215 = vmatpush.bf16.msra.mxu0 %v3166
    %3216 = vmatpush.bf16.msra.mxu0 %v3164
    %3217 = vmatpush.bf16.msra.mxu0 %v3162
    %3218 = vmatmul.bf16.gmra.mxu0 %v2865
    %v3219 = vpop.f32.mrf.mxu0
    %v3220 = vadd.f32 %v3047, %v3219
    %v3221 = vpop.f32.mrf.mxu0
    %v3222 = vadd.f32 %v3049, %v3221
    %3223 = vmatmul.bf16.gmra.mxu0 %v2867
    %v3224 = vpop.f32.mrf.mxu0
    %v3225 = vadd.f32 %v3052, %v3224
    %v3226 = vpop.f32.mrf.mxu0
    %v3227 = vadd.f32 %v3054, %v3226
    %3228 = vdwg.mxu0
    %3229 = vmatpush.bf16.msra.mxu0 0
    %3230 = vmatpush.bf16.msra.mxu0 0
    %3231 = vmatpush.bf16.msra.mxu0 0
    %3232 = vmatpush.bf16.msra.mxu0 0
    %3233 = vmatpush.bf16.msra.mxu0 0
    %3234 = vmatpush.bf16.msra.mxu0 %v3182
    %3235 = vmatpush.bf16.msra.mxu0 %v3180
    %3236 = vmatpush.bf16.msra.mxu0 %v3178
    %3237 = vmatmul.bf16.gmra.mxu0 %v3206
    %v3238 = vpop.f32.mrf.mxu0
    %v3239 = vadd.f32 %v3220, %v3238
    %v3240 = vpop.f32.mrf.mxu0
    %v3241 = vadd.f32 %v3222, %v3240
    %3242 = vmatmul.bf16.gmra.mxu0 %v3208
    %v3243 = vpop.f32.mrf.mxu0
    %v3244 = vadd.f32 %v3225, %v3243
    %v3245 = vpop.f32.mrf.mxu0
    %v3246 = vadd.f32 %v3227, %v3245
    %3247 = vdwg.mxu0
    %3248 = vmatpush.bf16.msra.mxu0 %v3177
    %3249 = vmatpush.bf16.msra.mxu0 %v3175
    %3250 = vmatpush.bf16.msra.mxu0 %v3173
    %3251 = vmatpush.bf16.msra.mxu0 %v3171
    %3252 = vmatpush.bf16.msra.mxu0 %v3169
    %3253 = vmatpush.bf16.msra.mxu0 %v3167
    %3254 = vmatpush.bf16.msra.mxu0 %v3165
    %3255 = vmatpush.bf16.msra.mxu0 %v3163
    %3256 = vmatmul.bf16.gmra.mxu0 %v2865
    %v3257 = vpop.f32.mrf.mxu0
    %v3258 = vadd.f32 %v3085, %v3257
    %v3259 = vpop.f32.mrf.mxu0
    %v3260 = vadd.f32 %v3087, %v3259
    %3261 = vmatmul.bf16.gmra.mxu0 %v2867
    %v3262 = vpop.f32.mrf.mxu0
    %v3263 = vadd.f32 %v3090, %v3262
    %v3264 = vpop.f32.mrf.mxu0
    %v3265 = vadd.f32 %v3092, %v3264
    %3266 = vdwg.mxu0
    %3267 = vmatpush.bf16.msra.mxu0 0
    %3268 = vmatpush.bf16.msra.mxu0 0
    %3269 = vmatpush.bf16.msra.mxu0 0
    %3270 = vmatpush.bf16.msra.mxu0 0
    %3271 = vmatpush.bf16.msra.mxu0 0
    %3272 = vmatpush.bf16.msra.mxu0 %v3183
    %3273 = vmatpush.bf16.msra.mxu0 %v3181
    %3274 = vmatpush.bf16.msra.mxu0 %v3179
    %3275 = vmatmul.bf16.gmra.mxu0 %v3206
    %v3276 = vpop.f32.mrf.mxu0
    %v3277 = vadd.f32 %v3258, %v3276
    %v3278 = vpop.f32.mrf.mxu0
    %v3279 = vadd.f32 %v3260, %v3278
    %3280 = vmatmul.bf16.gmra.mxu0 %v3208
    %v3281 = vpop.f32.mrf.mxu0
    %v3282 = vadd.f32 %v3263, %v3281
    %v3283 = vpop.f32.mrf.mxu0
    %v3284 = vadd.f32 %v3265, %v3283
    %3285 = vdwg.mxu0
    %s3286 = scalar_lea.vmem %s10, 352
    %v3287 = vld [vmem:[%s3286] sm:$0xff]
    %v3288 = vld [vmem:[%s3286 + $0x8] sm:$0xff]
    %v3289 = vld [vmem:[%s3286 + $0x10] sm:$0xff]
    %v3290 = vld [vmem:[%s3286 + $0x18] sm:$0xff]
    %v3291 = vld [vmem:[%s3286 + $0x20] sm:$0xff]
    %v3292 = vld [vmem:[%s3286 + $0x28] sm:$0xff]
    %v3293 = vld [vmem:[%s3286 + $0x30] sm:$0xff]
    %v3294 = vld [vmem:[%s3286 + $0x38] sm:$0xff]
    %v3295 = vld [vmem:[%s3286 + $0x40] sm:$0xff]
    %v3296 = vld [vmem:[%s3286 + $0x48] sm:$0xff]
    %v3297 = vld [vmem:[%s3286 + $0x50] sm:$0xff]
    %v3298 = vld [vmem:[%s3286 + $0x58] sm:$0xff]
    %v3299 = vld [vmem:[%s3286 + $0x60] sm:$0xff]
    %v3300 = vld [vmem:[%s3286 + $0x68] sm:$0xff]
    %v3301 = vld [vmem:[%s3286 + $0x70] sm:$0xff]
    %v3302 = vld [vmem:[%s3286 + $0x78] sm:$0xff]
    %v3303 = vld [vmem:[%s3286 + $0x80] sm:$0xff]
    %v3304 = vld [vmem:[%s3286 + $0x88] sm:$0xff]
    %v3305 = vld [vmem:[%s3286 + $0x90] sm:$0xff]
    %v3306 = vld [vmem:[%s3286 + $0x98] sm:$0xff]
    %v3307 = vld [vmem:[%s3286 + $0xa0] sm:$0xff]
    %v3308 = vld [vmem:[%s3286 + $0xa8] sm:$0xff]
    %v3309 = vrot.slane %v2865, 1
    %v3310 = vrot.slane %v2867, 1
    %v3311 = vsel %vm323, %v3309, %v3310
    %v3312 = vrot.slane %v2866, 1
    %v3313 = vrot.slane %v2868, 1
    %v3314 = vsel %vm323, %v3312, %v3313
    %v3339 = vunpack.c.l.b16 %v3287
    %v3340 = vunpack.c.h.b16 %v3287
    %v3341 = vunpack.c.l.b16 %v3288
    %v3342 = vunpack.c.h.b16 %v3288
    %v3343 = vunpack.c.l.b16 %v3289
    %v3344 = vunpack.c.h.b16 %v3289
    %v3345 = vunpack.c.l.b16 %v3290
    %v3346 = vunpack.c.h.b16 %v3290
    %v3347 = vunpack.c.l.b16 %v3291
    %v3348 = vunpack.c.h.b16 %v3291
    %v3349 = vunpack.c.l.b16 %v3292
    %v3350 = vunpack.c.h.b16 %v3292
    %v3351 = vunpack.c.l.b16 %v3293
    %v3352 = vunpack.c.h.b16 %v3293
    %v3353 = vunpack.c.l.b16 %v3294
    %v3354 = vunpack.c.h.b16 %v3294
    %v3355 = vunpack.c.l.b16 %v3295
    %v3356 = vunpack.c.h.b16 %v3295
    %v3357 = vunpack.c.l.b16 %v3296
    %v3358 = vunpack.c.h.b16 %v3296
    %v3359 = vunpack.c.l.b16 %v3297
    %v3360 = vunpack.c.h.b16 %v3297
    %v3361 = vunpack.c.l.b16 %v3298
    %v3362 = vunpack.c.h.b16 %v3298
    %v3363 = vunpack.c.l.b16 %v3299
    %v3364 = vunpack.c.h.b16 %v3299
    %v3365 = vunpack.c.l.b16 %v3300
    %v3366 = vunpack.c.h.b16 %v3300
    %v3367 = vunpack.c.l.b16 %v3301
    %v3368 = vunpack.c.h.b16 %v3301
    %v3369 = vunpack.c.l.b16 %v3302
    %v3370 = vunpack.c.h.b16 %v3302
    %v3371 = vunpack.c.l.b16 %v3303
    %v3372 = vunpack.c.h.b16 %v3303
    %v3373 = vunpack.c.l.b16 %v3304
    %v3374 = vunpack.c.h.b16 %v3304
    %v3375 = vunpack.c.l.b16 %v3305
    %v3376 = vunpack.c.h.b16 %v3305
    %v3377 = vunpack.c.l.b16 %v3306
    %v3378 = vunpack.c.h.b16 %v3306
    %v3379 = vunpack.c.l.b16 %v3307
    %v3380 = vunpack.c.h.b16 %v3307
    %v3381 = vunpack.c.l.b16 %v3308
    %v3382 = vunpack.c.h.b16 %v3308
    %v3383 = vpack.c.b16 %v3341, %v3339
    %v3384 = vpack.c.b16 %v3342, %v3340
    %v3385 = vpack.c.b16 %v3345, %v3343
    %v3386 = vpack.c.b16 %v3346, %v3344
    %v3387 = vpack.c.b16 %v3349, %v3347
    %v3388 = vpack.c.b16 %v3350, %v3348
    %v3389 = vpack.c.b16 %v3353, %v3351
    %v3390 = vpack.c.b16 %v3354, %v3352
    %v3391 = vpack.c.b16 %v3357, %v3355
    %v3392 = vpack.c.b16 %v3358, %v3356
    %v3393 = vpack.c.b16 %v3361, %v3359
    %v3394 = vpack.c.b16 %v3362, %v3360
    %v3395 = vpack.c.b16 %v3365, %v3363
    %v3396 = vpack.c.b16 %v3366, %v3364
    %v3397 = vpack.c.b16 %v3369, %v3367
    %v3398 = vpack.c.b16 %v3370, %v3368
    %v3399 = vpack.c.b16 %v3373, %v3371
    %v3400 = vpack.c.b16 %v3374, %v3372
    %v3401 = vpack.c.b16 %v3377, %v3375
    %v3402 = vpack.c.b16 %v3378, %v3376
    %v3403 = vpack.c.b16 %v3381, %v3379
    %v3404 = vpack.c.b16 %v3382, %v3380
    %v3428 = vsel %vm3011, %v3314, 0
    %v3431 = vsel %vm3011, %v3313, 0
    %3433 = vmatpush.bf16.msra.mxu0 %v3397
    %3434 = vmatpush.bf16.msra.mxu0 %v3395
    %3435 = vmatpush.bf16.msra.mxu0 %v3393
    %3436 = vmatpush.bf16.msra.mxu0 %v3391
    %3437 = vmatpush.bf16.msra.mxu0 %v3389
    %3438 = vmatpush.bf16.msra.mxu0 %v3387
    %3439 = vmatpush.bf16.msra.mxu0 %v3385
    %3440 = vmatpush.bf16.msra.mxu0 %v3383
    %3441 = vmatmul.bf16.gmra.mxu0 %v3311
    %v3442 = vpop.f32.mrf.mxu0
    %v3443 = vadd.f32 0.0, %v3442
    %v3444 = vpop.f32.mrf.mxu0
    %v3445 = vadd.f32 0.0, %v3444
    %3446 = vmatmul.bf16.gmra.mxu0 %v3310
    %v3447 = vpop.f32.mrf.mxu0
    %v3448 = vadd.f32 0.0, %v3447
    %v3449 = vpop.f32.mrf.mxu0
    %v3450 = vadd.f32 0.0, %v3449
    %3451 = vdwg.mxu0
    %3452 = vmatpush.bf16.msra.mxu0 0
    %3453 = vmatpush.bf16.msra.mxu0 0
    %3454 = vmatpush.bf16.msra.mxu0 0
    %3455 = vmatpush.bf16.msra.mxu0 0
    %3456 = vmatpush.bf16.msra.mxu0 0
    %3457 = vmatpush.bf16.msra.mxu0 %v3403
    %3458 = vmatpush.bf16.msra.mxu0 %v3401
    %3459 = vmatpush.bf16.msra.mxu0 %v3399
    %3460 = vmatmul.bf16.gmra.mxu0 %v3428
    %v3461 = vpop.f32.mrf.mxu0
    %v3462 = vadd.f32 %v3443, %v3461
    %v3463 = vpop.f32.mrf.mxu0
    %v3464 = vadd.f32 %v3445, %v3463
    %3465 = vmatmul.bf16.gmra.mxu0 %v3431
    %v3466 = vpop.f32.mrf.mxu0
    %v3467 = vadd.f32 %v3448, %v3466
    %v3468 = vpop.f32.mrf.mxu0
    %v3469 = vadd.f32 %v3450, %v3468
    %3470 = vdwg.mxu0
    %3471 = vmatpush.bf16.msra.mxu0 %v3398
    %3472 = vmatpush.bf16.msra.mxu0 %v3396
    %3473 = vmatpush.bf16.msra.mxu0 %v3394
    %3474 = vmatpush.bf16.msra.mxu0 %v3392
    %3475 = vmatpush.bf16.msra.mxu0 %v3390
    %3476 = vmatpush.bf16.msra.mxu0 %v3388
    %3477 = vmatpush.bf16.msra.mxu0 %v3386
    %3478 = vmatpush.bf16.msra.mxu0 %v3384
    %3479 = vmatmul.bf16.gmra.mxu0 %v3311
    %v3480 = vpop.f32.mrf.mxu0
    %v3481 = vadd.f32 0.0, %v3480
    %v3482 = vpop.f32.mrf.mxu0
    %v3483 = vadd.f32 0.0, %v3482
    %3484 = vmatmul.bf16.gmra.mxu0 %v3310
    %v3485 = vpop.f32.mrf.mxu0
    %v3486 = vadd.f32 0.0, %v3485
    %v3487 = vpop.f32.mrf.mxu0
    %v3488 = vadd.f32 0.0, %v3487
    %3489 = vdwg.mxu0
    %3490 = vmatpush.bf16.msra.mxu0 0
    %3491 = vmatpush.bf16.msra.mxu0 0
    %3492 = vmatpush.bf16.msra.mxu0 0
    %3493 = vmatpush.bf16.msra.mxu0 0
    %3494 = vmatpush.bf16.msra.mxu0 0
    %3495 = vmatpush.bf16.msra.mxu0 %v3404
    %3496 = vmatpush.bf16.msra.mxu0 %v3402
    %3497 = vmatpush.bf16.msra.mxu0 %v3400
    %3498 = vmatmul.bf16.gmra.mxu0 %v3428
    %v3499 = vpop.f32.mrf.mxu0
    %v3500 = vadd.f32 %v3481, %v3499
    %v3501 = vpop.f32.mrf.mxu0
    %v3502 = vadd.f32 %v3483, %v3501
    %3503 = vmatmul.bf16.gmra.mxu0 %v3431
    %v3504 = vpop.f32.mrf.mxu0
    %v3505 = vadd.f32 %v3486, %v3504
    %v3506 = vpop.f32.mrf.mxu0
    %v3507 = vadd.f32 %v3488, %v3506
    %3508 = vdwg.mxu0
    %v3509 = vadd.f32 %v3239, %v3462
    %v3510 = vadd.f32 %v3277, %v3500
    %v3511 = vadd.f32 %v3241, %v3464
    %v3512 = vadd.f32 %v3279, %v3502
    %v3513 = vadd.f32 %v3244, %v3467
    %v3514 = vadd.f32 %v3282, %v3505
    %v3515 = vadd.f32 %v3246, %v3469
    %v3516 = vadd.f32 %v3284, %v3507
    %v3517 = vld [vmem:[%s11] sm:$0x3]
    %v3519 = vperm.slane %v3517, 0
    %v3520 = vperm.slane %v3517, 1
    %v3523 = vadd.f32 %v3509, %v3519
    %v3524 = vadd.f32 %v3510, %v3520
    %v3525 = vadd.f32 %v3511, %v3519
    %v3526 = vadd.f32 %v3512, %v3520
    %v3527 = vadd.f32 %v3513, %v3519
    %v3528 = vadd.f32 %v3514, %v3520
    %v3529 = vadd.f32 %v3515, %v3519
    %v3530 = vadd.f32 %v3516, %v3520
    %v3531 = vmax.f32 %v3523, 0.0
    %v3532 = vmax.f32 %v3524, 0.0
    %v3533 = vmax.f32 %v3525, 0.0
    %v3534 = vmax.f32 %v3526, 0.0
    %v3535 = vmax.f32 %v3527, 0.0
    %v3536 = vmax.f32 %v3528, 0.0
    %v3537 = vmax.f32 %v3529, 0.0
    %v3538 = vmax.f32 %v3530, 0.0
    %v3539 = vpack.c.bf16 %v3532, %v3531
    %v3540 = vpack.c.bf16 %v3534, %v3533
    %v3541 = vpack.c.bf16 %v3536, %v3535
    %v3542 = vpack.c.bf16 %v3538, %v3537
    %v3543 = vld [vmem:[%s12] sm:$0xf]
    %v3544 = vld [vmem:[%s12 + $0x4] sm:$0xf]
    %v3545 = vld [vmem:[%s12 + $0x8] sm:$0xf]
    %v3546 = vld [vmem:[%s12 + $0xc] sm:$0xf]
    %v3547 = vld [vmem:[%s12 + $0x10] sm:$0xf]
    %v3548 = vld [vmem:[%s12 + $0x14] sm:$0xf]
    %v3549 = vld [vmem:[%s12 + $0x18] sm:$0xf]
    %v3550 = vld [vmem:[%s12 + $0x1c] sm:$0xf]
    %v3551 = vld [vmem:[%s12 + $0x20] sm:$0xf]
    %v3552 = vld [vmem:[%s12 + $0x24] sm:$0xf]
    %v3553 = vld [vmem:[%s12 + $0x28] sm:$0xf]
    %v3554 = vld [vmem:[%s12 + $0x2c] sm:$0xf]
    %v3555 = vld [vmem:[%s12 + $0x30] sm:$0xf]
    %v3556 = vld [vmem:[%s12 + $0x34] sm:$0xf]
    %v3557 = vld [vmem:[%s12 + $0x38] sm:$0xf]
    %v3558 = vld [vmem:[%s12 + $0x3c] sm:$0xf]
    %v3559 = vld [vmem:[%s12 + $0x40] sm:$0xf]
    %v3560 = vld [vmem:[%s12 + $0x44] sm:$0xf]
    %s3561 = scalar_lea.vmem %s12, 72
    %v3562 = vld [vmem:[%s3561] sm:$0xf]
    %v3563 = vld [vmem:[%s3561 + $0x4] sm:$0xf]
    %v3564 = vld [vmem:[%s3561 + $0x8] sm:$0xf]
    %v3565 = vld [vmem:[%s3561 + $0xc] sm:$0xf]
    %v3566 = vld [vmem:[%s3561 + $0x10] sm:$0xf]
    %v3567 = vld [vmem:[%s3561 + $0x14] sm:$0xf]
    %v3568 = vld [vmem:[%s3561 + $0x18] sm:$0xf]
    %v3569 = vld [vmem:[%s3561 + $0x1c] sm:$0xf]
    %v3570 = vld [vmem:[%s3561 + $0x20] sm:$0xf]
    %v3571 = vld [vmem:[%s3561 + $0x24] sm:$0xf]
    %v3572 = vld [vmem:[%s3561 + $0x28] sm:$0xf]
    %v3573 = vld [vmem:[%s3561 + $0x2c] sm:$0xf]
    %v3574 = vld [vmem:[%s3561 + $0x30] sm:$0xf]
    %v3575 = vld [vmem:[%s3561 + $0x34] sm:$0xf]
    %v3576 = vld [vmem:[%s3561 + $0x38] sm:$0xf]
    %v3577 = vld [vmem:[%s3561 + $0x3c] sm:$0xf]
    %v3578 = vld [vmem:[%s3561 + $0x40] sm:$0xf]
    %v3579 = vld [vmem:[%s3561 + $0x44] sm:$0xf]
    %v3583 = vunpack.c.l.b16 %v3539
    %v3584 = vunpack.c.h.b16 %v3539
    %v3585 = vunpack.c.l.b16 %v3540
    %v3586 = vunpack.c.h.b16 %v3540
    %v3587 = vunpack.c.l.b16 %v3541
    %v3588 = vunpack.c.h.b16 %v3541
    %v3589 = vpack.c.b16 %v3585, %v3583
    %v3590 = vpack.c.b16 %v3586, %v3584
    %v3591 = vpack.c.b16 %v3587, %v3587
    %v3592 = vpack.c.b16 %v3588, %v3588
    %v3594 = vshrl.u32 %v3589, 16
    %v3596 = vshll.u32 %v3589, 16
    %v3598 = vrot.slane %v3596, 1
    %v3599 = vor.u32 %v3594, %v3598
    %v3601 = vshll.u32 %v3591, 16
    %v3603 = vrot.slane %v3601, 1
    %v3604 = vsel %vm100, %v3599, %v3603
    %v3606 = vshrl.u32 %v3590, 16
    %v3608 = vshll.u32 %v3590, 16
    %v3610 = vrot.slane %v3608, 1
    %v3611 = vor.u32 %v3606, %v3610
    %v3613 = vshll.u32 %v3592, 16
    %v3615 = vrot.slane %v3613, 1
    %v3616 = vsel %vm100, %v3611, %v3615
    %v3617 = vshrl.u32 %v3591, 16
    %v3619 = vor.u32 %v3617, %v3603
    %v3620 = vshrl.u32 %v3592, 16
    %v3622 = vor.u32 %v3620, %v3615
    %v3643 = vunpack.c.l.b16 %v3562
    %v3644 = vunpack.c.l.b16 %v3563
    %v3645 = vunpack.c.l.b16 %v3564
    %v3646 = vunpack.c.l.b16 %v3565
    %v3647 = vunpack.c.l.b16 %v3566
    %v3648 = vunpack.c.l.b16 %v3567
    %v3649 = vunpack.c.l.b16 %v3568
    %v3650 = vunpack.c.l.b16 %v3569
    %v3651 = vunpack.c.l.b16 %v3570
    %v3652 = vunpack.c.l.b16 %v3571
    %v3653 = vunpack.c.l.b16 %v3572
    %v3654 = vunpack.c.l.b16 %v3573
    %v3655 = vunpack.c.l.b16 %v3574
    %v3656 = vunpack.c.l.b16 %v3575
    %v3657 = vunpack.c.l.b16 %v3576
    %v3658 = vunpack.c.l.b16 %v3577
    %v3659 = vunpack.c.l.b16 %v3578
    %v3660 = vunpack.c.l.b16 %v3579
    %v3661 = vpack.c.b16 %v3644, %v3643
    %v3662 = vpack.c.b16 %v3646, %v3645
    %v3663 = vpack.c.b16 %v3648, %v3647
    %v3664 = vpack.c.b16 %v3650, %v3649
    %v3665 = vpack.c.b16 %v3652, %v3651
    %v3666 = vpack.c.b16 %v3654, %v3653
    %v3667 = vpack.c.b16 %v3656, %v3655
    %v3668 = vpack.c.b16 %v3658, %v3657
    %v3669 = vpack.c.b16 %v3660, %v3659
    %vm3679 = vcmask 130048
    %v3681 = vsel %vm3679, %v3616, 0
    %v3684 = vsel %vm3679, %v3622, 0
    %3686 = vmatpush.bf16.msra.mxu0 %v3668
    %3687 = vmatpush.bf16.msra.mxu0 %v3667
    %3688 = vmatpush.bf16.msra.mxu0 %v3666
    %3689 = vmatpush.bf16.msra.mxu0 %v3665
    %3690 = vmatpush.bf16.msra.mxu0 %v3664
    %3691 = vmatpush.bf16.msra.mxu0 %v3663
    %3692 = vmatpush.bf16.msra.mxu0 %v3662
    %3693 = vmatpush.bf16.msra.mxu0 %v3661
    %3694 = vmatmul.bf16.gmra.mxu0 %v3604
    %v3695 = vpop.f32.mrf.mxu0
    %v3696 = vadd.f32 0.0, %v3695
    %v3697 = vpop.f32.mrf.mxu0
    %v3698 = vadd.f32 0.0, %v3697
    %3699 = vmatmul.bf16.gmra.mxu0 %v3619
    %v3700 = vpop.f32.mrf.mxu0
    %v3701 = vadd.f32 0.0, %v3700
    %v3702 = vpop.f32.mrf.mxu0
    %3703 = vdwg.mxu0
    %3704 = vmatpush.bf16.msra.mxu0 0
    %3705 = vmatpush.bf16.msra.mxu0 0
    %3706 = vmatpush.bf16.msra.mxu0 0
    %3707 = vmatpush.bf16.msra.mxu0 0
    %3708 = vmatpush.bf16.msra.mxu0 0
    %3709 = vmatpush.bf16.msra.mxu0 0
    %3710 = vmatpush.bf16.msra.mxu0 0
    %3711 = vmatpush.bf16.msra.mxu0 %v3669
    %3712 = vmatmul.bf16.gmra.mxu0 %v3681
    %v3713 = vpop.f32.mrf.mxu0
    %v3714 = vadd.f32 %v3696, %v3713
    %v3715 = vpop.f32.mrf.mxu0
    %v3716 = vadd.f32 %v3698, %v3715
    %3717 = vmatmul.bf16.gmra.mxu0 %v3684
    %v3718 = vpop.f32.mrf.mxu0
    %v3719 = vadd.f32 %v3701, %v3718
    %v3720 = vpop.f32.mrf.mxu0
    %3721 = vdwg.mxu0
    %v3742 = vunpack.c.l.b16 %v3543
    %v3743 = vunpack.c.l.b16 %v3544
    %v3744 = vunpack.c.l.b16 %v3545
    %v3745 = vunpack.c.l.b16 %v3546
    %v3746 = vunpack.c.l.b16 %v3547
    %v3747 = vunpack.c.l.b16 %v3548
    %v3748 = vunpack.c.l.b16 %v3549
    %v3749 = vunpack.c.l.b16 %v3550
    %v3750 = vunpack.c.l.b16 %v3551
    %v3751 = vunpack.c.l.b16 %v3552
    %v3752 = vunpack.c.l.b16 %v3553
    %v3753 = vunpack.c.l.b16 %v3554
    %v3754 = vunpack.c.l.b16 %v3555
    %v3755 = vunpack.c.l.b16 %v3556
    %v3756 = vunpack.c.l.b16 %v3557
    %v3757 = vunpack.c.l.b16 %v3558
    %v3758 = vunpack.c.l.b16 %v3559
    %v3759 = vunpack.c.l.b16 %v3560
    %v3760 = vpack.c.b16 %v3743, %v3742
    %v3761 = vpack.c.b16 %v3745, %v3744
    %v3762 = vpack.c.b16 %v3747, %v3746
    %v3763 = vpack.c.b16 %v3749, %v3748
    %v3764 = vpack.c.b16 %v3751, %v3750
    %v3765 = vpack.c.b16 %v3753, %v3752
    %v3766 = vpack.c.b16 %v3755, %v3754
    %v3767 = vpack.c.b16 %v3757, %v3756
    %v3768 = vpack.c.b16 %v3759, %v3758
    %v3778 = vsel %vm3679, %v3590, 0
    %v3780 = vsel %vm3679, %v3592, 0
    %3782 = vmatpush.bf16.msra.mxu0 %v3767
    %3783 = vmatpush.bf16.msra.mxu0 %v3766
    %3784 = vmatpush.bf16.msra.mxu0 %v3765
    %3785 = vmatpush.bf16.msra.mxu0 %v3764
    %3786 = vmatpush.bf16.msra.mxu0 %v3763
    %3787 = vmatpush.bf16.msra.mxu0 %v3762
    %3788 = vmatpush.bf16.msra.mxu0 %v3761
    %3789 = vmatpush.bf16.msra.mxu0 %v3760
    %3790 = vmatmul.bf16.gmra.mxu0 %v3589
    %v3791 = vpop.f32.mrf.mxu0
    %v3792 = vadd.f32 %v3714, %v3791
    %v3793 = vpop.f32.mrf.mxu0
    %v3794 = vadd.f32 %v3716, %v3793
    %3795 = vmatmul.bf16.gmra.mxu0 %v3591
    %v3796 = vpop.f32.mrf.mxu0
    %v3797 = vadd.f32 %v3719, %v3796
    %v3798 = vpop.f32.mrf.mxu0
    %3799 = vdwg.mxu0
    %3800 = vmatpush.bf16.msra.mxu0 0
    %3801 = vmatpush.bf16.msra.mxu0 0
    %3802 = vmatpush.bf16.msra.mxu0 0
    %3803 = vmatpush.bf16.msra.mxu0 0
    %3804 = vmatpush.bf16.msra.mxu0 0
    %3805 = vmatpush.bf16.msra.mxu0 0
    %3806 = vmatpush.bf16.msra.mxu0 0
    %3807 = vmatpush.bf16.msra.mxu0 %v3768
    %3808 = vmatmul.bf16.gmra.mxu0 %v3778
    %v3809 = vpop.f32.mrf.mxu0
    %v3810 = vadd.f32 %v3792, %v3809
    %v3811 = vpop.f32.mrf.mxu0
    %v3812 = vadd.f32 %v3794, %v3811
    %3813 = vmatmul.bf16.gmra.mxu0 %v3780
    %v3814 = vpop.f32.mrf.mxu0
    %v3815 = vadd.f32 %v3797, %v3814
    %v3816 = vpop.f32.mrf.mxu0
    %3817 = vdwg.mxu0
    %s3818 = scalar_lea.vmem %s12, 144
    %v3819 = vld [vmem:[%s3818] sm:$0xf]
    %v3820 = vld [vmem:[%s3818 + $0x4] sm:$0xf]
    %v3821 = vld [vmem:[%s3818 + $0x8] sm:$0xf]
    %v3822 = vld [vmem:[%s3818 + $0xc] sm:$0xf]
    %v3823 = vld [vmem:[%s3818 + $0x10] sm:$0xf]
    %v3824 = vld [vmem:[%s3818 + $0x14] sm:$0xf]
    %v3825 = vld [vmem:[%s3818 + $0x18] sm:$0xf]
    %v3826 = vld [vmem:[%s3818 + $0x1c] sm:$0xf]
    %v3827 = vld [vmem:[%s3818 + $0x20] sm:$0xf]
    %v3828 = vld [vmem:[%s3818 + $0x24] sm:$0xf]
    %v3829 = vld [vmem:[%s3818 + $0x28] sm:$0xf]
    %v3830 = vld [vmem:[%s3818 + $0x2c] sm:$0xf]
    %v3831 = vld [vmem:[%s3818 + $0x30] sm:$0xf]
    %v3832 = vld [vmem:[%s3818 + $0x34] sm:$0xf]
    %v3833 = vld [vmem:[%s3818 + $0x38] sm:$0xf]
    %v3834 = vld [vmem:[%s3818 + $0x3c] sm:$0xf]
    %v3835 = vld [vmem:[%s3818 + $0x40] sm:$0xf]
    %v3836 = vld [vmem:[%s3818 + $0x44] sm:$0xf]
    %v3838 = vunpack.c.l.b16 %v3542
    %v3839 = vunpack.c.h.b16 %v3542
    %v3840 = vpack.c.b16 %v3838, %v3587
    %v3841 = vpack.c.b16 %v3839, %v3588
    %v3842 = vrot.slane %v3589, 1
    %v3843 = vrot.slane %v3840, 1
    %v3844 = vsel %vm323, %v3842, %v3843
    %v3845 = vrot.slane %v3590, 1
    %v3846 = vrot.slane %v3841, 1
    %v3847 = vsel %vm323, %v3845, %v3846
    %v3868 = vunpack.c.l.b16 %v3819
    %v3869 = vunpack.c.l.b16 %v3820
    %v3870 = vunpack.c.l.b16 %v3821
    %v3871 = vunpack.c.l.b16 %v3822
    %v3872 = vunpack.c.l.b16 %v3823
    %v3873 = vunpack.c.l.b16 %v3824
    %v3874 = vunpack.c.l.b16 %v3825
    %v3875 = vunpack.c.l.b16 %v3826
    %v3876 = vunpack.c.l.b16 %v3827
    %v3877 = vunpack.c.l.b16 %v3828
    %v3878 = vunpack.c.l.b16 %v3829
    %v3879 = vunpack.c.l.b16 %v3830
    %v3880 = vunpack.c.l.b16 %v3831
    %v3881 = vunpack.c.l.b16 %v3832
    %v3882 = vunpack.c.l.b16 %v3833
    %v3883 = vunpack.c.l.b16 %v3834
    %v3884 = vunpack.c.l.b16 %v3835
    %v3885 = vunpack.c.l.b16 %v3836
    %v3886 = vpack.c.b16 %v3869, %v3868
    %v3887 = vpack.c.b16 %v3871, %v3870
    %v3888 = vpack.c.b16 %v3873, %v3872
    %v3889 = vpack.c.b16 %v3875, %v3874
    %v3890 = vpack.c.b16 %v3877, %v3876
    %v3891 = vpack.c.b16 %v3879, %v3878
    %v3892 = vpack.c.b16 %v3881, %v3880
    %v3893 = vpack.c.b16 %v3883, %v3882
    %v3894 = vpack.c.b16 %v3885, %v3884
    %v3905 = vsel %vm3679, %v3847, 0
    %v3908 = vsel %vm3679, %v3846, 0
    %3910 = vmatpush.bf16.msra.mxu0 %v3893
    %3911 = vmatpush.bf16.msra.mxu0 %v3892
    %3912 = vmatpush.bf16.msra.mxu0 %v3891
    %3913 = vmatpush.bf16.msra.mxu0 %v3890
    %3914 = vmatpush.bf16.msra.mxu0 %v3889
    %3915 = vmatpush.bf16.msra.mxu0 %v3888
    %3916 = vmatpush.bf16.msra.mxu0 %v3887
    %3917 = vmatpush.bf16.msra.mxu0 %v3886
    %3918 = vmatmul.bf16.gmra.mxu0 %v3844
    %v3919 = vpop.f32.mrf.mxu0
    %v3920 = vadd.f32 0.0, %v3919
    %v3921 = vpop.f32.mrf.mxu0
    %v3922 = vadd.f32 0.0, %v3921
    %3923 = vmatmul.bf16.gmra.mxu0 %v3843
    %v3924 = vpop.f32.mrf.mxu0
    %v3925 = vadd.f32 0.0, %v3924
    %v3926 = vpop.f32.mrf.mxu0
    %3927 = vdwg.mxu0
    %3928 = vmatpush.bf16.msra.mxu0 0
    %3929 = vmatpush.bf16.msra.mxu0 0
    %3930 = vmatpush.bf16.msra.mxu0 0
    %3931 = vmatpush.bf16.msra.mxu0 0
    %3932 = vmatpush.bf16.msra.mxu0 0
    %3933 = vmatpush.bf16.msra.mxu0 0
    %3934 = vmatpush.bf16.msra.mxu0 0
    %3935 = vmatpush.bf16.msra.mxu0 %v3894
    %3936 = vmatmul.bf16.gmra.mxu0 %v3905
    %v3937 = vpop.f32.mrf.mxu0
    %v3938 = vadd.f32 %v3920, %v3937
    %v3939 = vpop.f32.mrf.mxu0
    %v3940 = vadd.f32 %v3922, %v3939
    %3941 = vmatmul.bf16.gmra.mxu0 %v3908
    %v3942 = vpop.f32.mrf.mxu0
    %v3943 = vadd.f32 %v3925, %v3942
    %v3944 = vpop.f32.mrf.mxu0
    %3945 = vdwg.mxu0
    %v3946 = vadd.f32 %v3810, %v3938
    %v3947 = vadd.f32 %v3812, %v3940
    %v3948 = vadd.f32 %v3815, %v3943
    %v3949 = vld [vmem:[%s13] sm:$0x1]
    %v3951 = vperm.slane %v3949, 0
    %v3953 = vadd.f32 %v3946, %v3951
    %v3954 = vadd.f32 %v3947, %v3951
    %v3955 = vadd.f32 %v3948, %v3951
    %v3956 = vmax.f32 %v3953, 0.0
    %v3957 = vmax.f32 %v3954, 0.0
    %v3958 = vmax.f32 %v3955, 0.0
    %vm3959 = vcmask 916480
    %3960 = vst.msk [vmem:[#allocation3] sm:$0xff] %vm3959, %v3956
    %3961 = vst.msk [vmem:[#allocation3 + $0x8] sm:$0xff] %vm3959, %v3957
    %vm3962 = vcmask 915456
    %3963 = vst.msk [vmem:[#allocation3 + $0x10] sm:$0x7f] %vm3962, %v3958
    %v3964 = vld [vmem:[#allocation3] ss:$16 sm:$0x3]
    %v3965 = vpack.c.bf16 %v3964, %v3964
    %v3966 = vld [vmem:[%s14] sm:$0xf]
    %v3967 = vld [vmem:[%s14 + $0x4] sm:$0xf]
    %v3968 = vld [vmem:[%s14 + $0x8] sm:$0xf]
    %v3969 = vld [vmem:[%s14 + $0xc] sm:$0xf]
    %v3970 = vld [vmem:[%s14 + $0x10] sm:$0xf]
    %v3971 = vld [vmem:[%s14 + $0x14] sm:$0xf]
    %v3972 = vld [vmem:[%s14 + $0x18] sm:$0xf]
    %v3973 = vld [vmem:[%s14 + $0x1c] sm:$0xf]
    %v3974 = vld [vmem:[%s14 + $0x20] sm:$0xf]
    %v3975 = vld [vmem:[%s14 + $0x24] sm:$0xf]
    %v3976 = vld [vmem:[%s14 + $0x28] sm:$0xf]
    %v3977 = vld [vmem:[%s14 + $0x2c] sm:$0xf]
    %v3978 = vld [vmem:[%s14 + $0x30] sm:$0xf]
    %v3979 = vld [vmem:[%s14 + $0x34] sm:$0xf]
    %s3980 = scalar_lea.vmem [#allocation3], 1
    %v3981 = vld [vmem:[%s3980] ss:$16 sm:$0x3]
    %v3982 = vpack.c.bf16 %v3981, %v3981
    %s3983 = scalar_lea.vmem %s14, 56
    %v3984 = vld [vmem:[%s3983] sm:$0xf]
    %v3985 = vld [vmem:[%s3983 + $0x4] sm:$0xf]
    %v3986 = vld [vmem:[%s3983 + $0x8] sm:$0xf]
    %v3987 = vld [vmem:[%s3983 + $0xc] sm:$0xf]
    %v3988 = vld [vmem:[%s3983 + $0x10] sm:$0xf]
    %v3989 = vld [vmem:[%s3983 + $0x14] sm:$0xf]
    %v3990 = vld [vmem:[%s3983 + $0x18] sm:$0xf]
    %v3991 = vld [vmem:[%s3983 + $0x1c] sm:$0xf]
    %v3992 = vld [vmem:[%s3983 + $0x20] sm:$0xf]
    %v3993 = vld [vmem:[%s3983 + $0x24] sm:$0xf]
    %v3994 = vld [vmem:[%s3983 + $0x28] sm:$0xf]
    %v3995 = vld [vmem:[%s3983 + $0x2c] sm:$0xf]
    %v3996 = vld [vmem:[%s3983 + $0x30] sm:$0xf]
    %v3997 = vld [vmem:[%s3983 + $0x34] sm:$0xf]
    %v4012 = vunpack.c.l.b16 %v3984
    %v4013 = vunpack.c.l.b16 %v3985
    %v4014 = vunpack.c.l.b16 %v3986
    %v4015 = vunpack.c.l.b16 %v3987
    %v4016 = vunpack.c.l.b16 %v3988
    %v4017 = vunpack.c.l.b16 %v3989
    %v4018 = vunpack.c.l.b16 %v3990
    %v4019 = vunpack.c.l.b16 %v3991
    %v4020 = vunpack.c.l.b16 %v3992
    %v4021 = vunpack.c.l.b16 %v3993
    %v4022 = vunpack.c.l.b16 %v3994
    %v4023 = vunpack.c.l.b16 %v3995
    %v4024 = vunpack.c.l.b16 %v3996
    %v4025 = vunpack.c.l.b16 %v3997
    %v4026 = vpack.c.b16 %v4013, %v4012
    %v4027 = vpack.c.b16 %v4015, %v4014
    %v4028 = vpack.c.b16 %v4017, %v4016
    %v4029 = vpack.c.b16 %v4019, %v4018
    %v4030 = vpack.c.b16 %v4021, %v4020
    %v4031 = vpack.c.b16 %v4023, %v4022
    %v4032 = vpack.c.b16 %v4025, %v4024
    %v4041 = vsel %vm3959, %v3982, 0
    %4043 = vmatpush.bf16.msra.mxu0 0
    %4044 = vmatpush.bf16.msra.mxu0 %v4032
    %4045 = vmatpush.bf16.msra.mxu0 %v4031
    %4046 = vmatpush.bf16.msra.mxu0 %v4030
    %4047 = vmatpush.bf16.msra.mxu0 %v4029
    %4048 = vmatpush.bf16.msra.mxu0 %v4028
    %4049 = vmatpush.bf16.msra.mxu0 %v4027
    %4050 = vmatpush.bf16.msra.mxu0 %v4026
    %4051 = vmatmul.bf16.gmra.mxu0 %v4041
    %v4052 = vpop.f32.mrf.mxu0
    %v4053 = vadd.f32 0.0, %v4052
    %v4054 = vpop.f32.mrf.mxu0
    %4055 = vdwg.mxu0
    %v4070 = vunpack.c.l.b16 %v3966
    %v4071 = vunpack.c.l.b16 %v3967
    %v4072 = vunpack.c.l.b16 %v3968
    %v4073 = vunpack.c.l.b16 %v3969
    %v4074 = vunpack.c.l.b16 %v3970
    %v4075 = vunpack.c.l.b16 %v3971
    %v4076 = vunpack.c.l.b16 %v3972
    %v4077 = vunpack.c.l.b16 %v3973
    %v4078 = vunpack.c.l.b16 %v3974
    %v4079 = vunpack.c.l.b16 %v3975
    %v4080 = vunpack.c.l.b16 %v3976
    %v4081 = vunpack.c.l.b16 %v3977
    %v4082 = vunpack.c.l.b16 %v3978
    %v4083 = vunpack.c.l.b16 %v3979
    %v4084 = vpack.c.b16 %v4071, %v4070
    %v4085 = vpack.c.b16 %v4073, %v4072
    %v4086 = vpack.c.b16 %v4075, %v4074
    %v4087 = vpack.c.b16 %v4077, %v4076
    %v4088 = vpack.c.b16 %v4079, %v4078
    %v4089 = vpack.c.b16 %v4081, %v4080
    %v4090 = vpack.c.b16 %v4083, %v4082
    %v4099 = vsel %vm3959, %v3965, 0
    %4101 = vmatpush.bf16.msra.mxu0 0
    %4102 = vmatpush.bf16.msra.mxu0 %v4090
    %4103 = vmatpush.bf16.msra.mxu0 %v4089
    %4104 = vmatpush.bf16.msra.mxu0 %v4088
    %4105 = vmatpush.bf16.msra.mxu0 %v4087
    %4106 = vmatpush.bf16.msra.mxu0 %v4086
    %4107 = vmatpush.bf16.msra.mxu0 %v4085
    %4108 = vmatpush.bf16.msra.mxu0 %v4084
    %4109 = vmatmul.bf16.gmra.mxu0 %v4099
    %v4110 = vpop.f32.mrf.mxu0
    %v4111 = vadd.f32 %v4053, %v4110
    %v4112 = vpop.f32.mrf.mxu0
    %4113 = vdwg.mxu0
    %s4114 = scalar_lea.vmem [#allocation3], 2
    %v4115 = vld [vmem:[%s4114] ss:$16 sm:$0x3]
    %v4116 = vpack.c.bf16 %v4115, %v4115
    %s4117 = scalar_lea.vmem %s14, 112
    %v4118 = vld [vmem:[%s4117] sm:$0xf]
    %v4119 = vld [vmem:[%s4117 + $0x4] sm:$0xf]
    %v4120 = vld [vmem:[%s4117 + $0x8] sm:$0xf]
    %v4121 = vld [vmem:[%s4117 + $0xc] sm:$0xf]
    %v4122 = vld [vmem:[%s4117 + $0x10] sm:$0xf]
    %v4123 = vld [vmem:[%s4117 + $0x14] sm:$0xf]
    %v4124 = vld [vmem:[%s4117 + $0x18] sm:$0xf]
    %v4125 = vld [vmem:[%s4117 + $0x1c] sm:$0xf]
    %v4126 = vld [vmem:[%s4117 + $0x20] sm:$0xf]
    %v4127 = vld [vmem:[%s4117 + $0x24] sm:$0xf]
    %v4128 = vld [vmem:[%s4117 + $0x28] sm:$0xf]
    %v4129 = vld [vmem:[%s4117 + $0x2c] sm:$0xf]
    %v4130 = vld [vmem:[%s4117 + $0x30] sm:$0xf]
    %v4131 = vld [vmem:[%s4117 + $0x34] sm:$0xf]
    %v4146 = vunpack.c.l.b16 %v4118
    %v4147 = vunpack.c.l.b16 %v4119
    %v4148 = vunpack.c.l.b16 %v4120
    %v4149 = vunpack.c.l.b16 %v4121
    %v4150 = vunpack.c.l.b16 %v4122
    %v4151 = vunpack.c.l.b16 %v4123
    %v4152 = vunpack.c.l.b16 %v4124
    %v4153 = vunpack.c.l.b16 %v4125
    %v4154 = vunpack.c.l.b16 %v4126
    %v4155 = vunpack.c.l.b16 %v4127
    %v4156 = vunpack.c.l.b16 %v4128
    %v4157 = vunpack.c.l.b16 %v4129
    %v4158 = vunpack.c.l.b16 %v4130
    %v4159 = vunpack.c.l.b16 %v4131
    %v4160 = vpack.c.b16 %v4147, %v4146
    %v4161 = vpack.c.b16 %v4149, %v4148
    %v4162 = vpack.c.b16 %v4151, %v4150
    %v4163 = vpack.c.b16 %v4153, %v4152
    %v4164 = vpack.c.b16 %v4155, %v4154
    %v4165 = vpack.c.b16 %v4157, %v4156
    %v4166 = vpack.c.b16 %v4159, %v4158
    %v4175 = vsel %vm3959, %v4116, 0
    %4177 = vmatpush.bf16.msra.mxu0 0
    %4178 = vmatpush.bf16.msra.mxu0 %v4166
    %4179 = vmatpush.bf16.msra.mxu0 %v4165
    %4180 = vmatpush.bf16.msra.mxu0 %v4164
    %4181 = vmatpush.bf16.msra.mxu0 %v4163
    %4182 = vmatpush.bf16.msra.mxu0 %v4162
    %4183 = vmatpush.bf16.msra.mxu0 %v4161
    %4184 = vmatpush.bf16.msra.mxu0 %v4160
    %4185 = vmatmul.bf16.gmra.mxu0 %v4175
    %v4186 = vpop.f32.mrf.mxu0
    %v4187 = vadd.f32 0.0, %v4186
    %v4188 = vpop.f32.mrf.mxu0
    %4189 = vdwg.mxu0
    %v4190 = vadd.f32 %v4111, %v4187
    %s4191 = scalar_lea.vmem [#allocation3], 3
    %v4192 = vld [vmem:[%s4191] ss:$16 sm:$0x3]
    %v4193 = vpack.c.bf16 %v4192, %v4192
    %s4194 = scalar_lea.vmem %s14, 168
    %v4195 = vld [vmem:[%s4194] sm:$0xf]
    %v4196 = vld [vmem:[%s4194 + $0x4] sm:$0xf]
    %v4197 = vld [vmem:[%s4194 + $0x8] sm:$0xf]
    %v4198 = vld [vmem:[%s4194 + $0xc] sm:$0xf]
    %v4199 = vld [vmem:[%s4194 + $0x10] sm:$0xf]
    %v4200 = vld [vmem:[%s4194 + $0x14] sm:$0xf]
    %v4201 = vld [vmem:[%s4194 + $0x18] sm:$0xf]
    %v4202 = vld [vmem:[%s4194 + $0x1c] sm:$0xf]
    %v4203 = vld [vmem:[%s4194 + $0x20] sm:$0xf]
    %v4204 = vld [vmem:[%s4194 + $0x24] sm:$0xf]
    %v4205 = vld [vmem:[%s4194 + $0x28] sm:$0xf]
    %v4206 = vld [vmem:[%s4194 + $0x2c] sm:$0xf]
    %v4207 = vld [vmem:[%s4194 + $0x30] sm:$0xf]
    %v4208 = vld [vmem:[%s4194 + $0x34] sm:$0xf]
    %v4223 = vunpack.c.l.b16 %v4195
    %v4224 = vunpack.c.l.b16 %v4196
    %v4225 = vunpack.c.l.b16 %v4197
    %v4226 = vunpack.c.l.b16 %v4198
    %v4227 = vunpack.c.l.b16 %v4199
    %v4228 = vunpack.c.l.b16 %v4200
    %v4229 = vunpack.c.l.b16 %v4201
    %v4230 = vunpack.c.l.b16 %v4202
    %v4231 = vunpack.c.l.b16 %v4203
    %v4232 = vunpack.c.l.b16 %v4204
    %v4233 = vunpack.c.l.b16 %v4205
    %v4234 = vunpack.c.l.b16 %v4206
    %v4235 = vunpack.c.l.b16 %v4207
    %v4236 = vunpack.c.l.b16 %v4208
    %v4237 = vpack.c.b16 %v4224, %v4223
    %v4238 = vpack.c.b16 %v4226, %v4225
    %v4239 = vpack.c.b16 %v4228, %v4227
    %v4240 = vpack.c.b16 %v4230, %v4229
    %v4241 = vpack.c.b16 %v4232, %v4231
    %v4242 = vpack.c.b16 %v4234, %v4233
    %v4243 = vpack.c.b16 %v4236, %v4235
    %v4252 = vsel %vm3959, %v4193, 0
    %4254 = vmatpush.bf16.msra.mxu0 0
    %4255 = vmatpush.bf16.msra.mxu0 %v4243
    %4256 = vmatpush.bf16.msra.mxu0 %v4242
    %4257 = vmatpush.bf16.msra.mxu0 %v4241
    %4258 = vmatpush.bf16.msra.mxu0 %v4240
    %4259 = vmatpush.bf16.msra.mxu0 %v4239
    %4260 = vmatpush.bf16.msra.mxu0 %v4238
    %4261 = vmatpush.bf16.msra.mxu0 %v4237
    %4262 = vmatmul.bf16.gmra.mxu0 %v4252
    %v4263 = vpop.f32.mrf.mxu0
    %v4264 = vadd.f32 0.0, %v4263
    %v4265 = vpop.f32.mrf.mxu0
    %4266 = vdwg.mxu0
    %v4267 = vadd.f32 %v4190, %v4264
    %s4268 = scalar_lea.vmem [#allocation3], 4
    %v4269 = vld [vmem:[%s4268] ss:$16 sm:$0x3]
    %v4270 = vpack.c.bf16 %v4269, %v4269
    %s4271 = scalar_lea.vmem %s14, 224
    %v4272 = vld [vmem:[%s4271] sm:$0xf]
    %v4273 = vld [vmem:[%s4271 + $0x4] sm:$0xf]
    %v4274 = vld [vmem:[%s4271 + $0x8] sm:$0xf]
    %v4275 = vld [vmem:[%s4271 + $0xc] sm:$0xf]
    %v4276 = vld [vmem:[%s4271 + $0x10] sm:$0xf]
    %v4277 = vld [vmem:[%s4271 + $0x14] sm:$0xf]
    %v4278 = vld [vmem:[%s4271 + $0x18] sm:$0xf]
    %v4279 = vld [vmem:[%s4271 + $0x1c] sm:$0xf]
    %v4280 = vld [vmem:[%s4271 + $0x20] sm:$0xf]
    %v4281 = vld [vmem:[%s4271 + $0x24] sm:$0xf]
    %v4282 = vld [vmem:[%s4271 + $0x28] sm:$0xf]
    %v4283 = vld [vmem:[%s4271 + $0x2c] sm:$0xf]
    %v4284 = vld [vmem:[%s4271 + $0x30] sm:$0xf]
    %v4285 = vld [vmem:[%s4271 + $0x34] sm:$0xf]
    %v4300 = vunpack.c.l.b16 %v4272
    %v4301 = vunpack.c.l.b16 %v4273
    %v4302 = vunpack.c.l.b16 %v4274
    %v4303 = vunpack.c.l.b16 %v4275
    %v4304 = vunpack.c.l.b16 %v4276
    %v4305 = vunpack.c.l.b16 %v4277
    %v4306 = vunpack.c.l.b16 %v4278
    %v4307 = vunpack.c.l.b16 %v4279
    %v4308 = vunpack.c.l.b16 %v4280
    %v4309 = vunpack.c.l.b16 %v4281
    %v4310 = vunpack.c.l.b16 %v4282
    %v4311 = vunpack.c.l.b16 %v4283
    %v4312 = vunpack.c.l.b16 %v4284
    %v4313 = vunpack.c.l.b16 %v4285
    %v4314 = vpack.c.b16 %v4301, %v4300
    %v4315 = vpack.c.b16 %v4303, %v4302
    %v4316 = vpack.c.b16 %v4305, %v4304
    %v4317 = vpack.c.b16 %v4307, %v4306
    %v4318 = vpack.c.b16 %v4309, %v4308
    %v4319 = vpack.c.b16 %v4311, %v4310
    %v4320 = vpack.c.b16 %v4313, %v4312
    %v4329 = vsel %vm3959, %v4270, 0
    %4331 = vmatpush.bf16.msra.mxu0 0
    %4332 = vmatpush.bf16.msra.mxu0 %v4320
    %4333 = vmatpush.bf16.msra.mxu0 %v4319
    %4334 = vmatpush.bf16.msra.mxu0 %v4318
    %4335 = vmatpush.bf16.msra.mxu0 %v4317
    %4336 = vmatpush.bf16.msra.mxu0 %v4316
    %4337 = vmatpush.bf16.msra.mxu0 %v4315
    %4338 = vmatpush.bf16.msra.mxu0 %v4314
    %4339 = vmatmul.bf16.gmra.mxu0 %v4329
    %v4340 = vpop.f32.mrf.mxu0
    %v4341 = vadd.f32 0.0, %v4340
    %v4342 = vpop.f32.mrf.mxu0
    %4343 = vdwg.mxu0
    %v4344 = vadd.f32 %v4267, %v4341
    %s4345 = scalar_lea.vmem [#allocation3], 5
    %v4346 = vld [vmem:[%s4345] ss:$16 sm:$0x3]
    %v4347 = vpack.c.bf16 %v4346, %v4346
    %s4348 = scalar_lea.vmem %s14, 280
    %v4349 = vld [vmem:[%s4348] sm:$0xf]
    %v4350 = vld [vmem:[%s4348 + $0x4] sm:$0xf]
    %v4351 = vld [vmem:[%s4348 + $0x8] sm:$0xf]
    %v4352 = vld [vmem:[%s4348 + $0xc] sm:$0xf]
    %v4353 = vld [vmem:[%s4348 + $0x10] sm:$0xf]
    %v4354 = vld [vmem:[%s4348 + $0x14] sm:$0xf]
    %v4355 = vld [vmem:[%s4348 + $0x18] sm:$0xf]
    %v4356 = vld [vmem:[%s4348 + $0x1c] sm:$0xf]
    %v4357 = vld [vmem:[%s4348 + $0x20] sm:$0xf]
    %v4358 = vld [vmem:[%s4348 + $0x24] sm:$0xf]
    %v4359 = vld [vmem:[%s4348 + $0x28] sm:$0xf]
    %v4360 = vld [vmem:[%s4348 + $0x2c] sm:$0xf]
    %v4361 = vld [vmem:[%s4348 + $0x30] sm:$0xf]
    %v4362 = vld [vmem:[%s4348 + $0x34] sm:$0xf]
    %v4377 = vunpack.c.l.b16 %v4349
    %v4378 = vunpack.c.l.b16 %v4350
    %v4379 = vunpack.c.l.b16 %v4351
    %v4380 = vunpack.c.l.b16 %v4352
    %v4381 = vunpack.c.l.b16 %v4353
    %v4382 = vunpack.c.l.b16 %v4354
    %v4383 = vunpack.c.l.b16 %v4355
    %v4384 = vunpack.c.l.b16 %v4356
    %v4385 = vunpack.c.l.b16 %v4357
    %v4386 = vunpack.c.l.b16 %v4358
    %v4387 = vunpack.c.l.b16 %v4359
    %v4388 = vunpack.c.l.b16 %v4360
    %v4389 = vunpack.c.l.b16 %v4361
    %v4390 = vunpack.c.l.b16 %v4362
    %v4391 = vpack.c.b16 %v4378, %v4377
    %v4392 = vpack.c.b16 %v4380, %v4379
    %v4393 = vpack.c.b16 %v4382, %v4381
    %v4394 = vpack.c.b16 %v4384, %v4383
    %v4395 = vpack.c.b16 %v4386, %v4385
    %v4396 = vpack.c.b16 %v4388, %v4387
    %v4397 = vpack.c.b16 %v4390, %v4389
    %v4406 = vsel %vm3959, %v4347, 0
    %4408 = vmatpush.bf16.msra.mxu0 0
    %4409 = vmatpush.bf16.msra.mxu0 %v4397
    %4410 = vmatpush.bf16.msra.mxu0 %v4396
    %4411 = vmatpush.bf16.msra.mxu0 %v4395
    %4412 = vmatpush.bf16.msra.mxu0 %v4394
    %4413 = vmatpush.bf16.msra.mxu0 %v4393
    %4414 = vmatpush.bf16.msra.mxu0 %v4392
    %4415 = vmatpush.bf16.msra.mxu0 %v4391
    %4416 = vmatmul.bf16.gmra.mxu0 %v4406
    %v4417 = vpop.f32.mrf.mxu0
    %v4418 = vadd.f32 0.0, %v4417
    %v4419 = vpop.f32.mrf.mxu0
    %4420 = vdwg.mxu0
    %v4421 = vadd.f32 %v4344, %v4418
    %s4422 = scalar_lea.vmem [#allocation3], 6
    %v4423 = vld [vmem:[%s4422] ss:$16 sm:$0x3]
    %v4424 = vpack.c.bf16 %v4423, %v4423
    %s4425 = scalar_lea.vmem %s14, 336
    %v4426 = vld [vmem:[%s4425] sm:$0xf]
    %v4427 = vld [vmem:[%s4425 + $0x4] sm:$0xf]
    %v4428 = vld [vmem:[%s4425 + $0x8] sm:$0xf]
    %v4429 = vld [vmem:[%s4425 + $0xc] sm:$0xf]
    %v4430 = vld [vmem:[%s4425 + $0x10] sm:$0xf]
    %v4431 = vld [vmem:[%s4425 + $0x14] sm:$0xf]
    %v4432 = vld [vmem:[%s4425 + $0x18] sm:$0xf]
    %v4433 = vld [vmem:[%s4425 + $0x1c] sm:$0xf]
    %v4434 = vld [vmem:[%s4425 + $0x20] sm:$0xf]
    %v4435 = vld [vmem:[%s4425 + $0x24] sm:$0xf]
    %v4436 = vld [vmem:[%s4425 + $0x28] sm:$0xf]
    %v4437 = vld [vmem:[%s4425 + $0x2c] sm:$0xf]
    %v4438 = vld [vmem:[%s4425 + $0x30] sm:$0xf]
    %v4439 = vld [vmem:[%s4425 + $0x34] sm:$0xf]
    %v4454 = vunpack.c.l.b16 %v4426
    %v4455 = vunpack.c.l.b16 %v4427
    %v4456 = vunpack.c.l.b16 %v4428
    %v4457 = vunpack.c.l.b16 %v4429
    %v4458 = vunpack.c.l.b16 %v4430
    %v4459 = vunpack.c.l.b16 %v4431
    %v4460 = vunpack.c.l.b16 %v4432
    %v4461 = vunpack.c.l.b16 %v4433
    %v4462 = vunpack.c.l.b16 %v4434
    %v4463 = vunpack.c.l.b16 %v4435
    %v4464 = vunpack.c.l.b16 %v4436
    %v4465 = vunpack.c.l.b16 %v4437
    %v4466 = vunpack.c.l.b16 %v4438
    %v4467 = vunpack.c.l.b16 %v4439
    %v4468 = vpack.c.b16 %v4455, %v4454
    %v4469 = vpack.c.b16 %v4457, %v4456
    %v4470 = vpack.c.b16 %v4459, %v4458
    %v4471 = vpack.c.b16 %v4461, %v4460
    %v4472 = vpack.c.b16 %v4463, %v4462
    %v4473 = vpack.c.b16 %v4465, %v4464
    %v4474 = vpack.c.b16 %v4467, %v4466
    %v4483 = vsel %vm3959, %v4424, 0
    %4485 = vmatpush.bf16.msra.mxu0 0
    %4486 = vmatpush.bf16.msra.mxu0 %v4474
    %4487 = vmatpush.bf16.msra.mxu0 %v4473
    %4488 = vmatpush.bf16.msra.mxu0 %v4472
    %4489 = vmatpush.bf16.msra.mxu0 %v4471
    %4490 = vmatpush.bf16.msra.mxu0 %v4470
    %4491 = vmatpush.bf16.msra.mxu0 %v4469
    %4492 = vmatpush.bf16.msra.mxu0 %v4468
    %4493 = vmatmul.bf16.gmra.mxu0 %v4483
    %v4494 = vpop.f32.mrf.mxu0
    %v4495 = vadd.f32 0.0, %v4494
    %v4496 = vpop.f32.mrf.mxu0
    %4497 = vdwg.mxu0
    %v4498 = vadd.f32 %v4421, %v4495
    %v4499 = vld [vmem:[%s15] sm:$0x1]
    %v4501 = vperm.slane %v4499, 0
    %v4503 = vadd.f32 %v4498, %v4501
    %vm4504 = vcmask 74752
    %v4505 = vsel %vm4504, %v4503, -inf
    %4506 = vmax.xlane.f32.xlu0 %v4505
    %v4507 = vpop.xlane.xlu0 %4506
    %v4508 = vsub.f32 %v4503, %v4507
    %v4509 = vmul.f32 %v4508, 1.442695
    %v4510 = vpow.pop %v4509
    %v4511 = vsel %vm4504, %v4510, 0.0
    %4512 = vadd.xlane.f32.xlu0 %v4511
    %v4513 = vpop.xlane.xlu0 %4512
    %v4514 = vlog2.pop %v4513
    %v4515 = vmul.f32 %v4514, 0.6931472
    %v4516 = vsub.f32 %v4508, %v4515
    %4517 = vst.msk [vmem:[#allocation4] sm:$0x3] %vm4504, %v4516
    // Predicated region
    $region66: #{_forward_jit.1} parent=1 // pred_check
      _
    $region67: #{_forward_jit.1} parent=1 // pred_check_branch
      %4519 = sbr.rel (0) target = $region69
    $region68: #{_forward_jit.1} parent=1 // pred_region
      %4521 = vsyncadd [#allocation5], 0
      %s4523 = sshll.u32 [#allocation4], 4
      %s4524 = int_to_ptr.vmem [resolvable:$true] %s4523
      %s4525 = sshll.u32 %s16, 4
      %s4526 = int_to_ptr.hbm [resolvable:$true] %s4525
      %4528 = dma.vmem_to_hbm [thread:$0]  %s4524, 32, %s4526, [#allocation5]
    $region69: #{_forward_jit.1} parent=1 // pred_fallthru
      _
    // Predicated region
    $region70: #{_forward_jit.1} parent=1 // pred_check
      _
    $region71: #{_forward_jit.1} parent=1 // pred_check_branch
      %4530 = sbr.rel (0) target = $region73
    $region72: #{_forward_jit.1} parent=1 // pred_region
      %4532 = dma.done [#allocation5], 32
    $region73: #{_forward_jit.1} parent=1 // pred_fallthru
      _
    %4533 = vsyncpa [#allocation5], 1

</llo_original>
